<compile_context>
chip_gen: v7x
topology: tpu7x:2x2x1
jax: 0.10.0
libtpu: 0.0.40
codegen_flags: <defaults>
</compile_context>

<pallas_src>
import functools

import jax
import jax.numpy as jnp
from jax import lax
from jax.experimental import pallas as pl
from jax.experimental.pallas import tpu as pltpu


def _make_kernel(*, alpha_x, decay, t_blk, output_dim, states_dim, batch,
                 fused_pad, has_carry):
    """Builds the Pallas kernel body (all structural choices are static)."""
    O, S = output_dim, states_dim
    fused_dim = 2 * O + 3 * S
    pad_w = fused_pad - fused_dim
    has_corr = alpha_x > 0

    def kernel(*refs):
        refs = list(refs)
        x_ref = refs.pop(0)                       # (1, B, t_blk*O)
        c_ref = refs.pop(0) if has_corr else None  # (1, B, t_blk*S)
        w_r_ref, w_f_ref, b_r_ref, b_o_ref, h0_ref, out_ref = refs[:6]
        h_carry = refs[6] if has_carry else None   # (B, S) VMEM scratch

        # Loop-invariant loads / broadcasts, hoisted out of the time loop.
        w_r = w_r_ref[...]                              # (S, S)  = w_r.T / tau
        w_f = w_f_ref[...]                              # (S, O[+S])
        b_r = jnp.broadcast_to(b_r_ref[...], (batch, S))   # b_r / tau
        b_o = jnp.broadcast_to(b_o_ref[...], (batch, O))

        # One wide unmasked load per chunk; per-step slices are static.
        x_chunk = x_ref[0]                              # (B, t_blk*O)
        c_chunk = c_ref[0] if has_corr else None        # (B, t_blk*S)

        if has_carry:
            @pl.when(pl.program_id(0) == 0)
            def _():
                h_carry[...] = h0_ref[...]
            h = h_carry[...]
        else:
            h = h0_ref[...]

        zeros_s = jnp.zeros((batch, S), jnp.float32)
        zeros_pad = jnp.zeros((batch, pad_w), jnp.float32) if pad_w else None

        # Fully-unrolled static loop: stores of step t hide under step t+1's
        # MXU/EUP latency; all lane offsets are compile-time constants.
        for t in range(t_blk):
            x_t = x_chunk[:, t * O:(t + 1) * O]

            # h_prior = decay*h + tanh(h) @ (w_r.T/tau) + b_r/tau
            rec = jnp.dot(jnp.tanh(h), w_r, preferred_element_type=jnp.float32)
            h_prior = decay * h + rec + b_r

            # Single fused matmul: [x_pred-part | alpha*corr-part]
            thp = jnp.tanh(h_prior)
            prod = jnp.dot(thp, w_f, preferred_element_type=jnp.float32)
            x_pred = prod[:, :O] + b_o
            error = x_pred - x_t

            if has_corr:
                # alpha_x*(error @ w_o) == prod[:, O:] + c_t   (re-associated)
                corr = prod[:, O:] + c_chunk[:, t * S:(t + 1) * S]
                h_post = h_prior - (1.0 - thp * thp) * corr
                error_h = h_prior - h_post
                h = h_post
                parts = [error, x_pred, h_prior, h_post, error_h]
            else:
                # torch leaves h_posts / error_hs at their zero init here.
                h = h_prior
                parts = [error, x_pred, h_prior, zeros_s, zeros_s]

            if pad_w:
                parts.append(zeros_pad)
            # One unmasked (B, fused_pad) store per timestep.
            out_ref[t] = jnp.concatenate(parts, axis=-1)

        if has_carry:
            h_carry[...] = h

    return kernel


def pc_rnn_v_forward(x, w_r, b_r, w_o, b_o, h_init, *, tau_h, alpha_x,
                     t_blk=None):
    """Returns (errors, x_preds, h_priors, h_posts, error_hs), time-major.

    NOTE: tau_h / alpha_x must be Python numbers (static); the alpha_x > 0
    branch is resolved at trace time, mirroring the PyTorch module.
    """
    seq_len, batch, output_dim = x.shape
    states_dim = w_r.shape[0]
    O, S = output_dim, states_dim
    tau_h = float(tau_h)
    alpha_x = float(alpha_x)

    # One chunk for short sequences; cap the static unroll at 32 steps so the
    # per-grid-step overhead is well amortized without blowing up code size or
    # vreg pressure (per-chunk VMEM stays in the KB range on every generation).
    if t_blk is None:
        t_blk = seq_len if seq_len <= 32 else 32
    t_blk = max(1, min(int(t_blk), seq_len))
    num_blocks = (seq_len + t_blk - 1) // t_blk
    padded_len = num_blocks * t_blk

    x_f32 = x.astype(jnp.float32)
    if padded_len != seq_len:
        pad = jnp.zeros((padded_len - seq_len, batch, O), jnp.float32)
        x_f32 = jnp.concatenate([x_f32, pad], axis=0)

    # Lane-dense packing of the targets: each chunk arrives as (B, t_blk*O).
    x_packed = (x_f32.reshape(num_blocks, t_blk, batch, O)
                .transpose(0, 2, 1, 3)
                .reshape(num_blocks, batch, t_blk * O))

    # Fold 1/tau into the recurrent weights/bias (one-time, loop-invariant).
    decay = 1.0 - 1.0 / tau_h
    w_r_scaled = (jnp.transpose(w_r) / tau_h).astype(jnp.float32)   # (S, S)
    b_r_scaled = (b_r / tau_h).reshape(1, S).astype(jnp.float32)
    b_o2 = b_o.reshape(1, O).astype(jnp.float32)
    w_o_f32 = w_o.astype(jnp.float32)
    w_o_t = jnp.transpose(w_o_f32)                                   # (S, O)

    inputs = [x_packed]
    in_specs = [pl.BlockSpec((1, batch, t_blk * O), lambda t: (t, 0, 0))]

    if alpha_x > 0:
        # w_fused = [w_o.T | alpha_x * (w_o.T @ w_o)]  -> one matmul per step.
        m_mat = alpha_x * jnp.matmul(w_o_t, w_o_f32)                 # (S, S)
        w_fused = jnp.concatenate([w_o_t, m_mat], axis=1)            # (S, O+S)
        # Off-recurrence per-timestep term: alpha_x * (b_o - x_t) @ w_o.
        c = alpha_x * jnp.matmul(b_o2[None] - x_f32, w_o_f32)        # (T, B, S)
        c_packed = (c.reshape(num_blocks, t_blk, batch, S)
                    .transpose(0, 2, 1, 3)
                    .reshape(num_blocks, batch, t_blk * S))
        inputs.append(c_packed)
        in_specs.append(pl.BlockSpec((1, batch, t_blk * S), lambda t: (t, 0, 0)))
    else:
        w_fused = w_o_t                                              # (S, O)

    rep = lambda t: (0, 0)   # loop-invariant params: block index never changes
    inputs += [w_r_scaled, w_fused, b_r_scaled, b_o2,
               h_init.astype(jnp.float32)]
    in_specs += [
        pl.BlockSpec((S, S), rep),                       # w_r.T / tau
        pl.BlockSpec(tuple(w_fused.shape), rep),         # fused output weights
        pl.BlockSpec((1, S), rep),                       # b_r / tau
        pl.BlockSpec((1, O), rep),                       # b_o
        pl.BlockSpec((batch, S), rep),                   # h_init
    ]

    # Lane-dense fused output slab, padded to a multiple of 128 lanes.
    fused_dim = 2 * O + 3 * S
    fused_pad = ((fused_dim + 127) // 128) * 128

    has_carry = num_blocks > 1
    scratch_shapes = ([pltpu.VMEM((batch, S), jnp.float32)]
                      if has_carry else [])

    kernel = _make_kernel(alpha_x=alpha_x, decay=decay, t_blk=t_blk,
                          output_dim=O, states_dim=S, batch=batch,
                          fused_pad=fused_pad, has_carry=has_carry)

    grid_spec = pltpu.PrefetchScalarGridSpec(
        num_scalar_prefetch=0,
        grid=(num_blocks,),
        in_specs=in_specs,
        out_specs=pl.BlockSpec((t_blk, batch, fused_pad), lambda t: (t, 0, 0)),
        scratch_shapes=scratch_shapes,
    )

    fused = pl.pallas_call(
        kernel,
        out_shape=jax.ShapeDtypeStruct((padded_len, batch, fused_pad),
                                       jnp.float32),
        grid_spec=grid_spec,
        compiler_params=pltpu.CompilerParams(
            dimension_semantics=("arbitrary",)),   # sequential recurrence
    )(*inputs)

    fused = fused[:seq_len]
    errors = fused[:, :, 0:O]
    x_preds = fused[:, :, O:2 * O]
    h_priors = fused[:, :, 2 * O:2 * O + S]
    h_posts = fused[:, :, 2 * O + S:2 * O + 2 * S]
    error_hs = fused[:, :, 2 * O + 2 * S:2 * O + 3 * S]
    return errors, x_preds, h_priors, h_posts, error_hs


def pc_rnn_v_reference(x, w_r, b_r, w_o, b_o, h_init, *, tau_h, alpha_x):
    """Pure-JAX reference mirroring the PyTorch forward (all 5 outputs)."""
    def step(old_h, x_t):
        h_prior = (1.0 - 1.0 / tau_h) * old_h + (1.0 / tau_h) * (
            jnp.tanh(old_h) @ w_r.T + b_r[None, :])
        x_pred = jnp.tanh(h_prior) @ w_o.T + b_o[None, :]
        error = x_pred - x_t
        if alpha_x > 0:
            h_post = h_prior - alpha_x * (1.0 - jnp.tanh(h_prior) ** 2) * (
                error @ w_o)
            error_h = h_prior - h_post
            new_h = h_post
        else:
            h_post = jnp.zeros_like(h_prior)   # torch leaves zeros here
            error_h = jnp.zeros_like(h_prior)
            new_h = h_prior
        return new_h, (error, x_pred, h_prior, h_post, error_h)

    _, outs = lax.scan(step, h_init, x)
    return outs


if __name__ == "__main__":
    # Small shapes consistent with the module's forward signature.
    seq_len, batch, states_dim, output_dim = 20, 8, 32, 16
    tau_h = 2.0

    key = jax.random.PRNGKey(0)
    k_x, k_wo, k_bo, k_wr, k_br, k_h = jax.random.split(key, 6)

    # Deterministic parameter init mirroring the torch __init__ scaling.
    w_o = jax.random.normal(k_wo, (output_dim, states_dim), jnp.float32) / states_dim
    b_o = jax.random.normal(k_bo, (output_dim,), jnp.float32) / 10.0
    w_r = jax.random.normal(k_wr, (states_dim, states_dim), jnp.float32) / states_dim
    b_r = jax.random.normal(k_br, (states_dim,), jnp.float32) / 10.0

    x = jax.random.normal(k_x, (seq_len, batch, output_dim), jnp.float32)
    h_init = 0.1 * jax.random.normal(k_h, (batch, states_dim), jnp.float32)

    names = ("errors", "x_preds", "h_priors", "h_posts", "error_hs")
    ok = True
    # Exercise: correction / pass-through paths x single-block / multi-block+pad.
    for alpha_x in (0.1, 0.0):
        refs = pc_rnn_v_reference(x, w_r, b_r, w_o, b_o, h_init,
                                  tau_h=tau_h, alpha_x=alpha_x)
        for t_blk in (None, 8):
            outs = pc_rnn_v_forward(x, w_r, b_r, w_o, b_o, h_init,
                                    tau_h=tau_h, alpha_x=alpha_x, t_blk=t_blk)
            outs = jax.block_until_ready(outs)
            for got, want, name in zip(outs, refs, names):
                if not jnp.allclose(got, want, atol=1e-5, rtol=1e-5):
                    ok = False
                    print("MISMATCH alpha_x=%s t_blk=%s %s max_abs_err=%g"
                          % (alpha_x, t_blk, name,
                             float(jnp.max(jnp.abs(got - want)))))

    if ok:
        print("KERNEL_OK")
</pallas_src>

<mosaic_0001>
module attributes {stable_mosaic.version = 11 : i64} {
  func.func @kernel(%arg0: i32, %arg1: memref<1x8x320xf32, #tpu.memory_space<vmem>>, %arg2: memref<1x8x640xf32, #tpu.memory_space<vmem>>, %arg3: memref<32x32xf32, #tpu.memory_space<vmem>>, %arg4: memref<32x48xf32, #tpu.memory_space<vmem>>, %arg5: memref<1x32xf32, #tpu.memory_space<vmem>>, %arg6: memref<1x16xf32, #tpu.memory_space<vmem>>, %arg7: memref<8x32xf32, #tpu.memory_space<vmem>>, %arg8: memref<20x8x128xf32, #tpu.memory_space<vmem>>) attributes {dimension_semantics = [#tpu.dimension_semantics<arbitrary>], iteration_bounds = array<i64: 1>, scalar_prefetch = 0 : i64, scratch_operands = 0 : i64, tpu.core_type = #tpu.core_type<tc>, window_params = [{transform_indices = @transform_0, window_bounds = array<i64: 1, 8, 320>}, {transform_indices = @transform_1, window_bounds = array<i64: 1, 8, 640>}, {pipeline_mode = #tpu.pipeline_mode<synchronous>, transform_indices = @transform_2, window_bounds = array<i64: 32, 32>}, {pipeline_mode = #tpu.pipeline_mode<synchronous>, transform_indices = @transform_3, window_bounds = array<i64: 32, 48>}, {pipeline_mode = #tpu.pipeline_mode<synchronous>, transform_indices = @transform_4, window_bounds = array<i64: 1, 32>}, {pipeline_mode = #tpu.pipeline_mode<synchronous>, transform_indices = @transform_5, window_bounds = array<i64: 1, 16>}, {pipeline_mode = #tpu.pipeline_mode<synchronous>, transform_indices = @transform_6, window_bounds = array<i64: 8, 32>}, {transform_indices = @transform_7, window_bounds = array<i64: 20, 8, 128>}]} {
    %c0 = arith.constant 0 : index
    %c0_0 = arith.constant 0 : index
    %0 = vector.load %arg3[%c0, %c0_0] : memref<32x32xf32, #tpu.memory_space<vmem>>, vector<32x32xf32>
    %c0_1 = arith.constant 0 : index
    %c0_2 = arith.constant 0 : index
    %1 = vector.load %arg4[%c0_1, %c0_2] : memref<32x48xf32, #tpu.memory_space<vmem>>, vector<32x48xf32>
    %c0_3 = arith.constant 0 : index
    %c0_4 = arith.constant 0 : index
    %2 = vector.load %arg5[%c0_3, %c0_4] : memref<1x32xf32, #tpu.memory_space<vmem>>, vector<1x32xf32>
    %3 = vector.shape_cast %2 : vector<1x32xf32> to vector<1x32xf32>
    %4 = vector.broadcast %3 : vector<1x32xf32> to vector<8x32xf32>
    %c0_5 = arith.constant 0 : index
    %c0_6 = arith.constant 0 : index
    %5 = vector.load %arg6[%c0_5, %c0_6] : memref<1x16xf32, #tpu.memory_space<vmem>>, vector<1x16xf32>
    %6 = vector.shape_cast %5 : vector<1x16xf32> to vector<1x16xf32>
    %7 = vector.broadcast %6 : vector<1x16xf32> to vector<8x16xf32>
    %c0_7 = arith.constant 0 : index
    %c0_8 = arith.constant 0 : index
    %c0_9 = arith.constant 0 : index
    %8 = vector.load %arg1[%c0_7, %c0_8, %c0_9] : memref<1x8x320xf32, #tpu.memory_space<vmem>>, vector<1x8x320xf32>
    %9 = vector.shape_cast %8 : vector<1x8x320xf32> to vector<8x320xf32>
    %c0_10 = arith.constant 0 : index
    %c0_11 = arith.constant 0 : index
    %c0_12 = arith.constant 0 : index
    %10 = vector.load %arg2[%c0_10, %c0_11, %c0_12] : memref<1x8x640xf32, #tpu.memory_space<vmem>>, vector<1x8x640xf32>
    %11 = vector.shape_cast %10 : vector<1x8x640xf32> to vector<8x640xf32>
    %c0_13 = arith.constant 0 : index
    %c0_14 = arith.constant 0 : index
    %12 = vector.load %arg7[%c0_13, %c0_14] : memref<8x32xf32, #tpu.memory_space<vmem>>, vector<8x32xf32>
    %13 = vector.extract_strided_slice %9 {offsets = [0, 0], sizes = [8, 16], strides = [1, 1]} : vector<8x320xf32> to vector<8x16xf32>
    %14 = math.tanh %12 : vector<8x32xf32>
    %cst = arith.constant dense<0.000000e+00> : vector<8x32xf32>
    %15 = tpu.matmul %14, %0, %cst {dimension_numbers = #tpu.dot_dimension_numbers<[1], [0], [0], [1], [0, 0, 1, 1], [], []>} : vector<8x32xf32>, vector<32x32xf32>, vector<8x32xf32> -> vector<8x32xf32>
    %cst_15 = arith.constant 5.000000e-01 : f32
    %16 = vector.broadcast %cst_15 : f32 to vector<8x32xf32>
    %17 = arith.mulf %16, %12 : vector<8x32xf32>
    %18 = arith.addf %17, %15 : vector<8x32xf32>
    %19 = arith.addf %18, %4 : vector<8x32xf32>
    %20 = math.tanh %19 : vector<8x32xf32>
    %cst_16 = arith.constant dense<0.000000e+00> : vector<8x48xf32>
    %21 = tpu.matmul %20, %1, %cst_16 {dimension_numbers = #tpu.dot_dimension_numbers<[1], [0], [0], [1], [0, 0, 1, 1], [], []>} : vector<8x32xf32>, vector<32x48xf32>, vector<8x48xf32> -> vector<8x48xf32>
    %22 = vector.extract_strided_slice %21 {offsets = [0, 0], sizes = [8, 16], strides = [1, 1]} : vector<8x48xf32> to vector<8x16xf32>
    %23 = arith.addf %22, %7 : vector<8x16xf32>
    %24 = arith.subf %23, %13 : vector<8x16xf32>
    %25 = vector.extract_strided_slice %21 {offsets = [0, 16], sizes = [8, 32], strides = [1, 1]} : vector<8x48xf32> to vector<8x32xf32>
    %26 = vector.extract_strided_slice %11 {offsets = [0, 0], sizes = [8, 32], strides = [1, 1]} : vector<8x640xf32> to vector<8x32xf32>
    %27 = arith.addf %25, %26 : vector<8x32xf32>
    %28 = arith.mulf %20, %20 : vector<8x32xf32>
    %cst_17 = arith.constant 1.000000e+00 : f32
    %29 = vector.broadcast %cst_17 : f32 to vector<8x32xf32>
    %30 = arith.subf %29, %28 : vector<8x32xf32>
    %31 = arith.mulf %30, %27 : vector<8x32xf32>
    %32 = arith.subf %19, %31 : vector<8x32xf32>
    %33 = arith.subf %19, %32 : vector<8x32xf32>
    %34 = tpu.concatenate %24, %23, %19, %32, %33 in 1 : vector<8x16xf32>, vector<8x16xf32>, vector<8x32xf32>, vector<8x32xf32>, vector<8x32xf32> -> vector<8x128xf32>
    %c0_18 = arith.constant 0 : index
    %c0_19 = arith.constant 0 : index
    %c0_20 = arith.constant 0 : index
    %35 = vector.load %arg8[%c0_18, %c0_19, %c0_20] : memref<20x8x128xf32, #tpu.memory_space<vmem>>, vector<1x8x128xf32>
    %36 = vector.shape_cast %35 : vector<1x8x128xf32> to vector<8x128xf32>
    %37 = vector.shape_cast %34 : vector<8x128xf32> to vector<1x8x128xf32>
    tpu.vector_store %arg8[%c0_18, %c0_19, %c0_20], %37 {strides = array<i32>} : memref<20x8x128xf32, #tpu.memory_space<vmem>>, vector<1x8x128xf32>,
    %38 = vector.extract_strided_slice %9 {offsets = [0, 16], sizes = [8, 16], strides = [1, 1]} : vector<8x320xf32> to vector<8x16xf32>
    %39 = math.tanh %32 : vector<8x32xf32>
    %cst_21 = arith.constant dense<0.000000e+00> : vector<8x32xf32>
    %40 = tpu.matmul %39, %0, %cst_21 {dimension_numbers = #tpu.dot_dimension_numbers<[1], [0], [0], [1], [0, 0, 1, 1], [], []>} : vector<8x32xf32>, vector<32x32xf32>, vector<8x32xf32> -> vector<8x32xf32>
    %cst_22 = arith.constant 5.000000e-01 : f32
    %41 = vector.broadcast %cst_22 : f32 to vector<8x32xf32>
    %42 = arith.mulf %41, %32 : vector<8x32xf32>
    %43 = arith.addf %42, %40 : vector<8x32xf32>
    %44 = arith.addf %43, %4 : vector<8x32xf32>
    %45 = math.tanh %44 : vector<8x32xf32>
    %cst_23 = arith.constant dense<0.000000e+00> : vector<8x48xf32>
    %46 = tpu.matmul %45, %1, %cst_23 {dimension_numbers = #tpu.dot_dimension_numbers<[1], [0], [0], [1], [0, 0, 1, 1], [], []>} : vector<8x32xf32>, vector<32x48xf32>, vector<8x48xf32> -> vector<8x48xf32>
    %47 = vector.extract_strided_slice %46 {offsets = [0, 0], sizes = [8, 16], strides = [1, 1]} : vector<8x48xf32> to vector<8x16xf32>
    %48 = arith.addf %47, %7 : vector<8x16xf32>
    %49 = arith.subf %48, %38 : vector<8x16xf32>
    %50 = vector.extract_strided_slice %46 {offsets = [0, 16], sizes = [8, 32], strides = [1, 1]} : vector<8x48xf32> to vector<8x32xf32>
    %51 = vector.extract_strided_slice %11 {offsets = [0, 32], sizes = [8, 32], strides = [1, 1]} : vector<8x640xf32> to vector<8x32xf32>
    %52 = arith.addf %50, %51 : vector<8x32xf32>
    %53 = arith.mulf %45, %45 : vector<8x32xf32>
    %cst_24 = arith.constant 1.000000e+00 : f32
    %54 = vector.broadcast %cst_24 : f32 to vector<8x32xf32>
    %55 = arith.subf %54, %53 : vector<8x32xf32>
    %56 = arith.mulf %55, %52 : vector<8x32xf32>
    %57 = arith.subf %44, %56 : vector<8x32xf32>
    %58 = arith.subf %44, %57 : vector<8x32xf32>
    %59 = tpu.concatenate %49, %48, %44, %57, %58 in 1 : vector<8x16xf32>, vector<8x16xf32>, vector<8x32xf32>, vector<8x32xf32>, vector<8x32xf32> -> vector<8x128xf32>
    %c1 = arith.constant 1 : index
    %c0_25 = arith.constant 0 : index
    %c0_26 = arith.constant 0 : index
    %60 = vector.load %arg8[%c1, %c0_25, %c0_26] : memref<20x8x128xf32, #tpu.memory_space<vmem>>, vector<1x8x128xf32>
    %61 = vector.shape_cast %60 : vector<1x8x128xf32> to vector<8x128xf32>
    %62 = vector.shape_cast %59 : vector<8x128xf32> to vector<1x8x128xf32>
    tpu.vector_store %arg8[%c1, %c0_25, %c0_26], %62 {strides = array<i32>} : memref<20x8x128xf32, #tpu.memory_space<vmem>>, vector<1x8x128xf32>,
    %63 = vector.extract_strided_slice %9 {offsets = [0, 32], sizes = [8, 16], strides = [1, 1]} : vector<8x320xf32> to vector<8x16xf32>
    %64 = math.tanh %57 : vector<8x32xf32>
    %cst_27 = arith.constant dense<0.000000e+00> : vector<8x32xf32>
    %65 = tpu.matmul %64, %0, %cst_27 {dimension_numbers = #tpu.dot_dimension_numbers<[1], [0], [0], [1], [0, 0, 1, 1], [], []>} : vector<8x32xf32>, vector<32x32xf32>, vector<8x32xf32> -> vector<8x32xf32>
    %cst_28 = arith.constant 5.000000e-01 : f32
    %66 = vector.broadcast %cst_28 : f32 to vector<8x32xf32>
    %67 = arith.mulf %66, %57 : vector<8x32xf32>
    %68 = arith.addf %67, %65 : vector<8x32xf32>
    %69 = arith.addf %68, %4 : vector<8x32xf32>
    %70 = math.tanh %69 : vector<8x32xf32>
    %cst_29 = arith.constant dense<0.000000e+00> : vector<8x48xf32>
    %71 = tpu.matmul %70, %1, %cst_29 {dimension_numbers = #tpu.dot_dimension_numbers<[1], [0], [0], [1], [0, 0, 1, 1], [], []>} : vector<8x32xf32>, vector<32x48xf32>, vector<8x48xf32> -> vector<8x48xf32>
    %72 = vector.extract_strided_slice %71 {offsets = [0, 0], sizes = [8, 16], strides = [1, 1]} : vector<8x48xf32> to vector<8x16xf32>
    %73 = arith.addf %72, %7 : vector<8x16xf32>
    %74 = arith.subf %73, %63 : vector<8x16xf32>
    %75 = vector.extract_strided_slice %71 {offsets = [0, 16], sizes = [8, 32], strides = [1, 1]} : vector<8x48xf32> to vector<8x32xf32>
    %76 = vector.extract_strided_slice %11 {offsets = [0, 64], sizes = [8, 32], strides = [1, 1]} : vector<8x640xf32> to vector<8x32xf32>
    %77 = arith.addf %75, %76 : vector<8x32xf32>
    %78 = arith.mulf %70, %70 : vector<8x32xf32>
    %cst_30 = arith.constant 1.000000e+00 : f32
    %79 = vector.broadcast %cst_30 : f32 to vector<8x32xf32>
    %80 = arith.subf %79, %78 : vector<8x32xf32>
    %81 = arith.mulf %80, %77 : vector<8x32xf32>
    %82 = arith.subf %69, %81 : vector<8x32xf32>
    %83 = arith.subf %69, %82 : vector<8x32xf32>
    %84 = tpu.concatenate %74, %73, %69, %82, %83 in 1 : vector<8x16xf32>, vector<8x16xf32>, vector<8x32xf32>, vector<8x32xf32>, vector<8x32xf32> -> vector<8x128xf32>
    %c2 = arith.constant 2 : index
    %c0_31 = arith.constant 0 : index
    %c0_32 = arith.constant 0 : index
    %85 = vector.load %arg8[%c2, %c0_31, %c0_32] : memref<20x8x128xf32, #tpu.memory_space<vmem>>, vector<1x8x128xf32>
    %86 = vector.shape_cast %85 : vector<1x8x128xf32> to vector<8x128xf32>
    %87 = vector.shape_cast %84 : vector<8x128xf32> to vector<1x8x128xf32>
    tpu.vector_store %arg8[%c2, %c0_31, %c0_32], %87 {strides = array<i32>} : memref<20x8x128xf32, #tpu.memory_space<vmem>>, vector<1x8x128xf32>,
    %88 = vector.extract_strided_slice %9 {offsets = [0, 48], sizes = [8, 16], strides = [1, 1]} : vector<8x320xf32> to vector<8x16xf32>
    %89 = math.tanh %82 : vector<8x32xf32>
    %cst_33 = arith.constant dense<0.000000e+00> : vector<8x32xf32>
    %90 = tpu.matmul %89, %0, %cst_33 {dimension_numbers = #tpu.dot_dimension_numbers<[1], [0], [0], [1], [0, 0, 1, 1], [], []>} : vector<8x32xf32>, vector<32x32xf32>, vector<8x32xf32> -> vector<8x32xf32>
    %cst_34 = arith.constant 5.000000e-01 : f32
    %91 = vector.broadcast %cst_34 : f32 to vector<8x32xf32>
    %92 = arith.mulf %91, %82 : vector<8x32xf32>
    %93 = arith.addf %92, %90 : vector<8x32xf32>
    %94 = arith.addf %93, %4 : vector<8x32xf32>
    %95 = math.tanh %94 : vector<8x32xf32>
    %cst_35 = arith.constant dense<0.000000e+00> : vector<8x48xf32>
    %96 = tpu.matmul %95, %1, %cst_35 {dimension_numbers = #tpu.dot_dimension_numbers<[1], [0], [0], [1], [0, 0, 1, 1], [], []>} : vector<8x32xf32>, vector<32x48xf32>, vector<8x48xf32> -> vector<8x48xf32>
    %97 = vector.extract_strided_slice %96 {offsets = [0, 0], sizes = [8, 16], strides = [1, 1]} : vector<8x48xf32> to vector<8x16xf32>
    %98 = arith.addf %97, %7 : vector<8x16xf32>
    %99 = arith.subf %98, %88 : vector<8x16xf32>
    %100 = vector.extract_strided_slice %96 {offsets = [0, 16], sizes = [8, 32], strides = [1, 1]} : vector<8x48xf32> to vector<8x32xf32>
    %101 = vector.extract_strided_slice %11 {offsets = [0, 96], sizes = [8, 32], strides = [1, 1]} : vector<8x640xf32> to vector<8x32xf32>
    %102 = arith.addf %100, %101 : vector<8x32xf32>
    %103 = arith.mulf %95, %95 : vector<8x32xf32>
    %cst_36 = arith.constant 1.000000e+00 : f32
    %104 = vector.broadcast %cst_36 : f32 to vector<8x32xf32>
    %105 = arith.subf %104, %103 : vector<8x32xf32>
    %106 = arith.mulf %105, %102 : vector<8x32xf32>
    %107 = arith.subf %94, %106 : vector<8x32xf32>
    %108 = arith.subf %94, %107 : vector<8x32xf32>
    %109 = tpu.concatenate %99, %98, %94, %107, %108 in 1 : vector<8x16xf32>, vector<8x16xf32>, vector<8x32xf32>, vector<8x32xf32>, vector<8x32xf32> -> vector<8x128xf32>
    %c3 = arith.constant 3 : index
    %c0_37 = arith.constant 0 : index
    %c0_38 = arith.constant 0 : index
    %110 = vector.load %arg8[%c3, %c0_37, %c0_38] : memref<20x8x128xf32, #tpu.memory_space<vmem>>, vector<1x8x128xf32>
    %111 = vector.shape_cast %110 : vector<1x8x128xf32> to vector<8x128xf32>
    %112 = vector.shape_cast %109 : vector<8x128xf32> to vector<1x8x128xf32>
    tpu.vector_store %arg8[%c3, %c0_37, %c0_38], %112 {strides = array<i32>} : memref<20x8x128xf32, #tpu.memory_space<vmem>>, vector<1x8x128xf32>,
    %113 = vector.extract_strided_slice %9 {offsets = [0, 64], sizes = [8, 16], strides = [1, 1]} : vector<8x320xf32> to vector<8x16xf32>
    %114 = math.tanh %107 : vector<8x32xf32>
    %cst_39 = arith.constant dense<0.000000e+00> : vector<8x32xf32>
    %115 = tpu.matmul %114, %0, %cst_39 {dimension_numbers = #tpu.dot_dimension_numbers<[1], [0], [0], [1], [0, 0, 1, 1], [], []>} : vector<8x32xf32>, vector<32x32xf32>, vector<8x32xf32> -> vector<8x32xf32>
    %cst_40 = arith.constant 5.000000e-01 : f32
    %116 = vector.broadcast %cst_40 : f32 to vector<8x32xf32>
    %117 = arith.mulf %116, %107 : vector<8x32xf32>
    %118 = arith.addf %117, %115 : vector<8x32xf32>
    %119 = arith.addf %118, %4 : vector<8x32xf32>
    %120 = math.tanh %119 : vector<8x32xf32>
    %cst_41 = arith.constant dense<0.000000e+00> : vector<8x48xf32>
    %121 = tpu.matmul %120, %1, %cst_41 {dimension_numbers = #tpu.dot_dimension_numbers<[1], [0], [0], [1], [0, 0, 1, 1], [], []>} : vector<8x32xf32>, vector<32x48xf32>, vector<8x48xf32> -> vector<8x48xf32>
    %122 = vector.extract_strided_slice %121 {offsets = [0, 0], sizes = [8, 16], strides = [1, 1]} : vector<8x48xf32> to vector<8x16xf32>
    %123 = arith.addf %122, %7 : vector<8x16xf32>
    %124 = arith.subf %123, %113 : vector<8x16xf32>
    %125 = vector.extract_strided_slice %121 {offsets = [0, 16], sizes = [8, 32], strides = [1, 1]} : vector<8x48xf32> to vector<8x32xf32>
    %126 = vector.extract_strided_slice %11 {offsets = [0, 128], sizes = [8, 32], strides = [1, 1]} : vector<8x640xf32> to vector<8x32xf32>
    %127 = arith.addf %125, %126 : vector<8x32xf32>
    %128 = arith.mulf %120, %120 : vector<8x32xf32>
    %cst_42 = arith.constant 1.000000e+00 : f32
    %129 = vector.broadcast %cst_42 : f32 to vector<8x32xf32>
    %130 = arith.subf %129, %128 : vector<8x32xf32>
    %131 = arith.mulf %130, %127 : vector<8x32xf32>
    %132 = arith.subf %119, %131 : vector<8x32xf32>
    %133 = arith.subf %119, %132 : vector<8x32xf32>
    %134 = tpu.concatenate %124, %123, %119, %132, %133 in 1 : vector<8x16xf32>, vector<8x16xf32>, vector<8x32xf32>, vector<8x32xf32>, vector<8x32xf32> -> vector<8x128xf32>
    %c4 = arith.constant 4 : index
    %c0_43 = arith.constant 0 : index
    %c0_44 = arith.constant 0 : index
    %135 = vector.load %arg8[%c4, %c0_43, %c0_44] : memref<20x8x128xf32, #tpu.memory_space<vmem>>, vector<1x8x128xf32>
    %136 = vector.shape_cast %135 : vector<1x8x128xf32> to vector<8x128xf32>
    %137 = vector.shape_cast %134 : vector<8x128xf32> to vector<1x8x128xf32>
    tpu.vector_store %arg8[%c4, %c0_43, %c0_44], %137 {strides = array<i32>} : memref<20x8x128xf32, #tpu.memory_space<vmem>>, vector<1x8x128xf32>,
    %138 = vector.extract_strided_slice %9 {offsets = [0, 80], sizes = [8, 16], strides = [1, 1]} : vector<8x320xf32> to vector<8x16xf32>
    %139 = math.tanh %132 : vector<8x32xf32>
    %cst_45 = arith.constant dense<0.000000e+00> : vector<8x32xf32>
    %140 = tpu.matmul %139, %0, %cst_45 {dimension_numbers = #tpu.dot_dimension_numbers<[1], [0], [0], [1], [0, 0, 1, 1], [], []>} : vector<8x32xf32>, vector<32x32xf32>, vector<8x32xf32> -> vector<8x32xf32>
    %cst_46 = arith.constant 5.000000e-01 : f32
    %141 = vector.broadcast %cst_46 : f32 to vector<8x32xf32>
    %142 = arith.mulf %141, %132 : vector<8x32xf32>
    %143 = arith.addf %142, %140 : vector<8x32xf32>
    %144 = arith.addf %143, %4 : vector<8x32xf32>
    %145 = math.tanh %144 : vector<8x32xf32>
    %cst_47 = arith.constant dense<0.000000e+00> : vector<8x48xf32>
    %146 = tpu.matmul %145, %1, %cst_47 {dimension_numbers = #tpu.dot_dimension_numbers<[1], [0], [0], [1], [0, 0, 1, 1], [], []>} : vector<8x32xf32>, vector<32x48xf32>, vector<8x48xf32> -> vector<8x48xf32>
    %147 = vector.extract_strided_slice %146 {offsets = [0, 0], sizes = [8, 16], strides = [1, 1]} : vector<8x48xf32> to vector<8x16xf32>
    %148 = arith.addf %147, %7 : vector<8x16xf32>
    %149 = arith.subf %148, %138 : vector<8x16xf32>
    %150 = vector.extract_strided_slice %146 {offsets = [0, 16], sizes = [8, 32], strides = [1, 1]} : vector<8x48xf32> to vector<8x32xf32>
    %151 = vector.extract_strided_slice %11 {offsets = [0, 160], sizes = [8, 32], strides = [1, 1]} : vector<8x640xf32> to vector<8x32xf32>
    %152 = arith.addf %150, %151 : vector<8x32xf32>
    %153 = arith.mulf %145, %145 : vector<8x32xf32>
    %cst_48 = arith.constant 1.000000e+00 : f32
    %154 = vector.broadcast %cst_48 : f32 to vector<8x32xf32>
    %155 = arith.subf %154, %153 : vector<8x32xf32>
    %156 = arith.mulf %155, %152 : vector<8x32xf32>
    %157 = arith.subf %144, %156 : vector<8x32xf32>
    %158 = arith.subf %144, %157 : vector<8x32xf32>
    %159 = tpu.concatenate %149, %148, %144, %157, %158 in 1 : vector<8x16xf32>, vector<8x16xf32>, vector<8x32xf32>, vector<8x32xf32>, vector<8x32xf32> -> vector<8x128xf32>
    %c5 = arith.constant 5 : index
    %c0_49 = arith.constant 0 : index
    %c0_50 = arith.constant 0 : index
    %160 = vector.load %arg8[%c5, %c0_49, %c0_50] : memref<20x8x128xf32, #tpu.memory_space<vmem>>, vector<1x8x128xf32>
    %161 = vector.shape_cast %160 : vector<1x8x128xf32> to vector<8x128xf32>
    %162 = vector.shape_cast %159 : vector<8x128xf32> to vector<1x8x128xf32>
    tpu.vector_store %arg8[%c5, %c0_49, %c0_50], %162 {strides = array<i32>} : memref<20x8x128xf32, #tpu.memory_space<vmem>>, vector<1x8x128xf32>,
    %163 = vector.extract_strided_slice %9 {offsets = [0, 96], sizes = [8, 16], strides = [1, 1]} : vector<8x320xf32> to vector<8x16xf32>
    %164 = math.tanh %157 : vector<8x32xf32>
    %cst_51 = arith.constant dense<0.000000e+00> : vector<8x32xf32>
    %165 = tpu.matmul %164, %0, %cst_51 {dimension_numbers = #tpu.dot_dimension_numbers<[1], [0], [0], [1], [0, 0, 1, 1], [], []>} : vector<8x32xf32>, vector<32x32xf32>, vector<8x32xf32> -> vector<8x32xf32>
    %cst_52 = arith.constant 5.000000e-01 : f32
    %166 = vector.broadcast %cst_52 : f32 to vector<8x32xf32>
    %167 = arith.mulf %166, %157 : vector<8x32xf32>
    %168 = arith.addf %167, %165 : vector<8x32xf32>
    %169 = arith.addf %168, %4 : vector<8x32xf32>
    %170 = math.tanh %169 : vector<8x32xf32>
    %cst_53 = arith.constant dense<0.000000e+00> : vector<8x48xf32>
    %171 = tpu.matmul %170, %1, %cst_53 {dimension_numbers = #tpu.dot_dimension_numbers<[1], [0], [0], [1], [0, 0, 1, 1], [], []>} : vector<8x32xf32>, vector<32x48xf32>, vector<8x48xf32> -> vector<8x48xf32>
    %172 = vector.extract_strided_slice %171 {offsets = [0, 0], sizes = [8, 16], strides = [1, 1]} : vector<8x48xf32> to vector<8x16xf32>
    %173 = arith.addf %172, %7 : vector<8x16xf32>
    %174 = arith.subf %173, %163 : vector<8x16xf32>
    %175 = vector.extract_strided_slice %171 {offsets = [0, 16], sizes = [8, 32], strides = [1, 1]} : vector<8x48xf32> to vector<8x32xf32>
    %176 = vector.extract_strided_slice %11 {offsets = [0, 192], sizes = [8, 32], strides = [1, 1]} : vector<8x640xf32> to vector<8x32xf32>
    %177 = arith.addf %175, %176 : vector<8x32xf32>
    %178 = arith.mulf %170, %170 : vector<8x32xf32>
    %cst_54 = arith.constant 1.000000e+00 : f32
    %179 = vector.broadcast %cst_54 : f32 to vector<8x32xf32>
    %180 = arith.subf %179, %178 : vector<8x32xf32>
    %181 = arith.mulf %180, %177 : vector<8x32xf32>
    %182 = arith.subf %169, %181 : vector<8x32xf32>
    %183 = arith.subf %169, %182 : vector<8x32xf32>
    %184 = tpu.concatenate %174, %173, %169, %182, %183 in 1 : vector<8x16xf32>, vector<8x16xf32>, vector<8x32xf32>, vector<8x32xf32>, vector<8x32xf32> -> vector<8x128xf32>
    %c6 = arith.constant 6 : index
    %c0_55 = arith.constant 0 : index
    %c0_56 = arith.constant 0 : index
    %185 = vector.load %arg8[%c6, %c0_55, %c0_56] : memref<20x8x128xf32, #tpu.memory_space<vmem>>, vector<1x8x128xf32>
    %186 = vector.shape_cast %185 : vector<1x8x128xf32> to vector<8x128xf32>
    %187 = vector.shape_cast %184 : vector<8x128xf32> to vector<1x8x128xf32>
    tpu.vector_store %arg8[%c6, %c0_55, %c0_56], %187 {strides = array<i32>} : memref<20x8x128xf32, #tpu.memory_space<vmem>>, vector<1x8x128xf32>,
    %188 = vector.extract_strided_slice %9 {offsets = [0, 112], sizes = [8, 16], strides = [1, 1]} : vector<8x320xf32> to vector<8x16xf32>
    %189 = math.tanh %182 : vector<8x32xf32>
    %cst_57 = arith.constant dense<0.000000e+00> : vector<8x32xf32>
    %190 = tpu.matmul %189, %0, %cst_57 {dimension_numbers = #tpu.dot_dimension_numbers<[1], [0], [0], [1], [0, 0, 1, 1], [], []>} : vector<8x32xf32>, vector<32x32xf32>, vector<8x32xf32> -> vector<8x32xf32>
    %cst_58 = arith.constant 5.000000e-01 : f32
    %191 = vector.broadcast %cst_58 : f32 to vector<8x32xf32>
    %192 = arith.mulf %191, %182 : vector<8x32xf32>
    %193 = arith.addf %192, %190 : vector<8x32xf32>
    %194 = arith.addf %193, %4 : vector<8x32xf32>
    %195 = math.tanh %194 : vector<8x32xf32>
    %cst_59 = arith.constant dense<0.000000e+00> : vector<8x48xf32>
    %196 = tpu.matmul %195, %1, %cst_59 {dimension_numbers = #tpu.dot_dimension_numbers<[1], [0], [0], [1], [0, 0, 1, 1], [], []>} : vector<8x32xf32>, vector<32x48xf32>, vector<8x48xf32> -> vector<8x48xf32>
    %197 = vector.extract_strided_slice %196 {offsets = [0, 0], sizes = [8, 16], strides = [1, 1]} : vector<8x48xf32> to vector<8x16xf32>
    %198 = arith.addf %197, %7 : vector<8x16xf32>
    %199 = arith.subf %198, %188 : vector<8x16xf32>
    %200 = vector.extract_strided_slice %196 {offsets = [0, 16], sizes = [8, 32], strides = [1, 1]} : vector<8x48xf32> to vector<8x32xf32>
    %201 = vector.extract_strided_slice %11 {offsets = [0, 224], sizes = [8, 32], strides = [1, 1]} : vector<8x640xf32> to vector<8x32xf32>
    %202 = arith.addf %200, %201 : vector<8x32xf32>
    %203 = arith.mulf %195, %195 : vector<8x32xf32>
    %cst_60 = arith.constant 1.000000e+00 : f32
    %204 = vector.broadcast %cst_60 : f32 to vector<8x32xf32>
    %205 = arith.subf %204, %203 : vector<8x32xf32>
    %206 = arith.mulf %205, %202 : vector<8x32xf32>
    %207 = arith.subf %194, %206 : vector<8x32xf32>
    %208 = arith.subf %194, %207 : vector<8x32xf32>
    %209 = tpu.concatenate %199, %198, %194, %207, %208 in 1 : vector<8x16xf32>, vector<8x16xf32>, vector<8x32xf32>, vector<8x32xf32>, vector<8x32xf32> -> vector<8x128xf32>
    %c7 = arith.constant 7 : index
    %c0_61 = arith.constant 0 : index
    %c0_62 = arith.constant 0 : index
    %210 = vector.load %arg8[%c7, %c0_61, %c0_62] : memref<20x8x128xf32, #tpu.memory_space<vmem>>, vector<1x8x128xf32>
    %211 = vector.shape_cast %210 : vector<1x8x128xf32> to vector<8x128xf32>
    %212 = vector.shape_cast %209 : vector<8x128xf32> to vector<1x8x128xf32>
    tpu.vector_store %arg8[%c7, %c0_61, %c0_62], %212 {strides = array<i32>} : memref<20x8x128xf32, #tpu.memory_space<vmem>>, vector<1x8x128xf32>,
    %213 = vector.extract_strided_slice %9 {offsets = [0, 128], sizes = [8, 16], strides = [1, 1]} : vector<8x320xf32> to vector<8x16xf32>
    %214 = math.tanh %207 : vector<8x32xf32>
    %cst_63 = arith.constant dense<0.000000e+00> : vector<8x32xf32>
    %215 = tpu.matmul %214, %0, %cst_63 {dimension_numbers = #tpu.dot_dimension_numbers<[1], [0], [0], [1], [0, 0, 1, 1], [], []>} : vector<8x32xf32>, vector<32x32xf32>, vector<8x32xf32> -> vector<8x32xf32>
    %cst_64 = arith.constant 5.000000e-01 : f32
    %216 = vector.broadcast %cst_64 : f32 to vector<8x32xf32>
    %217 = arith.mulf %216, %207 : vector<8x32xf32>
    %218 = arith.addf %217, %215 : vector<8x32xf32>
    %219 = arith.addf %218, %4 : vector<8x32xf32>
    %220 = math.tanh %219 : vector<8x32xf32>
    %cst_65 = arith.constant dense<0.000000e+00> : vector<8x48xf32>
    %221 = tpu.matmul %220, %1, %cst_65 {dimension_numbers = #tpu.dot_dimension_numbers<[1], [0], [0], [1], [0, 0, 1, 1], [], []>} : vector<8x32xf32>, vector<32x48xf32>, vector<8x48xf32> -> vector<8x48xf32>
    %222 = vector.extract_strided_slice %221 {offsets = [0, 0], sizes = [8, 16], strides = [1, 1]} : vector<8x48xf32> to vector<8x16xf32>
    %223 = arith.addf %222, %7 : vector<8x16xf32>
    %224 = arith.subf %223, %213 : vector<8x16xf32>
    %225 = vector.extract_strided_slice %221 {offsets = [0, 16], sizes = [8, 32], strides = [1, 1]} : vector<8x48xf32> to vector<8x32xf32>
    %226 = vector.extract_strided_slice %11 {offsets = [0, 256], sizes = [8, 32], strides = [1, 1]} : vector<8x640xf32> to vector<8x32xf32>
    %227 = arith.addf %225, %226 : vector<8x32xf32>
    %228 = arith.mulf %220, %220 : vector<8x32xf32>
    %cst_66 = arith.constant 1.000000e+00 : f32
    %229 = vector.broadcast %cst_66 : f32 to vector<8x32xf32>
    %230 = arith.subf %229, %228 : vector<8x32xf32>
    %231 = arith.mulf %230, %227 : vector<8x32xf32>
    %232 = arith.subf %219, %231 : vector<8x32xf32>
    %233 = arith.subf %219, %232 : vector<8x32xf32>
    %234 = tpu.concatenate %224, %223, %219, %232, %233 in 1 : vector<8x16xf32>, vector<8x16xf32>, vector<8x32xf32>, vector<8x32xf32>, vector<8x32xf32> -> vector<8x128xf32>
    %c8 = arith.constant 8 : index
    %c0_67 = arith.constant 0 : index
    %c0_68 = arith.constant 0 : index
    %235 = vector.load %arg8[%c8, %c0_67, %c0_68] : memref<20x8x128xf32, #tpu.memory_space<vmem>>, vector<1x8x128xf32>
    %236 = vector.shape_cast %235 : vector<1x8x128xf32> to vector<8x128xf32>
    %237 = vector.shape_cast %234 : vector<8x128xf32> to vector<1x8x128xf32>
    tpu.vector_store %arg8[%c8, %c0_67, %c0_68], %237 {strides = array<i32>} : memref<20x8x128xf32, #tpu.memory_space<vmem>>, vector<1x8x128xf32>,
    %238 = vector.extract_strided_slice %9 {offsets = [0, 144], sizes = [8, 16], strides = [1, 1]} : vector<8x320xf32> to vector<8x16xf32>
    %239 = math.tanh %232 : vector<8x32xf32>
    %cst_69 = arith.constant dense<0.000000e+00> : vector<8x32xf32>
    %240 = tpu.matmul %239, %0, %cst_69 {dimension_numbers = #tpu.dot_dimension_numbers<[1], [0], [0], [1], [0, 0, 1, 1], [], []>} : vector<8x32xf32>, vector<32x32xf32>, vector<8x32xf32> -> vector<8x32xf32>
    %cst_70 = arith.constant 5.000000e-01 : f32
    %241 = vector.broadcast %cst_70 : f32 to vector<8x32xf32>
    %242 = arith.mulf %241, %232 : vector<8x32xf32>
    %243 = arith.addf %242, %240 : vector<8x32xf32>
    %244 = arith.addf %243, %4 : vector<8x32xf32>
    %245 = math.tanh %244 : vector<8x32xf32>
    %cst_71 = arith.constant dense<0.000000e+00> : vector<8x48xf32>
    %246 = tpu.matmul %245, %1, %cst_71 {dimension_numbers = #tpu.dot_dimension_numbers<[1], [0], [0], [1], [0, 0, 1, 1], [], []>} : vector<8x32xf32>, vector<32x48xf32>, vector<8x48xf32> -> vector<8x48xf32>
    %247 = vector.extract_strided_slice %246 {offsets = [0, 0], sizes = [8, 16], strides = [1, 1]} : vector<8x48xf32> to vector<8x16xf32>
    %248 = arith.addf %247, %7 : vector<8x16xf32>
    %249 = arith.subf %248, %238 : vector<8x16xf32>
    %250 = vector.extract_strided_slice %246 {offsets = [0, 16], sizes = [8, 32], strides = [1, 1]} : vector<8x48xf32> to vector<8x32xf32>
    %251 = vector.extract_strided_slice %11 {offsets = [0, 288], sizes = [8, 32], strides = [1, 1]} : vector<8x640xf32> to vector<8x32xf32>
    %252 = arith.addf %250, %251 : vector<8x32xf32>
    %253 = arith.mulf %245, %245 : vector<8x32xf32>
    %cst_72 = arith.constant 1.000000e+00 : f32
    %254 = vector.broadcast %cst_72 : f32 to vector<8x32xf32>
    %255 = arith.subf %254, %253 : vector<8x32xf32>
    %256 = arith.mulf %255, %252 : vector<8x32xf32>
    %257 = arith.subf %244, %256 : vector<8x32xf32>
    %258 = arith.subf %244, %257 : vector<8x32xf32>
    %259 = tpu.concatenate %249, %248, %244, %257, %258 in 1 : vector<8x16xf32>, vector<8x16xf32>, vector<8x32xf32>, vector<8x32xf32>, vector<8x32xf32> -> vector<8x128xf32>
    %c9 = arith.constant 9 : index
    %c0_73 = arith.constant 0 : index
    %c0_74 = arith.constant 0 : index
    %260 = vector.load %arg8[%c9, %c0_73, %c0_74] : memref<20x8x128xf32, #tpu.memory_space<vmem>>, vector<1x8x128xf32>
    %261 = vector.shape_cast %260 : vector<1x8x128xf32> to vector<8x128xf32>
    %262 = vector.shape_cast %259 : vector<8x128xf32> to vector<1x8x128xf32>
    tpu.vector_store %arg8[%c9, %c0_73, %c0_74], %262 {strides = array<i32>} : memref<20x8x128xf32, #tpu.memory_space<vmem>>, vector<1x8x128xf32>,
    %263 = vector.extract_strided_slice %9 {offsets = [0, 160], sizes = [8, 16], strides = [1, 1]} : vector<8x320xf32> to vector<8x16xf32>
    %264 = math.tanh %257 : vector<8x32xf32>
    %cst_75 = arith.constant dense<0.000000e+00> : vector<8x32xf32>
    %265 = tpu.matmul %264, %0, %cst_75 {dimension_numbers = #tpu.dot_dimension_numbers<[1], [0], [0], [1], [0, 0, 1, 1], [], []>} : vector<8x32xf32>, vector<32x32xf32>, vector<8x32xf32> -> vector<8x32xf32>
    %cst_76 = arith.constant 5.000000e-01 : f32
    %266 = vector.broadcast %cst_76 : f32 to vector<8x32xf32>
    %267 = arith.mulf %266, %257 : vector<8x32xf32>
    %268 = arith.addf %267, %265 : vector<8x32xf32>
    %269 = arith.addf %268, %4 : vector<8x32xf32>
    %270 = math.tanh %269 : vector<8x32xf32>
    %cst_77 = arith.constant dense<0.000000e+00> : vector<8x48xf32>
    %271 = tpu.matmul %270, %1, %cst_77 {dimension_numbers = #tpu.dot_dimension_numbers<[1], [0], [0], [1], [0, 0, 1, 1], [], []>} : vector<8x32xf32>, vector<32x48xf32>, vector<8x48xf32> -> vector<8x48xf32>
    %272 = vector.extract_strided_slice %271 {offsets = [0, 0], sizes = [8, 16], strides = [1, 1]} : vector<8x48xf32> to vector<8x16xf32>
    %273 = arith.addf %272, %7 : vector<8x16xf32>
    %274 = arith.subf %273, %263 : vector<8x16xf32>
    %275 = vector.extract_strided_slice %271 {offsets = [0, 16], sizes = [8, 32], strides = [1, 1]} : vector<8x48xf32> to vector<8x32xf32>
    %276 = vector.extract_strided_slice %11 {offsets = [0, 320], sizes = [8, 32], strides = [1, 1]} : vector<8x640xf32> to vector<8x32xf32>
    %277 = arith.addf %275, %276 : vector<8x32xf32>
    %278 = arith.mulf %270, %270 : vector<8x32xf32>
    %cst_78 = arith.constant 1.000000e+00 : f32
    %279 = vector.broadcast %cst_78 : f32 to vector<8x32xf32>
    %280 = arith.subf %279, %278 : vector<8x32xf32>
    %281 = arith.mulf %280, %277 : vector<8x32xf32>
    %282 = arith.subf %269, %281 : vector<8x32xf32>
    %283 = arith.subf %269, %282 : vector<8x32xf32>
    %284 = tpu.concatenate %274, %273, %269, %282, %283 in 1 : vector<8x16xf32>, vector<8x16xf32>, vector<8x32xf32>, vector<8x32xf32>, vector<8x32xf32> -> vector<8x128xf32>
    %c10 = arith.constant 10 : index
    %c0_79 = arith.constant 0 : index
    %c0_80 = arith.constant 0 : index
    %285 = vector.load %arg8[%c10, %c0_79, %c0_80] : memref<20x8x128xf32, #tpu.memory_space<vmem>>, vector<1x8x128xf32>
    %286 = vector.shape_cast %285 : vector<1x8x128xf32> to vector<8x128xf32>
    %287 = vector.shape_cast %284 : vector<8x128xf32> to vector<1x8x128xf32>
    tpu.vector_store %arg8[%c10, %c0_79, %c0_80], %287 {strides = array<i32>} : memref<20x8x128xf32, #tpu.memory_space<vmem>>, vector<1x8x128xf32>,
    %288 = vector.extract_strided_slice %9 {offsets = [0, 176], sizes = [8, 16], strides = [1, 1]} : vector<8x320xf32> to vector<8x16xf32>
    %289 = math.tanh %282 : vector<8x32xf32>
    %cst_81 = arith.constant dense<0.000000e+00> : vector<8x32xf32>
    %290 = tpu.matmul %289, %0, %cst_81 {dimension_numbers = #tpu.dot_dimension_numbers<[1], [0], [0], [1], [0, 0, 1, 1], [], []>} : vector<8x32xf32>, vector<32x32xf32>, vector<8x32xf32> -> vector<8x32xf32>
    %cst_82 = arith.constant 5.000000e-01 : f32
    %291 = vector.broadcast %cst_82 : f32 to vector<8x32xf32>
    %292 = arith.mulf %291, %282 : vector<8x32xf32>
    %293 = arith.addf %292, %290 : vector<8x32xf32>
    %294 = arith.addf %293, %4 : vector<8x32xf32>
    %295 = math.tanh %294 : vector<8x32xf32>
    %cst_83 = arith.constant dense<0.000000e+00> : vector<8x48xf32>
    %296 = tpu.matmul %295, %1, %cst_83 {dimension_numbers = #tpu.dot_dimension_numbers<[1], [0], [0], [1], [0, 0, 1, 1], [], []>} : vector<8x32xf32>, vector<32x48xf32>, vector<8x48xf32> -> vector<8x48xf32>
    %297 = vector.extract_strided_slice %296 {offsets = [0, 0], sizes = [8, 16], strides = [1, 1]} : vector<8x48xf32> to vector<8x16xf32>
    %298 = arith.addf %297, %7 : vector<8x16xf32>
    %299 = arith.subf %298, %288 : vector<8x16xf32>
    %300 = vector.extract_strided_slice %296 {offsets = [0, 16], sizes = [8, 32], strides = [1, 1]} : vector<8x48xf32> to vector<8x32xf32>
    %301 = vector.extract_strided_slice %11 {offsets = [0, 352], sizes = [8, 32], strides = [1, 1]} : vector<8x640xf32> to vector<8x32xf32>
    %302 = arith.addf %300, %301 : vector<8x32xf32>
    %303 = arith.mulf %295, %295 : vector<8x32xf32>
    %cst_84 = arith.constant 1.000000e+00 : f32
    %304 = vector.broadcast %cst_84 : f32 to vector<8x32xf32>
    %305 = arith.subf %304, %303 : vector<8x32xf32>
    %306 = arith.mulf %305, %302 : vector<8x32xf32>
    %307 = arith.subf %294, %306 : vector<8x32xf32>
    %308 = arith.subf %294, %307 : vector<8x32xf32>
    %309 = tpu.concatenate %299, %298, %294, %307, %308 in 1 : vector<8x16xf32>, vector<8x16xf32>, vector<8x32xf32>, vector<8x32xf32>, vector<8x32xf32> -> vector<8x128xf32>
    %c11 = arith.constant 11 : index
    %c0_85 = arith.constant 0 : index
    %c0_86 = arith.constant 0 : index
    %310 = vector.load %arg8[%c11, %c0_85, %c0_86] : memref<20x8x128xf32, #tpu.memory_space<vmem>>, vector<1x8x128xf32>
    %311 = vector.shape_cast %310 : vector<1x8x128xf32> to vector<8x128xf32>
    %312 = vector.shape_cast %309 : vector<8x128xf32> to vector<1x8x128xf32>
    tpu.vector_store %arg8[%c11, %c0_85, %c0_86], %312 {strides = array<i32>} : memref<20x8x128xf32, #tpu.memory_space<vmem>>, vector<1x8x128xf32>,
    %313 = vector.extract_strided_slice %9 {offsets = [0, 192], sizes = [8, 16], strides = [1, 1]} : vector<8x320xf32> to vector<8x16xf32>
    %314 = math.tanh %307 : vector<8x32xf32>
    %cst_87 = arith.constant dense<0.000000e+00> : vector<8x32xf32>
    %315 = tpu.matmul %314, %0, %cst_87 {dimension_numbers = #tpu.dot_dimension_numbers<[1], [0], [0], [1], [0, 0, 1, 1], [], []>} : vector<8x32xf32>, vector<32x32xf32>, vector<8x32xf32> -> vector<8x32xf32>
    %cst_88 = arith.constant 5.000000e-01 : f32
    %316 = vector.broadcast %cst_88 : f32 to vector<8x32xf32>
    %317 = arith.mulf %316, %307 : vector<8x32xf32>
    %318 = arith.addf %317, %315 : vector<8x32xf32>
    %319 = arith.addf %318, %4 : vector<8x32xf32>
    %320 = math.tanh %319 : vector<8x32xf32>
    %cst_89 = arith.constant dense<0.000000e+00> : vector<8x48xf32>
    %321 = tpu.matmul %320, %1, %cst_89 {dimension_numbers = #tpu.dot_dimension_numbers<[1], [0], [0], [1], [0, 0, 1, 1], [], []>} : vector<8x32xf32>, vector<32x48xf32>, vector<8x48xf32> -> vector<8x48xf32>
    %322 = vector.extract_strided_slice %321 {offsets = [0, 0], sizes = [8, 16], strides = [1, 1]} : vector<8x48xf32> to vector<8x16xf32>
    %323 = arith.addf %322, %7 : vector<8x16xf32>
    %324 = arith.subf %323, %313 : vector<8x16xf32>
    %325 = vector.extract_strided_slice %321 {offsets = [0, 16], sizes = [8, 32], strides = [1, 1]} : vector<8x48xf32> to vector<8x32xf32>
    %326 = vector.extract_strided_slice %11 {offsets = [0, 384], sizes = [8, 32], strides = [1, 1]} : vector<8x640xf32> to vector<8x32xf32>
    %327 = arith.addf %325, %326 : vector<8x32xf32>
    %328 = arith.mulf %320, %320 : vector<8x32xf32>
    %cst_90 = arith.constant 1.000000e+00 : f32
    %329 = vector.broadcast %cst_90 : f32 to vector<8x32xf32>
    %330 = arith.subf %329, %328 : vector<8x32xf32>
    %331 = arith.mulf %330, %327 : vector<8x32xf32>
    %332 = arith.subf %319, %331 : vector<8x32xf32>
    %333 = arith.subf %319, %332 : vector<8x32xf32>
    %334 = tpu.concatenate %324, %323, %319, %332, %333 in 1 : vector<8x16xf32>, vector<8x16xf32>, vector<8x32xf32>, vector<8x32xf32>, vector<8x32xf32> -> vector<8x128xf32>
    %c12 = arith.constant 12 : index
    %c0_91 = arith.constant 0 : index
    %c0_92 = arith.constant 0 : index
    %335 = vector.load %arg8[%c12, %c0_91, %c0_92] : memref<20x8x128xf32, #tpu.memory_space<vmem>>, vector<1x8x128xf32>
    %336 = vector.shape_cast %335 : vector<1x8x128xf32> to vector<8x128xf32>
    %337 = vector.shape_cast %334 : vector<8x128xf32> to vector<1x8x128xf32>
    tpu.vector_store %arg8[%c12, %c0_91, %c0_92], %337 {strides = array<i32>} : memref<20x8x128xf32, #tpu.memory_space<vmem>>, vector<1x8x128xf32>,
    %338 = vector.extract_strided_slice %9 {offsets = [0, 208], sizes = [8, 16], strides = [1, 1]} : vector<8x320xf32> to vector<8x16xf32>
    %339 = math.tanh %332 : vector<8x32xf32>
    %cst_93 = arith.constant dense<0.000000e+00> : vector<8x32xf32>
    %340 = tpu.matmul %339, %0, %cst_93 {dimension_numbers = #tpu.dot_dimension_numbers<[1], [0], [0], [1], [0, 0, 1, 1], [], []>} : vector<8x32xf32>, vector<32x32xf32>, vector<8x32xf32> -> vector<8x32xf32>
    %cst_94 = arith.constant 5.000000e-01 : f32
    %341 = vector.broadcast %cst_94 : f32 to vector<8x32xf32>
    %342 = arith.mulf %341, %332 : vector<8x32xf32>
    %343 = arith.addf %342, %340 : vector<8x32xf32>
    %344 = arith.addf %343, %4 : vector<8x32xf32>
    %345 = math.tanh %344 : vector<8x32xf32>
    %cst_95 = arith.constant dense<0.000000e+00> : vector<8x48xf32>
    %346 = tpu.matmul %345, %1, %cst_95 {dimension_numbers = #tpu.dot_dimension_numbers<[1], [0], [0], [1], [0, 0, 1, 1], [], []>} : vector<8x32xf32>, vector<32x48xf32>, vector<8x48xf32> -> vector<8x48xf32>
    %347 = vector.extract_strided_slice %346 {offsets = [0, 0], sizes = [8, 16], strides = [1, 1]} : vector<8x48xf32> to vector<8x16xf32>
    %348 = arith.addf %347, %7 : vector<8x16xf32>
    %349 = arith.subf %348, %338 : vector<8x16xf32>
    %350 = vector.extract_strided_slice %346 {offsets = [0, 16], sizes = [8, 32], strides = [1, 1]} : vector<8x48xf32> to vector<8x32xf32>
    %351 = vector.extract_strided_slice %11 {offsets = [0, 416], sizes = [8, 32], strides = [1, 1]} : vector<8x640xf32> to vector<8x32xf32>
    %352 = arith.addf %350, %351 : vector<8x32xf32>
    %353 = arith.mulf %345, %345 : vector<8x32xf32>
    %cst_96 = arith.constant 1.000000e+00 : f32
    %354 = vector.broadcast %cst_96 : f32 to vector<8x32xf32>
    %355 = arith.subf %354, %353 : vector<8x32xf32>
    %356 = arith.mulf %355, %352 : vector<8x32xf32>
    %357 = arith.subf %344, %356 : vector<8x32xf32>
    %358 = arith.subf %344, %357 : vector<8x32xf32>
    %359 = tpu.concatenate %349, %348, %344, %357, %358 in 1 : vector<8x16xf32>, vector<8x16xf32>, vector<8x32xf32>, vector<8x32xf32>, vector<8x32xf32> -> vector<8x128xf32>
    %c13 = arith.constant 13 : index
    %c0_97 = arith.constant 0 : index
    %c0_98 = arith.constant 0 : index
    %360 = vector.load %arg8[%c13, %c0_97, %c0_98] : memref<20x8x128xf32, #tpu.memory_space<vmem>>, vector<1x8x128xf32>
    %361 = vector.shape_cast %360 : vector<1x8x128xf32> to vector<8x128xf32>
    %362 = vector.shape_cast %359 : vector<8x128xf32> to vector<1x8x128xf32>
    tpu.vector_store %arg8[%c13, %c0_97, %c0_98], %362 {strides = array<i32>} : memref<20x8x128xf32, #tpu.memory_space<vmem>>, vector<1x8x128xf32>,
    %363 = vector.extract_strided_slice %9 {offsets = [0, 224], sizes = [8, 16], strides = [1, 1]} : vector<8x320xf32> to vector<8x16xf32>
    %364 = math.tanh %357 : vector<8x32xf32>
    %cst_99 = arith.constant dense<0.000000e+00> : vector<8x32xf32>
    %365 = tpu.matmul %364, %0, %cst_99 {dimension_numbers = #tpu.dot_dimension_numbers<[1], [0], [0], [1], [0, 0, 1, 1], [], []>} : vector<8x32xf32>, vector<32x32xf32>, vector<8x32xf32> -> vector<8x32xf32>
    %cst_100 = arith.constant 5.000000e-01 : f32
    %366 = vector.broadcast %cst_100 : f32 to vector<8x32xf32>
    %367 = arith.mulf %366, %357 : vector<8x32xf32>
    %368 = arith.addf %367, %365 : vector<8x32xf32>
    %369 = arith.addf %368, %4 : vector<8x32xf32>
    %370 = math.tanh %369 : vector<8x32xf32>
    %cst_101 = arith.constant dense<0.000000e+00> : vector<8x48xf32>
    %371 = tpu.matmul %370, %1, %cst_101 {dimension_numbers = #tpu.dot_dimension_numbers<[1], [0], [0], [1], [0, 0, 1, 1], [], []>} : vector<8x32xf32>, vector<32x48xf32>, vector<8x48xf32> -> vector<8x48xf32>
    %372 = vector.extract_strided_slice %371 {offsets = [0, 0], sizes = [8, 16], strides = [1, 1]} : vector<8x48xf32> to vector<8x16xf32>
    %373 = arith.addf %372, %7 : vector<8x16xf32>
    %374 = arith.subf %373, %363 : vector<8x16xf32>
    %375 = vector.extract_strided_slice %371 {offsets = [0, 16], sizes = [8, 32], strides = [1, 1]} : vector<8x48xf32> to vector<8x32xf32>
    %376 = vector.extract_strided_slice %11 {offsets = [0, 448], sizes = [8, 32], strides = [1, 1]} : vector<8x640xf32> to vector<8x32xf32>
    %377 = arith.addf %375, %376 : vector<8x32xf32>
    %378 = arith.mulf %370, %370 : vector<8x32xf32>
    %cst_102 = arith.constant 1.000000e+00 : f32
    %379 = vector.broadcast %cst_102 : f32 to vector<8x32xf32>
    %380 = arith.subf %379, %378 : vector<8x32xf32>
    %381 = arith.mulf %380, %377 : vector<8x32xf32>
    %382 = arith.subf %369, %381 : vector<8x32xf32>
    %383 = arith.subf %369, %382 : vector<8x32xf32>
    %384 = tpu.concatenate %374, %373, %369, %382, %383 in 1 : vector<8x16xf32>, vector<8x16xf32>, vector<8x32xf32>, vector<8x32xf32>, vector<8x32xf32> -> vector<8x128xf32>
    %c14 = arith.constant 14 : index
    %c0_103 = arith.constant 0 : index
    %c0_104 = arith.constant 0 : index
    %385 = vector.load %arg8[%c14, %c0_103, %c0_104] : memref<20x8x128xf32, #tpu.memory_space<vmem>>, vector<1x8x128xf32>
    %386 = vector.shape_cast %385 : vector<1x8x128xf32> to vector<8x128xf32>
    %387 = vector.shape_cast %384 : vector<8x128xf32> to vector<1x8x128xf32>
    tpu.vector_store %arg8[%c14, %c0_103, %c0_104], %387 {strides = array<i32>} : memref<20x8x128xf32, #tpu.memory_space<vmem>>, vector<1x8x128xf32>,
    %388 = vector.extract_strided_slice %9 {offsets = [0, 240], sizes = [8, 16], strides = [1, 1]} : vector<8x320xf32> to vector<8x16xf32>
    %389 = math.tanh %382 : vector<8x32xf32>
    %cst_105 = arith.constant dense<0.000000e+00> : vector<8x32xf32>
    %390 = tpu.matmul %389, %0, %cst_105 {dimension_numbers = #tpu.dot_dimension_numbers<[1], [0], [0], [1], [0, 0, 1, 1], [], []>} : vector<8x32xf32>, vector<32x32xf32>, vector<8x32xf32> -> vector<8x32xf32>
    %cst_106 = arith.constant 5.000000e-01 : f32
    %391 = vector.broadcast %cst_106 : f32 to vector<8x32xf32>
    %392 = arith.mulf %391, %382 : vector<8x32xf32>
    %393 = arith.addf %392, %390 : vector<8x32xf32>
    %394 = arith.addf %393, %4 : vector<8x32xf32>
    %395 = math.tanh %394 : vector<8x32xf32>
    %cst_107 = arith.constant dense<0.000000e+00> : vector<8x48xf32>
    %396 = tpu.matmul %395, %1, %cst_107 {dimension_numbers = #tpu.dot_dimension_numbers<[1], [0], [0], [1], [0, 0, 1, 1], [], []>} : vector<8x32xf32>, vector<32x48xf32>, vector<8x48xf32> -> vector<8x48xf32>
    %397 = vector.extract_strided_slice %396 {offsets = [0, 0], sizes = [8, 16], strides = [1, 1]} : vector<8x48xf32> to vector<8x16xf32>
    %398 = arith.addf %397, %7 : vector<8x16xf32>
    %399 = arith.subf %398, %388 : vector<8x16xf32>
    %400 = vector.extract_strided_slice %396 {offsets = [0, 16], sizes = [8, 32], strides = [1, 1]} : vector<8x48xf32> to vector<8x32xf32>
    %401 = vector.extract_strided_slice %11 {offsets = [0, 480], sizes = [8, 32], strides = [1, 1]} : vector<8x640xf32> to vector<8x32xf32>
    %402 = arith.addf %400, %401 : vector<8x32xf32>
    %403 = arith.mulf %395, %395 : vector<8x32xf32>
    %cst_108 = arith.constant 1.000000e+00 : f32
    %404 = vector.broadcast %cst_108 : f32 to vector<8x32xf32>
    %405 = arith.subf %404, %403 : vector<8x32xf32>
    %406 = arith.mulf %405, %402 : vector<8x32xf32>
    %407 = arith.subf %394, %406 : vector<8x32xf32>
    %408 = arith.subf %394, %407 : vector<8x32xf32>
    %409 = tpu.concatenate %399, %398, %394, %407, %408 in 1 : vector<8x16xf32>, vector<8x16xf32>, vector<8x32xf32>, vector<8x32xf32>, vector<8x32xf32> -> vector<8x128xf32>
    %c15 = arith.constant 15 : index
    %c0_109 = arith.constant 0 : index
    %c0_110 = arith.constant 0 : index
    %410 = vector.load %arg8[%c15, %c0_109, %c0_110] : memref<20x8x128xf32, #tpu.memory_space<vmem>>, vector<1x8x128xf32>
    %411 = vector.shape_cast %410 : vector<1x8x128xf32> to vector<8x128xf32>
    %412 = vector.shape_cast %409 : vector<8x128xf32> to vector<1x8x128xf32>
    tpu.vector_store %arg8[%c15, %c0_109, %c0_110], %412 {strides = array<i32>} : memref<20x8x128xf32, #tpu.memory_space<vmem>>, vector<1x8x128xf32>,
    %413 = vector.extract_strided_slice %9 {offsets = [0, 256], sizes = [8, 16], strides = [1, 1]} : vector<8x320xf32> to vector<8x16xf32>
    %414 = math.tanh %407 : vector<8x32xf32>
    %cst_111 = arith.constant dense<0.000000e+00> : vector<8x32xf32>
    %415 = tpu.matmul %414, %0, %cst_111 {dimension_numbers = #tpu.dot_dimension_numbers<[1], [0], [0], [1], [0, 0, 1, 1], [], []>} : vector<8x32xf32>, vector<32x32xf32>, vector<8x32xf32> -> vector<8x32xf32>
    %cst_112 = arith.constant 5.000000e-01 : f32
    %416 = vector.broadcast %cst_112 : f32 to vector<8x32xf32>
    %417 = arith.mulf %416, %407 : vector<8x32xf32>
    %418 = arith.addf %417, %415 : vector<8x32xf32>
    %419 = arith.addf %418, %4 : vector<8x32xf32>
    %420 = math.tanh %419 : vector<8x32xf32>
    %cst_113 = arith.constant dense<0.000000e+00> : vector<8x48xf32>
    %421 = tpu.matmul %420, %1, %cst_113 {dimension_numbers = #tpu.dot_dimension_numbers<[1], [0], [0], [1], [0, 0, 1, 1], [], []>} : vector<8x32xf32>, vector<32x48xf32>, vector<8x48xf32> -> vector<8x48xf32>
    %422 = vector.extract_strided_slice %421 {offsets = [0, 0], sizes = [8, 16], strides = [1, 1]} : vector<8x48xf32> to vector<8x16xf32>
    %423 = arith.addf %422, %7 : vector<8x16xf32>
    %424 = arith.subf %423, %413 : vector<8x16xf32>
    %425 = vector.extract_strided_slice %421 {offsets = [0, 16], sizes = [8, 32], strides = [1, 1]} : vector<8x48xf32> to vector<8x32xf32>
    %426 = vector.extract_strided_slice %11 {offsets = [0, 512], sizes = [8, 32], strides = [1, 1]} : vector<8x640xf32> to vector<8x32xf32>
    %427 = arith.addf %425, %426 : vector<8x32xf32>
    %428 = arith.mulf %420, %420 : vector<8x32xf32>
    %cst_114 = arith.constant 1.000000e+00 : f32
    %429 = vector.broadcast %cst_114 : f32 to vector<8x32xf32>
    %430 = arith.subf %429, %428 : vector<8x32xf32>
    %431 = arith.mulf %430, %427 : vector<8x32xf32>
    %432 = arith.subf %419, %431 : vector<8x32xf32>
    %433 = arith.subf %419, %432 : vector<8x32xf32>
    %434 = tpu.concatenate %424, %423, %419, %432, %433 in 1 : vector<8x16xf32>, vector<8x16xf32>, vector<8x32xf32>, vector<8x32xf32>, vector<8x32xf32> -> vector<8x128xf32>
    %c16 = arith.constant 16 : index
    %c0_115 = arith.constant 0 : index
    %c0_116 = arith.constant 0 : index
    %435 = vector.load %arg8[%c16, %c0_115, %c0_116] : memref<20x8x128xf32, #tpu.memory_space<vmem>>, vector<1x8x128xf32>
    %436 = vector.shape_cast %435 : vector<1x8x128xf32> to vector<8x128xf32>
    %437 = vector.shape_cast %434 : vector<8x128xf32> to vector<1x8x128xf32>
    tpu.vector_store %arg8[%c16, %c0_115, %c0_116], %437 {strides = array<i32>} : memref<20x8x128xf32, #tpu.memory_space<vmem>>, vector<1x8x128xf32>,
    %438 = vector.extract_strided_slice %9 {offsets = [0, 272], sizes = [8, 16], strides = [1, 1]} : vector<8x320xf32> to vector<8x16xf32>
    %439 = math.tanh %432 : vector<8x32xf32>
    %cst_117 = arith.constant dense<0.000000e+00> : vector<8x32xf32>
    %440 = tpu.matmul %439, %0, %cst_117 {dimension_numbers = #tpu.dot_dimension_numbers<[1], [0], [0], [1], [0, 0, 1, 1], [], []>} : vector<8x32xf32>, vector<32x32xf32>, vector<8x32xf32> -> vector<8x32xf32>
    %cst_118 = arith.constant 5.000000e-01 : f32
    %441 = vector.broadcast %cst_118 : f32 to vector<8x32xf32>
    %442 = arith.mulf %441, %432 : vector<8x32xf32>
    %443 = arith.addf %442, %440 : vector<8x32xf32>
    %444 = arith.addf %443, %4 : vector<8x32xf32>
    %445 = math.tanh %444 : vector<8x32xf32>
    %cst_119 = arith.constant dense<0.000000e+00> : vector<8x48xf32>
    %446 = tpu.matmul %445, %1, %cst_119 {dimension_numbers = #tpu.dot_dimension_numbers<[1], [0], [0], [1], [0, 0, 1, 1], [], []>} : vector<8x32xf32>, vector<32x48xf32>, vector<8x48xf32> -> vector<8x48xf32>
    %447 = vector.extract_strided_slice %446 {offsets = [0, 0], sizes = [8, 16], strides = [1, 1]} : vector<8x48xf32> to vector<8x16xf32>
    %448 = arith.addf %447, %7 : vector<8x16xf32>
    %449 = arith.subf %448, %438 : vector<8x16xf32>
    %450 = vector.extract_strided_slice %446 {offsets = [0, 16], sizes = [8, 32], strides = [1, 1]} : vector<8x48xf32> to vector<8x32xf32>
    %451 = vector.extract_strided_slice %11 {offsets = [0, 544], sizes = [8, 32], strides = [1, 1]} : vector<8x640xf32> to vector<8x32xf32>
    %452 = arith.addf %450, %451 : vector<8x32xf32>
    %453 = arith.mulf %445, %445 : vector<8x32xf32>
    %cst_120 = arith.constant 1.000000e+00 : f32
    %454 = vector.broadcast %cst_120 : f32 to vector<8x32xf32>
    %455 = arith.subf %454, %453 : vector<8x32xf32>
    %456 = arith.mulf %455, %452 : vector<8x32xf32>
    %457 = arith.subf %444, %456 : vector<8x32xf32>
    %458 = arith.subf %444, %457 : vector<8x32xf32>
    %459 = tpu.concatenate %449, %448, %444, %457, %458 in 1 : vector<8x16xf32>, vector<8x16xf32>, vector<8x32xf32>, vector<8x32xf32>, vector<8x32xf32> -> vector<8x128xf32>
    %c17 = arith.constant 17 : index
    %c0_121 = arith.constant 0 : index
    %c0_122 = arith.constant 0 : index
    %460 = vector.load %arg8[%c17, %c0_121, %c0_122] : memref<20x8x128xf32, #tpu.memory_space<vmem>>, vector<1x8x128xf32>
    %461 = vector.shape_cast %460 : vector<1x8x128xf32> to vector<8x128xf32>
    %462 = vector.shape_cast %459 : vector<8x128xf32> to vector<1x8x128xf32>
    tpu.vector_store %arg8[%c17, %c0_121, %c0_122], %462 {strides = array<i32>} : memref<20x8x128xf32, #tpu.memory_space<vmem>>, vector<1x8x128xf32>,
    %463 = vector.extract_strided_slice %9 {offsets = [0, 288], sizes = [8, 16], strides = [1, 1]} : vector<8x320xf32> to vector<8x16xf32>
    %464 = math.tanh %457 : vector<8x32xf32>
    %cst_123 = arith.constant dense<0.000000e+00> : vector<8x32xf32>
    %465 = tpu.matmul %464, %0, %cst_123 {dimension_numbers = #tpu.dot_dimension_numbers<[1], [0], [0], [1], [0, 0, 1, 1], [], []>} : vector<8x32xf32>, vector<32x32xf32>, vector<8x32xf32> -> vector<8x32xf32>
    %cst_124 = arith.constant 5.000000e-01 : f32
    %466 = vector.broadcast %cst_124 : f32 to vector<8x32xf32>
    %467 = arith.mulf %466, %457 : vector<8x32xf32>
    %468 = arith.addf %467, %465 : vector<8x32xf32>
    %469 = arith.addf %468, %4 : vector<8x32xf32>
    %470 = math.tanh %469 : vector<8x32xf32>
    %cst_125 = arith.constant dense<0.000000e+00> : vector<8x48xf32>
    %471 = tpu.matmul %470, %1, %cst_125 {dimension_numbers = #tpu.dot_dimension_numbers<[1], [0], [0], [1], [0, 0, 1, 1], [], []>} : vector<8x32xf32>, vector<32x48xf32>, vector<8x48xf32> -> vector<8x48xf32>
    %472 = vector.extract_strided_slice %471 {offsets = [0, 0], sizes = [8, 16], strides = [1, 1]} : vector<8x48xf32> to vector<8x16xf32>
    %473 = arith.addf %472, %7 : vector<8x16xf32>
    %474 = arith.subf %473, %463 : vector<8x16xf32>
    %475 = vector.extract_strided_slice %471 {offsets = [0, 16], sizes = [8, 32], strides = [1, 1]} : vector<8x48xf32> to vector<8x32xf32>
    %476 = vector.extract_strided_slice %11 {offsets = [0, 576], sizes = [8, 32], strides = [1, 1]} : vector<8x640xf32> to vector<8x32xf32>
    %477 = arith.addf %475, %476 : vector<8x32xf32>
    %478 = arith.mulf %470, %470 : vector<8x32xf32>
    %cst_126 = arith.constant 1.000000e+00 : f32
    %479 = vector.broadcast %cst_126 : f32 to vector<8x32xf32>
    %480 = arith.subf %479, %478 : vector<8x32xf32>
    %481 = arith.mulf %480, %477 : vector<8x32xf32>
    %482 = arith.subf %469, %481 : vector<8x32xf32>
    %483 = arith.subf %469, %482 : vector<8x32xf32>
    %484 = tpu.concatenate %474, %473, %469, %482, %483 in 1 : vector<8x16xf32>, vector<8x16xf32>, vector<8x32xf32>, vector<8x32xf32>, vector<8x32xf32> -> vector<8x128xf32>
    %c18 = arith.constant 18 : index
    %c0_127 = arith.constant 0 : index
    %c0_128 = arith.constant 0 : index
    %485 = vector.load %arg8[%c18, %c0_127, %c0_128] : memref<20x8x128xf32, #tpu.memory_space<vmem>>, vector<1x8x128xf32>
    %486 = vector.shape_cast %485 : vector<1x8x128xf32> to vector<8x128xf32>
    %487 = vector.shape_cast %484 : vector<8x128xf32> to vector<1x8x128xf32>
    tpu.vector_store %arg8[%c18, %c0_127, %c0_128], %487 {strides = array<i32>} : memref<20x8x128xf32, #tpu.memory_space<vmem>>, vector<1x8x128xf32>,
    %488 = vector.extract_strided_slice %9 {offsets = [0, 304], sizes = [8, 16], strides = [1, 1]} : vector<8x320xf32> to vector<8x16xf32>
    %489 = math.tanh %482 : vector<8x32xf32>
    %cst_129 = arith.constant dense<0.000000e+00> : vector<8x32xf32>
    %490 = tpu.matmul %489, %0, %cst_129 {dimension_numbers = #tpu.dot_dimension_numbers<[1], [0], [0], [1], [0, 0, 1, 1], [], []>} : vector<8x32xf32>, vector<32x32xf32>, vector<8x32xf32> -> vector<8x32xf32>
    %cst_130 = arith.constant 5.000000e-01 : f32
    %491 = vector.broadcast %cst_130 : f32 to vector<8x32xf32>
    %492 = arith.mulf %491, %482 : vector<8x32xf32>
    %493 = arith.addf %492, %490 : vector<8x32xf32>
    %494 = arith.addf %493, %4 : vector<8x32xf32>
    %495 = math.tanh %494 : vector<8x32xf32>
    %cst_131 = arith.constant dense<0.000000e+00> : vector<8x48xf32>
    %496 = tpu.matmul %495, %1, %cst_131 {dimension_numbers = #tpu.dot_dimension_numbers<[1], [0], [0], [1], [0, 0, 1, 1], [], []>} : vector<8x32xf32>, vector<32x48xf32>, vector<8x48xf32> -> vector<8x48xf32>
    %497 = vector.extract_strided_slice %496 {offsets = [0, 0], sizes = [8, 16], strides = [1, 1]} : vector<8x48xf32> to vector<8x16xf32>
    %498 = arith.addf %497, %7 : vector<8x16xf32>
    %499 = arith.subf %498, %488 : vector<8x16xf32>
    %500 = vector.extract_strided_slice %496 {offsets = [0, 16], sizes = [8, 32], strides = [1, 1]} : vector<8x48xf32> to vector<8x32xf32>
    %501 = vector.extract_strided_slice %11 {offsets = [0, 608], sizes = [8, 32], strides = [1, 1]} : vector<8x640xf32> to vector<8x32xf32>
    %502 = arith.addf %500, %501 : vector<8x32xf32>
    %503 = arith.mulf %495, %495 : vector<8x32xf32>
    %cst_132 = arith.constant 1.000000e+00 : f32
    %504 = vector.broadcast %cst_132 : f32 to vector<8x32xf32>
    %505 = arith.subf %504, %503 : vector<8x32xf32>
    %506 = arith.mulf %505, %502 : vector<8x32xf32>
    %507 = arith.subf %494, %506 : vector<8x32xf32>
    %508 = arith.subf %494, %507 : vector<8x32xf32>
    %509 = tpu.concatenate %499, %498, %494, %507, %508 in 1 : vector<8x16xf32>, vector<8x16xf32>, vector<8x32xf32>, vector<8x32xf32>, vector<8x32xf32> -> vector<8x128xf32>
    %c19 = arith.constant 19 : index
    %c0_133 = arith.constant 0 : index
    %c0_134 = arith.constant 0 : index
    %510 = vector.load %arg8[%c19, %c0_133, %c0_134] : memref<20x8x128xf32, #tpu.memory_space<vmem>>, vector<1x8x128xf32>
    %511 = vector.shape_cast %510 : vector<1x8x128xf32> to vector<8x128xf32>
    %512 = vector.shape_cast %509 : vector<8x128xf32> to vector<1x8x128xf32>
    tpu.vector_store %arg8[%c19, %c0_133, %c0_134], %512 {strides = array<i32>} : memref<20x8x128xf32, #tpu.memory_space<vmem>>, vector<1x8x128xf32>,
    return
  }
  func.func @transform_0(%arg0: i32) -> (i32, i32, i32) {
    %c0_i32 = arith.constant 0 : i32
    %c0_i32_0 = arith.constant 0 : i32
    %c0_i32_1 = arith.constant 0 : i32
    return %arg0, %c0_i32, %c0_i32_0 : i32, i32, i32
  }
  func.func @transform_1(%arg0: i32) -> (i32, i32, i32) {
    %c0_i32 = arith.constant 0 : i32
    %c0_i32_0 = arith.constant 0 : i32
    %c0_i32_1 = arith.constant 0 : i32
    return %arg0, %c0_i32, %c0_i32_0 : i32, i32, i32
  }
  func.func @transform_2(%arg0: i32) -> (i32, i32) {
    %c0_i32 = arith.constant 0 : i32
    %c0_i32_0 = arith.constant 0 : i32
    %c0_i32_1 = arith.constant 0 : i32
    return %c0_i32, %c0_i32_0 : i32, i32
  }
  func.func @transform_3(%arg0: i32) -> (i32, i32) {
    %c0_i32 = arith.constant 0 : i32
    %c0_i32_0 = arith.constant 0 : i32
    %c0_i32_1 = arith.constant 0 : i32
    return %c0_i32, %c0_i32_0 : i32, i32
  }
  func.func @transform_4(%arg0: i32) -> (i32, i32) {
    %c0_i32 = arith.constant 0 : i32
    %c0_i32_0 = arith.constant 0 : i32
    %c0_i32_1 = arith.constant 0 : i32
    return %c0_i32, %c0_i32_0 : i32, i32
  }
  func.func @transform_5(%arg0: i32) -> (i32, i32) {
    %c0_i32 = arith.constant 0 : i32
    %c0_i32_0 = arith.constant 0 : i32
    %c0_i32_1 = arith.constant 0 : i32
    return %c0_i32, %c0_i32_0 : i32, i32
  }
  func.func @transform_6(%arg0: i32) -> (i32, i32) {
    %c0_i32 = arith.constant 0 : i32
    %c0_i32_0 = arith.constant 0 : i32
    %c0_i32_1 = arith.constant 0 : i32
    return %c0_i32, %c0_i32_0 : i32, i32
  }
  func.func @transform_7(%arg0: i32) -> (i32, i32, i32) {
    %c0_i32 = arith.constant 0 : i32
    %c0_i32_0 = arith.constant 0 : i32
    %c0_i32_1 = arith.constant 0 : i32
    return %arg0, %c0_i32, %c0_i32_0 : i32, i32, i32
  }
}

</mosaic_0001>

<llo_original>
// kernel: tpu_custom_call.1
$region0: #{tpu_custom_call.1}
  #allocation0 [shape = 'u32[]', space=smem, size = 0x4, offset = 0x4, fixed_abs, tag = 'smem constant byte address 0x4 - core index']
  #allocation1 [shape = 'u32[144,128]{1,0:T(1,128)}', space=vmem, size = 0x12000, scoped, tag = 'internal scratch']
  %s0 = inlined_call_operand.hbm [shape: f32[1,8,320], index: 0, kind: input, shape index: {}]
  %s1 = inlined_call_operand.hbm [shape: f32[1,8,640], index: 1, kind: input, shape index: {}]
  %s2 = inlined_call_operand.hbm [shape: f32[32,32], index: 2, kind: input, shape index: {}]
  %s3 = inlined_call_operand.hbm [shape: f32[32,48], index: 3, kind: input, shape index: {}]
  %s4 = inlined_call_operand.vmem [shape: f32[1,32], index: 4, kind: input, shape index: {}]
  %s5 = inlined_call_operand.vmem [shape: f32[1,16], index: 5, kind: input, shape index: {}]
  %s6 = inlined_call_operand.vmem [shape: f32[8,32], index: 6, kind: input, shape index: {}]
  %s7 = inlined_call_operand.hbm [shape: f32[20,8,128], index: 7, kind: output, shape index: {}]
  %s8 = sld [smem:[#allocation0]]
  $region54: #{tpu_custom_call.1} parent=0
    _
  %s10 = ssub.s32 1, %s8
  %s11 = scalar_select 0, %s10, %s8
  $region1: #{tpu_custom_call.1} parent=0
    #allocation2 [shape = 'u8[12288]{0}', space=vmem, size = 0x3000, scoped, tag = 'input window, operand 0, single buffered']
    #allocation3 [shape = 's32[1]{0}', space=sflag, size = 0x4, scoped, tag = 'scoped memory for tpu_custom_call.1']
    #allocation4 [shape = 's32[1]{0}', space=sflag, size = 0x4, scoped, tag = 'scoped memory for tpu_custom_call.1']
    #allocation5 [shape = 'u8[20480]{0}', space=vmem, size = 0x5000, scoped, tag = 'input window, operand 1, single buffered']
    #allocation6 [shape = 's32[1]{0}', space=sflag, size = 0x4, scoped, tag = 'scoped memory for tpu_custom_call.1']
    #allocation7 [shape = 'u8[16384]{0}', space=vmem, size = 0x4000, scoped, tag = 'input window, operand 2, single buffered']
    #allocation8 [shape = 'u8[16384]{0}', space=vmem, size = 0x4000, scoped, tag = 'input window, operand 3, single buffered']
    #allocation9 [shape = 's32[1]{0}', space=sflag, size = 0x4, scoped, tag = 'scoped memory for tpu_custom_call.1']
    #allocation10 [shape = 'u8[81920]{0}', space=vmem, size = 0x14000, scoped, tag = 'output window, operand 0, single buffered']
    %12 = vsyncpa [#allocation3], 0
    %13 = vsyncpa [#allocation6], 0
    %14 = vsyncpa [#allocation9], 0
    %15 = vsyncpa [#allocation4], 0
    // Predicated region
    $region2: #{tpu_custom_call.1} parent=1 // pred_check
      _
    $region3: #{tpu_custom_call.1} parent=1 // pred_check_branch
      %17 = sbr.rel (0) target = $region5
    $region4: #{tpu_custom_call.1} parent=1 // pred_region
      %s19 = ssub.s32 384, 384
      %20 = vsyncadd [#allocation3], %s19
      %s22 = sshll.u32 [#allocation2], 4
      %s23 = int_to_ptr.vmem [resolvable:$true] %s22
      %25 = dma.hbm_to_vmem [thread:$0]  %s0, 384, %s23, [#allocation3]
    $region5: #{tpu_custom_call.1} parent=1 // pred_fallthru
      _
    // Predicated region
    $region6: #{tpu_custom_call.1} parent=1 // pred_check
      _
    $region7: #{tpu_custom_call.1} parent=1 // pred_check_branch
      %27 = sbr.rel (0) target = $region9
    $region8: #{tpu_custom_call.1} parent=1 // pred_region
      %s29 = ssub.s32 640, 640
      %30 = vsyncadd [#allocation6], %s29
      %s32 = sshll.u32 [#allocation5], 4
      %s33 = int_to_ptr.vmem [resolvable:$true] %s32
      %35 = dma.hbm_to_vmem [thread:$0]  %s1, 640, %s33, [#allocation6]
    $region9: #{tpu_custom_call.1} parent=1 // pred_fallthru
      _
    // Predicated region
    $region10: #{tpu_custom_call.1} parent=1 // pred_check
      _
    $region11: #{tpu_custom_call.1} parent=1 // pred_check_branch
      %37 = sbr.rel (0) target = $region13
    $region12: #{tpu_custom_call.1} parent=1 // pred_region
      %s39 = ssub.s32 512, 512
      %40 = vsyncadd [#allocation6], %s39
      %s41 = sshll.u32 [#allocation7], 4
      %s42 = int_to_ptr.vmem [resolvable:$true] %s41
      %47 = dma.hbm_to_vmem [thread:$0]  %s2, 512, %s42, [#allocation6], 128, 128, 8
    $region13: #{tpu_custom_call.1} parent=1 // pred_fallthru
      _
    // Predicated region
    $region14: #{tpu_custom_call.1} parent=1 // pred_check
      _
    $region15: #{tpu_custom_call.1} parent=1 // pred_check_branch
      %49 = sbr.rel (0) target = $region17
    $region16: #{tpu_custom_call.1} parent=1 // pred_region
      %s51 = ssub.s32 512, 512
      %52 = vsyncadd [#allocation9], %s51
      %s53 = sshll.u32 [#allocation8], 4
      %s54 = int_to_ptr.vmem [resolvable:$true] %s53
      %59 = dma.hbm_to_vmem [thread:$0]  %s3, 512, %s54, [#allocation9], 128, 128, 8
    $region17: #{tpu_custom_call.1} parent=1 // pred_fallthru
      _
    // Predicated region
    $region18: #{tpu_custom_call.1} parent=1 // pred_check
      _
    $region19: #{tpu_custom_call.1} parent=1 // pred_check_branch
      %61 = sbr.rel (0) target = $region21
    $region20: #{tpu_custom_call.1} parent=1 // pred_region
      _
    $region21: #{tpu_custom_call.1} parent=1 // pred_fallthru
      _
    // Predicated region
    $region22: #{tpu_custom_call.1} parent=1 // pred_check
      _
    $region23: #{tpu_custom_call.1} parent=1 // pred_check_branch
      %63 = sbr.rel (0) target = $region25
    $region24: #{tpu_custom_call.1} parent=1 // pred_region
      _
    $region25: #{tpu_custom_call.1} parent=1 // pred_fallthru
      _
    // Predicated region
    $region26: #{tpu_custom_call.1} parent=1 // pred_check
      _
    $region27: #{tpu_custom_call.1} parent=1 // pred_check_branch
      %65 = sbr.rel (0) target = $region29
    $region28: #{tpu_custom_call.1} parent=1 // pred_region
      _
    $region29: #{tpu_custom_call.1} parent=1 // pred_fallthru
      _
    // Predicated region
    $region30: #{tpu_custom_call.1} parent=1 // pred_check
      _
    $region31: #{tpu_custom_call.1} parent=1 // pred_check_branch
      %67 = sbr.rel (0) target = $region33
    $region32: #{tpu_custom_call.1} parent=1 // pred_region
      %68 = dma.done [#allocation3], 384
    $region33: #{tpu_custom_call.1} parent=1 // pred_fallthru
      _
    // Predicated region
    $region34: #{tpu_custom_call.1} parent=1 // pred_check
      _
    $region35: #{tpu_custom_call.1} parent=1 // pred_check_branch
      %70 = sbr.rel (0) target = $region37
    $region36: #{tpu_custom_call.1} parent=1 // pred_region
      %71 = dma.done [#allocation6], 640
    $region37: #{tpu_custom_call.1} parent=1 // pred_fallthru
      _
    // Predicated region
    $region38: #{tpu_custom_call.1} parent=1 // pred_check
      _
    $region39: #{tpu_custom_call.1} parent=1 // pred_check_branch
      %73 = sbr.rel (0) target = $region41
    $region40: #{tpu_custom_call.1} parent=1 // pred_region
      %74 = dma.done [#allocation6], 512
    $region41: #{tpu_custom_call.1} parent=1 // pred_fallthru
      _
    // Predicated region
    $region42: #{tpu_custom_call.1} parent=1 // pred_check
      _
    $region43: #{tpu_custom_call.1} parent=1 // pred_check_branch
      %76 = sbr.rel (0) target = $region45
    $region44: #{tpu_custom_call.1} parent=1 // pred_region
      %77 = dma.done [#allocation9], 512
    $region45: #{tpu_custom_call.1} parent=1 // pred_fallthru
      _
    %v78 = vld [vmem:[#allocation7] sm:$0xff]
    %v79 = vld [vmem:[#allocation7 + $0x8] sm:$0xff]
    %v80 = vld [vmem:[#allocation7 + $0x10] sm:$0xff]
    %v81 = vld [vmem:[#allocation7 + $0x18] sm:$0xff]
    %v82 = vld [vmem:[#allocation8] sm:$0xff]
    %v83 = vld [vmem:[#allocation8 + $0x8] sm:$0xff]
    %v84 = vld [vmem:[#allocation8 + $0x10] sm:$0xff]
    %v85 = vld [vmem:[#allocation8 + $0x18] sm:$0xff]
    %v86 = vld [vmem:[%s4] sm:$0x1]
    %v88 = vlaneseq
    %v89 = vshrl.u32 %v88, 7
    %v90 = vsub.s32 0, %v89
    %v91 = vrot.slane %v86, %v90
    %v93 = vld [vmem:[%s5] sm:$0x1]
    %v95 = vlaneseq
    %v96 = vshrl.u32 %v95, 7
    %v97 = vsub.s32 0, %v96
    %v98 = vrot.slane %v93, %v97
    %v100 = vld [vmem:[#allocation2] sm:$0xff]
    %v101 = vld [vmem:[#allocation2 + $0x8] sm:$0xff]
    %v102 = vld [vmem:[#allocation2 + $0x10] sm:$0xff]
    %v103 = vld [vmem:[#allocation5] sm:$0xff]
    %v104 = vld [vmem:[#allocation5 + $0x8] sm:$0xff]
    %v105 = vld [vmem:[#allocation5 + $0x10] sm:$0xff]
    %v106 = vld [vmem:[#allocation5 + $0x18] sm:$0xff]
    %v107 = vld [vmem:[#allocation5 + $0x20] sm:$0xff]
    %v108 = vld [vmem:[%s6] sm:$0xff]
    %v109 = vtanh.pop %v108
    %vm110 = vcmask 261120
    %v112 = vsel %vm110, %v109, 0
    %114 = vmatprep.subr.mxu0 0.0
    %115 = vmatpush1.msra.mxu0 %v78
    %116 = vmatprep.subr.mxu0 0.0
    %117 = vmatpush1.msra.mxu0 %v79
    %118 = vmatprep.subr.mxu0 0.0
    %119 = vmatpush1.msra.mxu0 %v80
    %120 = vmatprep.subr.mxu0 0.0
    %121 = vmatpush1.msra.mxu0 %v81
    %122 = vmatprep.subr.mxu0 0.0
    %123 = vmatpush1.msra.mxu0 0.0
    %124 = vmatprep.subr.mxu0 0.0
    %125 = vmatpush1.msra.mxu0 0.0
    %126 = vmatprep.subr.mxu0 0.0
    %127 = vmatpush1.msra.mxu0 0.0
    %128 = vmatprep.subr.mxu0 0.0
    %129 = vmatpush1.msra.mxu0 0.0
    %130 = vmatprep.subr.mxu0 0.0
    %131 = vmatpush1.msra.mxu0 0.0
    %132 = vmatprep.subr.mxu0 0.0
    %133 = vmatpush1.msra.mxu0 0.0
    %134 = vmatprep.subr.mxu0 0.0
    %135 = vmatpush1.msra.mxu0 0.0
    %136 = vmatprep.subr.mxu0 0.0
    %137 = vmatpush1.msra.mxu0 0.0
    %138 = vmatprep.subr.mxu0 0.0
    %139 = vmatpush1.msra.mxu0 0.0
    %140 = vmatprep.subr.mxu0 0.0
    %141 = vmatpush1.msra.mxu0 0.0
    %142 = vmatprep.subr.mxu0 0.0
    %143 = vmatpush1.msra.mxu0 0.0
    %144 = vmatprep.subr.mxu0 0.0
    %145 = vmatpush1.msra.mxu0 0.0
    %146 = vmatprep.subr.mxu0 0.0
    %147 = vmatpush1.msra.mxu0 0.0
    %148 = vmatprep.subr.mxu0 0.0
    %149 = vmatpush1.msra.mxu0 0.0
    %150 = vmatprep.subr.mxu0 0.0
    %151 = vmatpush1.msra.mxu0 0.0
    %152 = vmatprep.subr.mxu0 0.0
    %153 = vmatpush1.msra.mxu0 0.0
    %154 = vmatprep.subr.mxu0 0.0
    %155 = vmatpush1.msra.mxu0 0.0
    %156 = vmatprep.subr.mxu0 0.0
    %157 = vmatpush1.msra.mxu0 0.0
    %158 = vmatprep.subr.mxu0 0.0
    %159 = vmatpush1.msra.mxu0 0.0
    %160 = vmatprep.subr.mxu0 0.0
    %161 = vmatpush1.msra.mxu0 0.0
    %162 = vmatprep.subr.mxu0 0.0
    %163 = vmatpush1.msra.mxu0 0.0
    %164 = vmatprep.subr.mxu0 0.0
    %165 = vmatpush1.msra.mxu0 0.0
    %166 = vmatprep.subr.mxu0 0.0
    %167 = vmatpush1.msra.mxu0 0.0
    %168 = vmatprep.subr.mxu0 0.0
    %169 = vmatpush1.msra.mxu0 0.0
    %170 = vmatprep.subr.mxu0 0.0
    %171 = vmatpush1.msra.mxu0 0.0
    %172 = vmatprep.subr.mxu0 0.0
    %173 = vmatpush1.msra.mxu0 0.0
    %174 = vmatprep.subr.mxu0 0.0
    %175 = vmatpush1.msra.mxu0 0.0
    %176 = vmatprep.subr.mxu0 0.0
    %177 = vmatpush1.msra.mxu0 0.0
    %178 = vmatprep.mubr.f32.mxu0 0.0
    %179 = vmatmul.mubr.f32.gmra.mrb[0].mxu0 %v112
    %v180 = vpop.f32.mrb[0].mxu0
    %v181 = vadd.f32 0.0, %v180
    %v182 = vpop.f32.mrb[0].mxu0
    %183 = vdwg.mxu0
    %v184 = vmul.f32 %v108, 0.5
    %v185 = vadd.f32 %v184, %v181
    %v186 = vadd.f32 %v185, %v91
    %v187 = vtanh.pop %v186
    %v189 = vsel %vm110, %v187, 0
    %191 = vmatprep.subr.mxu0 0.0
    %192 = vmatpush1.msra.mxu0 %v82
    %193 = vmatprep.subr.mxu0 0.0
    %194 = vmatpush1.msra.mxu0 %v83
    %195 = vmatprep.subr.mxu0 0.0
    %196 = vmatpush1.msra.mxu0 %v84
    %197 = vmatprep.subr.mxu0 0.0
    %198 = vmatpush1.msra.mxu0 %v85
    %199 = vmatprep.subr.mxu0 0.0
    %200 = vmatpush1.msra.mxu0 0.0
    %201 = vmatprep.subr.mxu0 0.0
    %202 = vmatpush1.msra.mxu0 0.0
    %203 = vmatprep.subr.mxu0 0.0
    %204 = vmatpush1.msra.mxu0 0.0
    %205 = vmatprep.subr.mxu0 0.0
    %206 = vmatpush1.msra.mxu0 0.0
    %207 = vmatprep.subr.mxu0 0.0
    %208 = vmatpush1.msra.mxu0 0.0
    %209 = vmatprep.subr.mxu0 0.0
    %210 = vmatpush1.msra.mxu0 0.0
    %211 = vmatprep.subr.mxu0 0.0
    %212 = vmatpush1.msra.mxu0 0.0
    %213 = vmatprep.subr.mxu0 0.0
    %214 = vmatpush1.msra.mxu0 0.0
    %215 = vmatprep.subr.mxu0 0.0
    %216 = vmatpush1.msra.mxu0 0.0
    %217 = vmatprep.subr.mxu0 0.0
    %218 = vmatpush1.msra.mxu0 0.0
    %219 = vmatprep.subr.mxu0 0.0
    %220 = vmatpush1.msra.mxu0 0.0
    %221 = vmatprep.subr.mxu0 0.0
    %222 = vmatpush1.msra.mxu0 0.0
    %223 = vmatprep.subr.mxu0 0.0
    %224 = vmatpush1.msra.mxu0 0.0
    %225 = vmatprep.subr.mxu0 0.0
    %226 = vmatpush1.msra.mxu0 0.0
    %227 = vmatprep.subr.mxu0 0.0
    %228 = vmatpush1.msra.mxu0 0.0
    %229 = vmatprep.subr.mxu0 0.0
    %230 = vmatpush1.msra.mxu0 0.0
    %231 = vmatprep.subr.mxu0 0.0
    %232 = vmatpush1.msra.mxu0 0.0
    %233 = vmatprep.subr.mxu0 0.0
    %234 = vmatpush1.msra.mxu0 0.0
    %235 = vmatprep.subr.mxu0 0.0
    %236 = vmatpush1.msra.mxu0 0.0
    %237 = vmatprep.subr.mxu0 0.0
    %238 = vmatpush1.msra.mxu0 0.0
    %239 = vmatprep.subr.mxu0 0.0
    %240 = vmatpush1.msra.mxu0 0.0
    %241 = vmatprep.subr.mxu0 0.0
    %242 = vmatpush1.msra.mxu0 0.0
    %243 = vmatprep.subr.mxu0 0.0
    %244 = vmatpush1.msra.mxu0 0.0
    %245 = vmatprep.subr.mxu0 0.0
    %246 = vmatpush1.msra.mxu0 0.0
    %247 = vmatprep.subr.mxu0 0.0
    %248 = vmatpush1.msra.mxu0 0.0
    %249 = vmatprep.subr.mxu0 0.0
    %250 = vmatpush1.msra.mxu0 0.0
    %251 = vmatprep.subr.mxu0 0.0
    %252 = vmatpush1.msra.mxu0 0.0
    %253 = vmatprep.subr.mxu0 0.0
    %254 = vmatpush1.msra.mxu0 0.0
    %255 = vmatprep.mubr.f32.mxu0 0.0
    %256 = vmatmul.mubr.f32.gmra.mrb[0].mxu0 %v189
    %v257 = vpop.f32.mrb[0].mxu0
    %v258 = vadd.f32 0.0, %v257
    %v259 = vpop.f32.mrb[0].mxu0
    %260 = vdwg.mxu0
    %v261 = vadd.f32 %v258, %v98
    %v262 = vsub.f32 %v261, %v100
    %264 = vrot.lane.b32.xlu0 %v103, 16
    %v265 = vpop.permute.xlu0 %264
    %v267 = vadd.f32 %v258, %v265
    %v268 = vmul.f32 %v187, %v187
    %v269 = vsub.f32 1.0, %v268
    %271 = vrot.lane.b32.xlu0 %v267, 112
    %v272 = vpop.permute.xlu0 %271
    %v274 = vmul.f32 %v269, %v272
    %v275 = vsub.f32 %v186, %v274
    %v276 = vsub.f32 %v186, %v275
    %278 = vrot.lane.b32.xlu0 %v261, 16
    %v279 = vpop.permute.xlu0 %278
    %282 = vrot.lane.b32.xlu0 %v186, 32
    %v283 = vpop.permute.xlu0 %282
    %286 = vrot.lane.b32.xlu0 %v275, 64
    %v287 = vpop.permute.xlu0 %286
    %290 = vrot.lane.b32.xlu0 %v276, 96
    %v291 = vpop.permute.xlu0 %290
    %vm293 = vcmask 130048
    %v294 = vsel %vm293, %v262, %v279
    %v295 = vsel %vm110, %v294, %v283
    %vm296 = vcmask 523264
    %v297 = vsel %vm296, %v295, %v287
    %vm298 = vcmask 785408
    %v299 = vsel %vm298, %v297, %v291
    %300 = vst [vmem:[#allocation10] sm:$0xff] %v299
    %v301 = vtanh.pop %v275
    %v303 = vsel %vm110, %v301, 0
    %305 = vmatprep.subr.mxu0 0.0
    %306 = vmatpush1.msra.mxu0 %v78
    %307 = vmatprep.subr.mxu0 0.0
    %308 = vmatpush1.msra.mxu0 %v79
    %309 = vmatprep.subr.mxu0 0.0
    %310 = vmatpush1.msra.mxu0 %v80
    %311 = vmatprep.subr.mxu0 0.0
    %312 = vmatpush1.msra.mxu0 %v81
    %313 = vmatprep.subr.mxu0 0.0
    %314 = vmatpush1.msra.mxu0 0.0
    %315 = vmatprep.subr.mxu0 0.0
    %316 = vmatpush1.msra.mxu0 0.0
    %317 = vmatprep.subr.mxu0 0.0
    %318 = vmatpush1.msra.mxu0 0.0
    %319 = vmatprep.subr.mxu0 0.0
    %320 = vmatpush1.msra.mxu0 0.0
    %321 = vmatprep.subr.mxu0 0.0
    %322 = vmatpush1.msra.mxu0 0.0
    %323 = vmatprep.subr.mxu0 0.0
    %324 = vmatpush1.msra.mxu0 0.0
    %325 = vmatprep.subr.mxu0 0.0
    %326 = vmatpush1.msra.mxu0 0.0
    %327 = vmatprep.subr.mxu0 0.0
    %328 = vmatpush1.msra.mxu0 0.0
    %329 = vmatprep.subr.mxu0 0.0
    %330 = vmatpush1.msra.mxu0 0.0
    %331 = vmatprep.subr.mxu0 0.0
    %332 = vmatpush1.msra.mxu0 0.0
    %333 = vmatprep.subr.mxu0 0.0
    %334 = vmatpush1.msra.mxu0 0.0
    %335 = vmatprep.subr.mxu0 0.0
    %336 = vmatpush1.msra.mxu0 0.0
    %337 = vmatprep.subr.mxu0 0.0
    %338 = vmatpush1.msra.mxu0 0.0
    %339 = vmatprep.subr.mxu0 0.0
    %340 = vmatpush1.msra.mxu0 0.0
    %341 = vmatprep.subr.mxu0 0.0
    %342 = vmatpush1.msra.mxu0 0.0
    %343 = vmatprep.subr.mxu0 0.0
    %344 = vmatpush1.msra.mxu0 0.0
    %345 = vmatprep.subr.mxu0 0.0
    %346 = vmatpush1.msra.mxu0 0.0
    %347 = vmatprep.subr.mxu0 0.0
    %348 = vmatpush1.msra.mxu0 0.0
    %349 = vmatprep.subr.mxu0 0.0
    %350 = vmatpush1.msra.mxu0 0.0
    %351 = vmatprep.subr.mxu0 0.0
    %352 = vmatpush1.msra.mxu0 0.0
    %353 = vmatprep.subr.mxu0 0.0
    %354 = vmatpush1.msra.mxu0 0.0
    %355 = vmatprep.subr.mxu0 0.0
    %356 = vmatpush1.msra.mxu0 0.0
    %357 = vmatprep.subr.mxu0 0.0
    %358 = vmatpush1.msra.mxu0 0.0
    %359 = vmatprep.subr.mxu0 0.0
    %360 = vmatpush1.msra.mxu0 0.0
    %361 = vmatprep.subr.mxu0 0.0
    %362 = vmatpush1.msra.mxu0 0.0
    %363 = vmatprep.subr.mxu0 0.0
    %364 = vmatpush1.msra.mxu0 0.0
    %365 = vmatprep.subr.mxu0 0.0
    %366 = vmatpush1.msra.mxu0 0.0
    %367 = vmatprep.subr.mxu0 0.0
    %368 = vmatpush1.msra.mxu0 0.0
    %369 = vmatprep.mubr.f32.mxu0 0.0
    %370 = vmatmul.mubr.f32.gmra.mrb[0].mxu0 %v303
    %v371 = vpop.f32.mrb[0].mxu0
    %v372 = vadd.f32 0.0, %v371
    %v373 = vpop.f32.mrb[0].mxu0
    %374 = vdwg.mxu0
    %v375 = vmul.f32 %v275, 0.5
    %v376 = vadd.f32 %v375, %v372
    %v377 = vadd.f32 %v376, %v91
    %v378 = vtanh.pop %v377
    %v380 = vsel %vm110, %v378, 0
    %382 = vmatprep.subr.mxu0 0.0
    %383 = vmatpush1.msra.mxu0 %v82
    %384 = vmatprep.subr.mxu0 0.0
    %385 = vmatpush1.msra.mxu0 %v83
    %386 = vmatprep.subr.mxu0 0.0
    %387 = vmatpush1.msra.mxu0 %v84
    %388 = vmatprep.subr.mxu0 0.0
    %389 = vmatpush1.msra.mxu0 %v85
    %390 = vmatprep.subr.mxu0 0.0
    %391 = vmatpush1.msra.mxu0 0.0
    %392 = vmatprep.subr.mxu0 0.0
    %393 = vmatpush1.msra.mxu0 0.0
    %394 = vmatprep.subr.mxu0 0.0
    %395 = vmatpush1.msra.mxu0 0.0
    %396 = vmatprep.subr.mxu0 0.0
    %397 = vmatpush1.msra.mxu0 0.0
    %398 = vmatprep.subr.mxu0 0.0
    %399 = vmatpush1.msra.mxu0 0.0
    %400 = vmatprep.subr.mxu0 0.0
    %401 = vmatpush1.msra.mxu0 0.0
    %402 = vmatprep.subr.mxu0 0.0
    %403 = vmatpush1.msra.mxu0 0.0
    %404 = vmatprep.subr.mxu0 0.0
    %405 = vmatpush1.msra.mxu0 0.0
    %406 = vmatprep.subr.mxu0 0.0
    %407 = vmatpush1.msra.mxu0 0.0
    %408 = vmatprep.subr.mxu0 0.0
    %409 = vmatpush1.msra.mxu0 0.0
    %410 = vmatprep.subr.mxu0 0.0
    %411 = vmatpush1.msra.mxu0 0.0
    %412 = vmatprep.subr.mxu0 0.0
    %413 = vmatpush1.msra.mxu0 0.0
    %414 = vmatprep.subr.mxu0 0.0
    %415 = vmatpush1.msra.mxu0 0.0
    %416 = vmatprep.subr.mxu0 0.0
    %417 = vmatpush1.msra.mxu0 0.0
    %418 = vmatprep.subr.mxu0 0.0
    %419 = vmatpush1.msra.mxu0 0.0
    %420 = vmatprep.subr.mxu0 0.0
    %421 = vmatpush1.msra.mxu0 0.0
    %422 = vmatprep.subr.mxu0 0.0
    %423 = vmatpush1.msra.mxu0 0.0
    %424 = vmatprep.subr.mxu0 0.0
    %425 = vmatpush1.msra.mxu0 0.0
    %426 = vmatprep.subr.mxu0 0.0
    %427 = vmatpush1.msra.mxu0 0.0
    %428 = vmatprep.subr.mxu0 0.0
    %429 = vmatpush1.msra.mxu0 0.0
    %430 = vmatprep.subr.mxu0 0.0
    %431 = vmatpush1.msra.mxu0 0.0
    %432 = vmatprep.subr.mxu0 0.0
    %433 = vmatpush1.msra.mxu0 0.0
    %434 = vmatprep.subr.mxu0 0.0
    %435 = vmatpush1.msra.mxu0 0.0
    %436 = vmatprep.subr.mxu0 0.0
    %437 = vmatpush1.msra.mxu0 0.0
    %438 = vmatprep.subr.mxu0 0.0
    %439 = vmatpush1.msra.mxu0 0.0
    %440 = vmatprep.subr.mxu0 0.0
    %441 = vmatpush1.msra.mxu0 0.0
    %442 = vmatprep.subr.mxu0 0.0
    %443 = vmatpush1.msra.mxu0 0.0
    %444 = vmatprep.subr.mxu0 0.0
    %445 = vmatpush1.msra.mxu0 0.0
    %446 = vmatprep.mubr.f32.mxu0 0.0
    %447 = vmatmul.mubr.f32.gmra.mrb[0].mxu0 %v380
    %v448 = vpop.f32.mrb[0].mxu0
    %v449 = vadd.f32 0.0, %v448
    %v450 = vpop.f32.mrb[0].mxu0
    %451 = vdwg.mxu0
    %v452 = vadd.f32 %v449, %v98
    %454 = vrot.lane.b32.xlu0 %v100, 112
    %v455 = vpop.permute.xlu0 %454
    %v457 = vsub.f32 %v452, %v455
    %458 = vrot.lane.b32.xlu0 %v103, 112
    %v459 = vpop.permute.xlu0 %458
    %v461 = vadd.f32 %v449, %v459
    %v462 = vmul.f32 %v378, %v378
    %v463 = vsub.f32 1.0, %v462
    %465 = vrot.lane.b32.xlu0 %v461, 112
    %v466 = vpop.permute.xlu0 %465
    %v468 = vmul.f32 %v463, %v466
    %v469 = vsub.f32 %v377, %v468
    %v470 = vsub.f32 %v377, %v469
    %472 = vrot.lane.b32.xlu0 %v452, 16
    %v473 = vpop.permute.xlu0 %472
    %476 = vrot.lane.b32.xlu0 %v377, 32
    %v477 = vpop.permute.xlu0 %476
    %480 = vrot.lane.b32.xlu0 %v469, 64
    %v481 = vpop.permute.xlu0 %480
    %484 = vrot.lane.b32.xlu0 %v470, 96
    %v485 = vpop.permute.xlu0 %484
    %v487 = vsel %vm293, %v457, %v473
    %v488 = vsel %vm110, %v487, %v477
    %v489 = vsel %vm296, %v488, %v481
    %v490 = vsel %vm298, %v489, %v485
    %s491 = scalar_lea.vmem [#allocation10], 8
    %492 = vst [vmem:[%s491] sm:$0xff] %v490
    %v493 = vtanh.pop %v469
    %v495 = vsel %vm110, %v493, 0
    %497 = vmatprep.subr.mxu0 0.0
    %498 = vmatpush1.msra.mxu0 %v78
    %499 = vmatprep.subr.mxu0 0.0
    %500 = vmatpush1.msra.mxu0 %v79
    %501 = vmatprep.subr.mxu0 0.0
    %502 = vmatpush1.msra.mxu0 %v80
    %503 = vmatprep.subr.mxu0 0.0
    %504 = vmatpush1.msra.mxu0 %v81
    %505 = vmatprep.subr.mxu0 0.0
    %506 = vmatpush1.msra.mxu0 0.0
    %507 = vmatprep.subr.mxu0 0.0
    %508 = vmatpush1.msra.mxu0 0.0
    %509 = vmatprep.subr.mxu0 0.0
    %510 = vmatpush1.msra.mxu0 0.0
    %511 = vmatprep.subr.mxu0 0.0
    %512 = vmatpush1.msra.mxu0 0.0
    %513 = vmatprep.subr.mxu0 0.0
    %514 = vmatpush1.msra.mxu0 0.0
    %515 = vmatprep.subr.mxu0 0.0
    %516 = vmatpush1.msra.mxu0 0.0
    %517 = vmatprep.subr.mxu0 0.0
    %518 = vmatpush1.msra.mxu0 0.0
    %519 = vmatprep.subr.mxu0 0.0
    %520 = vmatpush1.msra.mxu0 0.0
    %521 = vmatprep.subr.mxu0 0.0
    %522 = vmatpush1.msra.mxu0 0.0
    %523 = vmatprep.subr.mxu0 0.0
    %524 = vmatpush1.msra.mxu0 0.0
    %525 = vmatprep.subr.mxu0 0.0
    %526 = vmatpush1.msra.mxu0 0.0
    %527 = vmatprep.subr.mxu0 0.0
    %528 = vmatpush1.msra.mxu0 0.0
    %529 = vmatprep.subr.mxu0 0.0
    %530 = vmatpush1.msra.mxu0 0.0
    %531 = vmatprep.subr.mxu0 0.0
    %532 = vmatpush1.msra.mxu0 0.0
    %533 = vmatprep.subr.mxu0 0.0
    %534 = vmatpush1.msra.mxu0 0.0
    %535 = vmatprep.subr.mxu0 0.0
    %536 = vmatpush1.msra.mxu0 0.0
    %537 = vmatprep.subr.mxu0 0.0
    %538 = vmatpush1.msra.mxu0 0.0
    %539 = vmatprep.subr.mxu0 0.0
    %540 = vmatpush1.msra.mxu0 0.0
    %541 = vmatprep.subr.mxu0 0.0
    %542 = vmatpush1.msra.mxu0 0.0
    %543 = vmatprep.subr.mxu0 0.0
    %544 = vmatpush1.msra.mxu0 0.0
    %545 = vmatprep.subr.mxu0 0.0
    %546 = vmatpush1.msra.mxu0 0.0
    %547 = vmatprep.subr.mxu0 0.0
    %548 = vmatpush1.msra.mxu0 0.0
    %549 = vmatprep.subr.mxu0 0.0
    %550 = vmatpush1.msra.mxu0 0.0
    %551 = vmatprep.subr.mxu0 0.0
    %552 = vmatpush1.msra.mxu0 0.0
    %553 = vmatprep.subr.mxu0 0.0
    %554 = vmatpush1.msra.mxu0 0.0
    %555 = vmatprep.subr.mxu0 0.0
    %556 = vmatpush1.msra.mxu0 0.0
    %557 = vmatprep.subr.mxu0 0.0
    %558 = vmatpush1.msra.mxu0 0.0
    %559 = vmatprep.subr.mxu0 0.0
    %560 = vmatpush1.msra.mxu0 0.0
    %561 = vmatprep.mubr.f32.mxu0 0.0
    %562 = vmatmul.mubr.f32.gmra.mrb[0].mxu0 %v495
    %v563 = vpop.f32.mrb[0].mxu0
    %v564 = vadd.f32 0.0, %v563
    %v565 = vpop.f32.mrb[0].mxu0
    %566 = vdwg.mxu0
    %v567 = vmul.f32 %v469, 0.5
    %v568 = vadd.f32 %v567, %v564
    %v569 = vadd.f32 %v568, %v91
    %v570 = vtanh.pop %v569
    %v572 = vsel %vm110, %v570, 0
    %574 = vmatprep.subr.mxu0 0.0
    %575 = vmatpush1.msra.mxu0 %v82
    %576 = vmatprep.subr.mxu0 0.0
    %577 = vmatpush1.msra.mxu0 %v83
    %578 = vmatprep.subr.mxu0 0.0
    %579 = vmatpush1.msra.mxu0 %v84
    %580 = vmatprep.subr.mxu0 0.0
    %581 = vmatpush1.msra.mxu0 %v85
    %582 = vmatprep.subr.mxu0 0.0
    %583 = vmatpush1.msra.mxu0 0.0
    %584 = vmatprep.subr.mxu0 0.0
    %585 = vmatpush1.msra.mxu0 0.0
    %586 = vmatprep.subr.mxu0 0.0
    %587 = vmatpush1.msra.mxu0 0.0
    %588 = vmatprep.subr.mxu0 0.0
    %589 = vmatpush1.msra.mxu0 0.0
    %590 = vmatprep.subr.mxu0 0.0
    %591 = vmatpush1.msra.mxu0 0.0
    %592 = vmatprep.subr.mxu0 0.0
    %593 = vmatpush1.msra.mxu0 0.0
    %594 = vmatprep.subr.mxu0 0.0
    %595 = vmatpush1.msra.mxu0 0.0
    %596 = vmatprep.subr.mxu0 0.0
    %597 = vmatpush1.msra.mxu0 0.0
    %598 = vmatprep.subr.mxu0 0.0
    %599 = vmatpush1.msra.mxu0 0.0
    %600 = vmatprep.subr.mxu0 0.0
    %601 = vmatpush1.msra.mxu0 0.0
    %602 = vmatprep.subr.mxu0 0.0
    %603 = vmatpush1.msra.mxu0 0.0
    %604 = vmatprep.subr.mxu0 0.0
    %605 = vmatpush1.msra.mxu0 0.0
    %606 = vmatprep.subr.mxu0 0.0
    %607 = vmatpush1.msra.mxu0 0.0
    %608 = vmatprep.subr.mxu0 0.0
    %609 = vmatpush1.msra.mxu0 0.0
    %610 = vmatprep.subr.mxu0 0.0
    %611 = vmatpush1.msra.mxu0 0.0
    %612 = vmatprep.subr.mxu0 0.0
    %613 = vmatpush1.msra.mxu0 0.0
    %614 = vmatprep.subr.mxu0 0.0
    %615 = vmatpush1.msra.mxu0 0.0
    %616 = vmatprep.subr.mxu0 0.0
    %617 = vmatpush1.msra.mxu0 0.0
    %618 = vmatprep.subr.mxu0 0.0
    %619 = vmatpush1.msra.mxu0 0.0
    %620 = vmatprep.subr.mxu0 0.0
    %621 = vmatpush1.msra.mxu0 0.0
    %622 = vmatprep.subr.mxu0 0.0
    %623 = vmatpush1.msra.mxu0 0.0
    %624 = vmatprep.subr.mxu0 0.0
    %625 = vmatpush1.msra.mxu0 0.0
    %626 = vmatprep.subr.mxu0 0.0
    %627 = vmatpush1.msra.mxu0 0.0
    %628 = vmatprep.subr.mxu0 0.0
    %629 = vmatpush1.msra.mxu0 0.0
    %630 = vmatprep.subr.mxu0 0.0
    %631 = vmatpush1.msra.mxu0 0.0
    %632 = vmatprep.subr.mxu0 0.0
    %633 = vmatpush1.msra.mxu0 0.0
    %634 = vmatprep.subr.mxu0 0.0
    %635 = vmatpush1.msra.mxu0 0.0
    %636 = vmatprep.subr.mxu0 0.0
    %637 = vmatpush1.msra.mxu0 0.0
    %638 = vmatprep.mubr.f32.mxu0 0.0
    %639 = vmatmul.mubr.f32.gmra.mrb[0].mxu0 %v572
    %v640 = vpop.f32.mrb[0].mxu0
    %v641 = vadd.f32 0.0, %v640
    %v642 = vpop.f32.mrb[0].mxu0
    %643 = vdwg.mxu0
    %v644 = vadd.f32 %v641, %v98
    %645 = vrot.lane.b32.xlu0 %v100, 96
    %v646 = vpop.permute.xlu0 %645
    %v648 = vsub.f32 %v644, %v646
    %649 = vrot.lane.b32.xlu0 %v103, 80
    %v650 = vpop.permute.xlu0 %649
    %v652 = vadd.f32 %v641, %v650
    %v653 = vmul.f32 %v570, %v570
    %v654 = vsub.f32 1.0, %v653
    %656 = vrot.lane.b32.xlu0 %v652, 112
    %v657 = vpop.permute.xlu0 %656
    %v659 = vmul.f32 %v654, %v657
    %v660 = vsub.f32 %v569, %v659
    %v661 = vsub.f32 %v569, %v660
    %663 = vrot.lane.b32.xlu0 %v644, 16
    %v664 = vpop.permute.xlu0 %663
    %667 = vrot.lane.b32.xlu0 %v569, 32
    %v668 = vpop.permute.xlu0 %667
    %671 = vrot.lane.b32.xlu0 %v660, 64
    %v672 = vpop.permute.xlu0 %671
    %675 = vrot.lane.b32.xlu0 %v661, 96
    %v676 = vpop.permute.xlu0 %675
    %v678 = vsel %vm293, %v648, %v664
    %v679 = vsel %vm110, %v678, %v668
    %v680 = vsel %vm296, %v679, %v672
    %v681 = vsel %vm298, %v680, %v676
    %s682 = scalar_lea.vmem [#allocation10], 16
    %683 = vst [vmem:[%s682] sm:$0xff] %v681
    %v684 = vtanh.pop %v660
    %v686 = vsel %vm110, %v684, 0
    %688 = vmatprep.subr.mxu0 0.0
    %689 = vmatpush1.msra.mxu0 %v78
    %690 = vmatprep.subr.mxu0 0.0
    %691 = vmatpush1.msra.mxu0 %v79
    %692 = vmatprep.subr.mxu0 0.0
    %693 = vmatpush1.msra.mxu0 %v80
    %694 = vmatprep.subr.mxu0 0.0
    %695 = vmatpush1.msra.mxu0 %v81
    %696 = vmatprep.subr.mxu0 0.0
    %697 = vmatpush1.msra.mxu0 0.0
    %698 = vmatprep.subr.mxu0 0.0
    %699 = vmatpush1.msra.mxu0 0.0
    %700 = vmatprep.subr.mxu0 0.0
    %701 = vmatpush1.msra.mxu0 0.0
    %702 = vmatprep.subr.mxu0 0.0
    %703 = vmatpush1.msra.mxu0 0.0
    %704 = vmatprep.subr.mxu0 0.0
    %705 = vmatpush1.msra.mxu0 0.0
    %706 = vmatprep.subr.mxu0 0.0
    %707 = vmatpush1.msra.mxu0 0.0
    %708 = vmatprep.subr.mxu0 0.0
    %709 = vmatpush1.msra.mxu0 0.0
    %710 = vmatprep.subr.mxu0 0.0
    %711 = vmatpush1.msra.mxu0 0.0
    %712 = vmatprep.subr.mxu0 0.0
    %713 = vmatpush1.msra.mxu0 0.0
    %714 = vmatprep.subr.mxu0 0.0
    %715 = vmatpush1.msra.mxu0 0.0
    %716 = vmatprep.subr.mxu0 0.0
    %717 = vmatpush1.msra.mxu0 0.0
    %718 = vmatprep.subr.mxu0 0.0
    %719 = vmatpush1.msra.mxu0 0.0
    %720 = vmatprep.subr.mxu0 0.0
    %721 = vmatpush1.msra.mxu0 0.0
    %722 = vmatprep.subr.mxu0 0.0
    %723 = vmatpush1.msra.mxu0 0.0
    %724 = vmatprep.subr.mxu0 0.0
    %725 = vmatpush1.msra.mxu0 0.0
    %726 = vmatprep.subr.mxu0 0.0
    %727 = vmatpush1.msra.mxu0 0.0
    %728 = vmatprep.subr.mxu0 0.0
    %729 = vmatpush1.msra.mxu0 0.0
    %730 = vmatprep.subr.mxu0 0.0
    %731 = vmatpush1.msra.mxu0 0.0
    %732 = vmatprep.subr.mxu0 0.0
    %733 = vmatpush1.msra.mxu0 0.0
    %734 = vmatprep.subr.mxu0 0.0
    %735 = vmatpush1.msra.mxu0 0.0
    %736 = vmatprep.subr.mxu0 0.0
    %737 = vmatpush1.msra.mxu0 0.0
    %738 = vmatprep.subr.mxu0 0.0
    %739 = vmatpush1.msra.mxu0 0.0
    %740 = vmatprep.subr.mxu0 0.0
    %741 = vmatpush1.msra.mxu0 0.0
    %742 = vmatprep.subr.mxu0 0.0
    %743 = vmatpush1.msra.mxu0 0.0
    %744 = vmatprep.subr.mxu0 0.0
    %745 = vmatpush1.msra.mxu0 0.0
    %746 = vmatprep.subr.mxu0 0.0
    %747 = vmatpush1.msra.mxu0 0.0
    %748 = vmatprep.subr.mxu0 0.0
    %749 = vmatpush1.msra.mxu0 0.0
    %750 = vmatprep.subr.mxu0 0.0
    %751 = vmatpush1.msra.mxu0 0.0
    %752 = vmatprep.mubr.f32.mxu0 0.0
    %753 = vmatmul.mubr.f32.gmra.mrb[0].mxu0 %v686
    %v754 = vpop.f32.mrb[0].mxu0
    %v755 = vadd.f32 0.0, %v754
    %v756 = vpop.f32.mrb[0].mxu0
    %757 = vdwg.mxu0
    %v758 = vmul.f32 %v660, 0.5
    %v759 = vadd.f32 %v758, %v755
    %v760 = vadd.f32 %v759, %v91
    %v761 = vtanh.pop %v760
    %v763 = vsel %vm110, %v761, 0
    %765 = vmatprep.subr.mxu0 0.0
    %766 = vmatpush1.msra.mxu0 %v82
    %767 = vmatprep.subr.mxu0 0.0
    %768 = vmatpush1.msra.mxu0 %v83
    %769 = vmatprep.subr.mxu0 0.0
    %770 = vmatpush1.msra.mxu0 %v84
    %771 = vmatprep.subr.mxu0 0.0
    %772 = vmatpush1.msra.mxu0 %v85
    %773 = vmatprep.subr.mxu0 0.0
    %774 = vmatpush1.msra.mxu0 0.0
    %775 = vmatprep.subr.mxu0 0.0
    %776 = vmatpush1.msra.mxu0 0.0
    %777 = vmatprep.subr.mxu0 0.0
    %778 = vmatpush1.msra.mxu0 0.0
    %779 = vmatprep.subr.mxu0 0.0
    %780 = vmatpush1.msra.mxu0 0.0
    %781 = vmatprep.subr.mxu0 0.0
    %782 = vmatpush1.msra.mxu0 0.0
    %783 = vmatprep.subr.mxu0 0.0
    %784 = vmatpush1.msra.mxu0 0.0
    %785 = vmatprep.subr.mxu0 0.0
    %786 = vmatpush1.msra.mxu0 0.0
    %787 = vmatprep.subr.mxu0 0.0
    %788 = vmatpush1.msra.mxu0 0.0
    %789 = vmatprep.subr.mxu0 0.0
    %790 = vmatpush1.msra.mxu0 0.0
    %791 = vmatprep.subr.mxu0 0.0
    %792 = vmatpush1.msra.mxu0 0.0
    %793 = vmatprep.subr.mxu0 0.0
    %794 = vmatpush1.msra.mxu0 0.0
    %795 = vmatprep.subr.mxu0 0.0
    %796 = vmatpush1.msra.mxu0 0.0
    %797 = vmatprep.subr.mxu0 0.0
    %798 = vmatpush1.msra.mxu0 0.0
    %799 = vmatprep.subr.mxu0 0.0
    %800 = vmatpush1.msra.mxu0 0.0
    %801 = vmatprep.subr.mxu0 0.0
    %802 = vmatpush1.msra.mxu0 0.0
    %803 = vmatprep.subr.mxu0 0.0
    %804 = vmatpush1.msra.mxu0 0.0
    %805 = vmatprep.subr.mxu0 0.0
    %806 = vmatpush1.msra.mxu0 0.0
    %807 = vmatprep.subr.mxu0 0.0
    %808 = vmatpush1.msra.mxu0 0.0
    %809 = vmatprep.subr.mxu0 0.0
    %810 = vmatpush1.msra.mxu0 0.0
    %811 = vmatprep.subr.mxu0 0.0
    %812 = vmatpush1.msra.mxu0 0.0
    %813 = vmatprep.subr.mxu0 0.0
    %814 = vmatpush1.msra.mxu0 0.0
    %815 = vmatprep.subr.mxu0 0.0
    %816 = vmatpush1.msra.mxu0 0.0
    %817 = vmatprep.subr.mxu0 0.0
    %818 = vmatpush1.msra.mxu0 0.0
    %819 = vmatprep.subr.mxu0 0.0
    %820 = vmatpush1.msra.mxu0 0.0
    %821 = vmatprep.subr.mxu0 0.0
    %822 = vmatpush1.msra.mxu0 0.0
    %823 = vmatprep.subr.mxu0 0.0
    %824 = vmatpush1.msra.mxu0 0.0
    %825 = vmatprep.subr.mxu0 0.0
    %826 = vmatpush1.msra.mxu0 0.0
    %827 = vmatprep.subr.mxu0 0.0
    %828 = vmatpush1.msra.mxu0 0.0
    %829 = vmatprep.mubr.f32.mxu0 0.0
    %830 = vmatmul.mubr.f32.gmra.mrb[0].mxu0 %v763
    %v831 = vpop.f32.mrb[0].mxu0
    %v832 = vadd.f32 0.0, %v831
    %v833 = vpop.f32.mrb[0].mxu0
    %834 = vdwg.mxu0
    %v835 = vadd.f32 %v832, %v98
    %836 = vrot.lane.b32.xlu0 %v100, 80
    %v837 = vpop.permute.xlu0 %836
    %v839 = vsub.f32 %v835, %v837
    %840 = vrot.lane.b32.xlu0 %v103, 48
    %v841 = vpop.permute.xlu0 %840
    %v843 = vadd.f32 %v832, %v841
    %v844 = vmul.f32 %v761, %v761
    %v845 = vsub.f32 1.0, %v844
    %847 = vrot.lane.b32.xlu0 %v843, 112
    %v848 = vpop.permute.xlu0 %847
    %v850 = vmul.f32 %v845, %v848
    %v851 = vsub.f32 %v760, %v850
    %v852 = vsub.f32 %v760, %v851
    %854 = vrot.lane.b32.xlu0 %v835, 16
    %v855 = vpop.permute.xlu0 %854
    %858 = vrot.lane.b32.xlu0 %v760, 32
    %v859 = vpop.permute.xlu0 %858
    %862 = vrot.lane.b32.xlu0 %v851, 64
    %v863 = vpop.permute.xlu0 %862
    %866 = vrot.lane.b32.xlu0 %v852, 96
    %v867 = vpop.permute.xlu0 %866
    %v869 = vsel %vm293, %v839, %v855
    %v870 = vsel %vm110, %v869, %v859
    %v871 = vsel %vm296, %v870, %v863
    %v872 = vsel %vm298, %v871, %v867
    %s873 = scalar_lea.vmem [#allocation10], 24
    %874 = vst [vmem:[%s873] sm:$0xff] %v872
    %v875 = vtanh.pop %v851
    %v877 = vsel %vm110, %v875, 0
    %879 = vmatprep.subr.mxu0 0.0
    %880 = vmatpush1.msra.mxu0 %v78
    %881 = vmatprep.subr.mxu0 0.0
    %882 = vmatpush1.msra.mxu0 %v79
    %883 = vmatprep.subr.mxu0 0.0
    %884 = vmatpush1.msra.mxu0 %v80
    %885 = vmatprep.subr.mxu0 0.0
    %886 = vmatpush1.msra.mxu0 %v81
    %887 = vmatprep.subr.mxu0 0.0
    %888 = vmatpush1.msra.mxu0 0.0
    %889 = vmatprep.subr.mxu0 0.0
    %890 = vmatpush1.msra.mxu0 0.0
    %891 = vmatprep.subr.mxu0 0.0
    %892 = vmatpush1.msra.mxu0 0.0
    %893 = vmatprep.subr.mxu0 0.0
    %894 = vmatpush1.msra.mxu0 0.0
    %895 = vmatprep.subr.mxu0 0.0
    %896 = vmatpush1.msra.mxu0 0.0
    %897 = vmatprep.subr.mxu0 0.0
    %898 = vmatpush1.msra.mxu0 0.0
    %899 = vmatprep.subr.mxu0 0.0
    %900 = vmatpush1.msra.mxu0 0.0
    %901 = vmatprep.subr.mxu0 0.0
    %902 = vmatpush1.msra.mxu0 0.0
    %903 = vmatprep.subr.mxu0 0.0
    %904 = vmatpush1.msra.mxu0 0.0
    %905 = vmatprep.subr.mxu0 0.0
    %906 = vmatpush1.msra.mxu0 0.0
    %907 = vmatprep.subr.mxu0 0.0
    %908 = vmatpush1.msra.mxu0 0.0
    %909 = vmatprep.subr.mxu0 0.0
    %910 = vmatpush1.msra.mxu0 0.0
    %911 = vmatprep.subr.mxu0 0.0
    %912 = vmatpush1.msra.mxu0 0.0
    %913 = vmatprep.subr.mxu0 0.0
    %914 = vmatpush1.msra.mxu0 0.0
    %915 = vmatprep.subr.mxu0 0.0
    %916 = vmatpush1.msra.mxu0 0.0
    %917 = vmatprep.subr.mxu0 0.0
    %918 = vmatpush1.msra.mxu0 0.0
    %919 = vmatprep.subr.mxu0 0.0
    %920 = vmatpush1.msra.mxu0 0.0
    %921 = vmatprep.subr.mxu0 0.0
    %922 = vmatpush1.msra.mxu0 0.0
    %923 = vmatprep.subr.mxu0 0.0
    %924 = vmatpush1.msra.mxu0 0.0
    %925 = vmatprep.subr.mxu0 0.0
    %926 = vmatpush1.msra.mxu0 0.0
    %927 = vmatprep.subr.mxu0 0.0
    %928 = vmatpush1.msra.mxu0 0.0
    %929 = vmatprep.subr.mxu0 0.0
    %930 = vmatpush1.msra.mxu0 0.0
    %931 = vmatprep.subr.mxu0 0.0
    %932 = vmatpush1.msra.mxu0 0.0
    %933 = vmatprep.subr.mxu0 0.0
    %934 = vmatpush1.msra.mxu0 0.0
    %935 = vmatprep.subr.mxu0 0.0
    %936 = vmatpush1.msra.mxu0 0.0
    %937 = vmatprep.subr.mxu0 0.0
    %938 = vmatpush1.msra.mxu0 0.0
    %939 = vmatprep.subr.mxu0 0.0
    %940 = vmatpush1.msra.mxu0 0.0
    %941 = vmatprep.subr.mxu0 0.0
    %942 = vmatpush1.msra.mxu0 0.0
    %943 = vmatprep.mubr.f32.mxu0 0.0
    %944 = vmatmul.mubr.f32.gmra.mrb[0].mxu0 %v877
    %v945 = vpop.f32.mrb[0].mxu0
    %v946 = vadd.f32 0.0, %v945
    %v947 = vpop.f32.mrb[0].mxu0
    %948 = vdwg.mxu0
    %v949 = vmul.f32 %v851, 0.5
    %v950 = vadd.f32 %v949, %v946
    %v951 = vadd.f32 %v950, %v91
    %v952 = vtanh.pop %v951
    %v954 = vsel %vm110, %v952, 0
    %956 = vmatprep.subr.mxu0 0.0
    %957 = vmatpush1.msra.mxu0 %v82
    %958 = vmatprep.subr.mxu0 0.0
    %959 = vmatpush1.msra.mxu0 %v83
    %960 = vmatprep.subr.mxu0 0.0
    %961 = vmatpush1.msra.mxu0 %v84
    %962 = vmatprep.subr.mxu0 0.0
    %963 = vmatpush1.msra.mxu0 %v85
    %964 = vmatprep.subr.mxu0 0.0
    %965 = vmatpush1.msra.mxu0 0.0
    %966 = vmatprep.subr.mxu0 0.0
    %967 = vmatpush1.msra.mxu0 0.0
    %968 = vmatprep.subr.mxu0 0.0
    %969 = vmatpush1.msra.mxu0 0.0
    %970 = vmatprep.subr.mxu0 0.0
    %971 = vmatpush1.msra.mxu0 0.0
    %972 = vmatprep.subr.mxu0 0.0
    %973 = vmatpush1.msra.mxu0 0.0
    %974 = vmatprep.subr.mxu0 0.0
    %975 = vmatpush1.msra.mxu0 0.0
    %976 = vmatprep.subr.mxu0 0.0
    %977 = vmatpush1.msra.mxu0 0.0
    %978 = vmatprep.subr.mxu0 0.0
    %979 = vmatpush1.msra.mxu0 0.0
    %980 = vmatprep.subr.mxu0 0.0
    %981 = vmatpush1.msra.mxu0 0.0
    %982 = vmatprep.subr.mxu0 0.0
    %983 = vmatpush1.msra.mxu0 0.0
    %984 = vmatprep.subr.mxu0 0.0
    %985 = vmatpush1.msra.mxu0 0.0
    %986 = vmatprep.subr.mxu0 0.0
    %987 = vmatpush1.msra.mxu0 0.0
    %988 = vmatprep.subr.mxu0 0.0
    %989 = vmatpush1.msra.mxu0 0.0
    %990 = vmatprep.subr.mxu0 0.0
    %991 = vmatpush1.msra.mxu0 0.0
    %992 = vmatprep.subr.mxu0 0.0
    %993 = vmatpush1.msra.mxu0 0.0
    %994 = vmatprep.subr.mxu0 0.0
    %995 = vmatpush1.msra.mxu0 0.0
    %996 = vmatprep.subr.mxu0 0.0
    %997 = vmatpush1.msra.mxu0 0.0
    %998 = vmatprep.subr.mxu0 0.0
    %999 = vmatpush1.msra.mxu0 0.0
    %1000 = vmatprep.subr.mxu0 0.0
    %1001 = vmatpush1.msra.mxu0 0.0
    %1002 = vmatprep.subr.mxu0 0.0
    %1003 = vmatpush1.msra.mxu0 0.0
    %1004 = vmatprep.subr.mxu0 0.0
    %1005 = vmatpush1.msra.mxu0 0.0
    %1006 = vmatprep.subr.mxu0 0.0
    %1007 = vmatpush1.msra.mxu0 0.0
    %1008 = vmatprep.subr.mxu0 0.0
    %1009 = vmatpush1.msra.mxu0 0.0
    %1010 = vmatprep.subr.mxu0 0.0
    %1011 = vmatpush1.msra.mxu0 0.0
    %1012 = vmatprep.subr.mxu0 0.0
    %1013 = vmatpush1.msra.mxu0 0.0
    %1014 = vmatprep.subr.mxu0 0.0
    %1015 = vmatpush1.msra.mxu0 0.0
    %1016 = vmatprep.subr.mxu0 0.0
    %1017 = vmatpush1.msra.mxu0 0.0
    %1018 = vmatprep.subr.mxu0 0.0
    %1019 = vmatpush1.msra.mxu0 0.0
    %1020 = vmatprep.mubr.f32.mxu0 0.0
    %1021 = vmatmul.mubr.f32.gmra.mrb[0].mxu0 %v954
    %v1022 = vpop.f32.mrb[0].mxu0
    %v1023 = vadd.f32 0.0, %v1022
    %v1024 = vpop.f32.mrb[0].mxu0
    %1025 = vdwg.mxu0
    %v1026 = vadd.f32 %v1023, %v98
    %1027 = vrot.lane.b32.xlu0 %v100, 64
    %v1028 = vpop.permute.xlu0 %1027
    %v1030 = vsub.f32 %v1026, %v1028
    %1032 = vrot.lane.b32.xlu0 %v104, 16
    %v1033 = vpop.permute.xlu0 %1032
    %v1035 = vadd.f32 %v1023, %v1033
    %v1036 = vmul.f32 %v952, %v952
    %v1037 = vsub.f32 1.0, %v1036
    %1039 = vrot.lane.b32.xlu0 %v1035, 112
    %v1040 = vpop.permute.xlu0 %1039
    %v1042 = vmul.f32 %v1037, %v1040
    %v1043 = vsub.f32 %v951, %v1042
    %v1044 = vsub.f32 %v951, %v1043
    %1046 = vrot.lane.b32.xlu0 %v1026, 16
    %v1047 = vpop.permute.xlu0 %1046
    %1050 = vrot.lane.b32.xlu0 %v951, 32
    %v1051 = vpop.permute.xlu0 %1050
    %1054 = vrot.lane.b32.xlu0 %v1043, 64
    %v1055 = vpop.permute.xlu0 %1054
    %1058 = vrot.lane.b32.xlu0 %v1044, 96
    %v1059 = vpop.permute.xlu0 %1058
    %v1061 = vsel %vm293, %v1030, %v1047
    %v1062 = vsel %vm110, %v1061, %v1051
    %v1063 = vsel %vm296, %v1062, %v1055
    %v1064 = vsel %vm298, %v1063, %v1059
    %s1065 = scalar_lea.vmem [#allocation10], 32
    %1066 = vst [vmem:[%s1065] sm:$0xff] %v1064
    %v1067 = vtanh.pop %v1043
    %v1069 = vsel %vm110, %v1067, 0
    %1071 = vmatprep.subr.mxu0 0.0
    %1072 = vmatpush1.msra.mxu0 %v78
    %1073 = vmatprep.subr.mxu0 0.0
    %1074 = vmatpush1.msra.mxu0 %v79
    %1075 = vmatprep.subr.mxu0 0.0
    %1076 = vmatpush1.msra.mxu0 %v80
    %1077 = vmatprep.subr.mxu0 0.0
    %1078 = vmatpush1.msra.mxu0 %v81
    %1079 = vmatprep.subr.mxu0 0.0
    %1080 = vmatpush1.msra.mxu0 0.0
    %1081 = vmatprep.subr.mxu0 0.0
    %1082 = vmatpush1.msra.mxu0 0.0
    %1083 = vmatprep.subr.mxu0 0.0
    %1084 = vmatpush1.msra.mxu0 0.0
    %1085 = vmatprep.subr.mxu0 0.0
    %1086 = vmatpush1.msra.mxu0 0.0
    %1087 = vmatprep.subr.mxu0 0.0
    %1088 = vmatpush1.msra.mxu0 0.0
    %1089 = vmatprep.subr.mxu0 0.0
    %1090 = vmatpush1.msra.mxu0 0.0
    %1091 = vmatprep.subr.mxu0 0.0
    %1092 = vmatpush1.msra.mxu0 0.0
    %1093 = vmatprep.subr.mxu0 0.0
    %1094 = vmatpush1.msra.mxu0 0.0
    %1095 = vmatprep.subr.mxu0 0.0
    %1096 = vmatpush1.msra.mxu0 0.0
    %1097 = vmatprep.subr.mxu0 0.0
    %1098 = vmatpush1.msra.mxu0 0.0
    %1099 = vmatprep.subr.mxu0 0.0
    %1100 = vmatpush1.msra.mxu0 0.0
    %1101 = vmatprep.subr.mxu0 0.0
    %1102 = vmatpush1.msra.mxu0 0.0
    %1103 = vmatprep.subr.mxu0 0.0
    %1104 = vmatpush1.msra.mxu0 0.0
    %1105 = vmatprep.subr.mxu0 0.0
    %1106 = vmatpush1.msra.mxu0 0.0
    %1107 = vmatprep.subr.mxu0 0.0
    %1108 = vmatpush1.msra.mxu0 0.0
    %1109 = vmatprep.subr.mxu0 0.0
    %1110 = vmatpush1.msra.mxu0 0.0
    %1111 = vmatprep.subr.mxu0 0.0
    %1112 = vmatpush1.msra.mxu0 0.0
    %1113 = vmatprep.subr.mxu0 0.0
    %1114 = vmatpush1.msra.mxu0 0.0
    %1115 = vmatprep.subr.mxu0 0.0
    %1116 = vmatpush1.msra.mxu0 0.0
    %1117 = vmatprep.subr.mxu0 0.0
    %1118 = vmatpush1.msra.mxu0 0.0
    %1119 = vmatprep.subr.mxu0 0.0
    %1120 = vmatpush1.msra.mxu0 0.0
    %1121 = vmatprep.subr.mxu0 0.0
    %1122 = vmatpush1.msra.mxu0 0.0
    %1123 = vmatprep.subr.mxu0 0.0
    %1124 = vmatpush1.msra.mxu0 0.0
    %1125 = vmatprep.subr.mxu0 0.0
    %1126 = vmatpush1.msra.mxu0 0.0
    %1127 = vmatprep.subr.mxu0 0.0
    %1128 = vmatpush1.msra.mxu0 0.0
    %1129 = vmatprep.subr.mxu0 0.0
    %1130 = vmatpush1.msra.mxu0 0.0
    %1131 = vmatprep.subr.mxu0 0.0
    %1132 = vmatpush1.msra.mxu0 0.0
    %1133 = vmatprep.subr.mxu0 0.0
    %1134 = vmatpush1.msra.mxu0 0.0
    %1135 = vmatprep.mubr.f32.mxu0 0.0
    %1136 = vmatmul.mubr.f32.gmra.mrb[0].mxu0 %v1069
    %v1137 = vpop.f32.mrb[0].mxu0
    %v1138 = vadd.f32 0.0, %v1137
    %v1139 = vpop.f32.mrb[0].mxu0
    %1140 = vdwg.mxu0
    %v1141 = vmul.f32 %v1043, 0.5
    %v1142 = vadd.f32 %v1141, %v1138
    %v1143 = vadd.f32 %v1142, %v91
    %v1144 = vtanh.pop %v1143
    %v1146 = vsel %vm110, %v1144, 0
    %1148 = vmatprep.subr.mxu0 0.0
    %1149 = vmatpush1.msra.mxu0 %v82
    %1150 = vmatprep.subr.mxu0 0.0
    %1151 = vmatpush1.msra.mxu0 %v83
    %1152 = vmatprep.subr.mxu0 0.0
    %1153 = vmatpush1.msra.mxu0 %v84
    %1154 = vmatprep.subr.mxu0 0.0
    %1155 = vmatpush1.msra.mxu0 %v85
    %1156 = vmatprep.subr.mxu0 0.0
    %1157 = vmatpush1.msra.mxu0 0.0
    %1158 = vmatprep.subr.mxu0 0.0
    %1159 = vmatpush1.msra.mxu0 0.0
    %1160 = vmatprep.subr.mxu0 0.0
    %1161 = vmatpush1.msra.mxu0 0.0
    %1162 = vmatprep.subr.mxu0 0.0
    %1163 = vmatpush1.msra.mxu0 0.0
    %1164 = vmatprep.subr.mxu0 0.0
    %1165 = vmatpush1.msra.mxu0 0.0
    %1166 = vmatprep.subr.mxu0 0.0
    %1167 = vmatpush1.msra.mxu0 0.0
    %1168 = vmatprep.subr.mxu0 0.0
    %1169 = vmatpush1.msra.mxu0 0.0
    %1170 = vmatprep.subr.mxu0 0.0
    %1171 = vmatpush1.msra.mxu0 0.0
    %1172 = vmatprep.subr.mxu0 0.0
    %1173 = vmatpush1.msra.mxu0 0.0
    %1174 = vmatprep.subr.mxu0 0.0
    %1175 = vmatpush1.msra.mxu0 0.0
    %1176 = vmatprep.subr.mxu0 0.0
    %1177 = vmatpush1.msra.mxu0 0.0
    %1178 = vmatprep.subr.mxu0 0.0
    %1179 = vmatpush1.msra.mxu0 0.0
    %1180 = vmatprep.subr.mxu0 0.0
    %1181 = vmatpush1.msra.mxu0 0.0
    %1182 = vmatprep.subr.mxu0 0.0
    %1183 = vmatpush1.msra.mxu0 0.0
    %1184 = vmatprep.subr.mxu0 0.0
    %1185 = vmatpush1.msra.mxu0 0.0
    %1186 = vmatprep.subr.mxu0 0.0
    %1187 = vmatpush1.msra.mxu0 0.0
    %1188 = vmatprep.subr.mxu0 0.0
    %1189 = vmatpush1.msra.mxu0 0.0
    %1190 = vmatprep.subr.mxu0 0.0
    %1191 = vmatpush1.msra.mxu0 0.0
    %1192 = vmatprep.subr.mxu0 0.0
    %1193 = vmatpush1.msra.mxu0 0.0
    %1194 = vmatprep.subr.mxu0 0.0
    %1195 = vmatpush1.msra.mxu0 0.0
    %1196 = vmatprep.subr.mxu0 0.0
    %1197 = vmatpush1.msra.mxu0 0.0
    %1198 = vmatprep.subr.mxu0 0.0
    %1199 = vmatpush1.msra.mxu0 0.0
    %1200 = vmatprep.subr.mxu0 0.0
    %1201 = vmatpush1.msra.mxu0 0.0
    %1202 = vmatprep.subr.mxu0 0.0
    %1203 = vmatpush1.msra.mxu0 0.0
    %1204 = vmatprep.subr.mxu0 0.0
    %1205 = vmatpush1.msra.mxu0 0.0
    %1206 = vmatprep.subr.mxu0 0.0
    %1207 = vmatpush1.msra.mxu0 0.0
    %1208 = vmatprep.subr.mxu0 0.0
    %1209 = vmatpush1.msra.mxu0 0.0
    %1210 = vmatprep.subr.mxu0 0.0
    %1211 = vmatpush1.msra.mxu0 0.0
    %1212 = vmatprep.mubr.f32.mxu0 0.0
    %1213 = vmatmul.mubr.f32.gmra.mrb[0].mxu0 %v1146
    %v1214 = vpop.f32.mrb[0].mxu0
    %v1215 = vadd.f32 0.0, %v1214
    %v1216 = vpop.f32.mrb[0].mxu0
    %1217 = vdwg.mxu0
    %v1218 = vadd.f32 %v1215, %v98
    %1219 = vrot.lane.b32.xlu0 %v100, 48
    %v1220 = vpop.permute.xlu0 %1219
    %v1222 = vsub.f32 %v1218, %v1220
    %1223 = vrot.lane.b32.xlu0 %v104, 112
    %v1224 = vpop.permute.xlu0 %1223
    %v1226 = vadd.f32 %v1215, %v1224
    %v1227 = vmul.f32 %v1144, %v1144
    %v1228 = vsub.f32 1.0, %v1227
    %1230 = vrot.lane.b32.xlu0 %v1226, 112
    %v1231 = vpop.permute.xlu0 %1230
    %v1233 = vmul.f32 %v1228, %v1231
    %v1234 = vsub.f32 %v1143, %v1233
    %v1235 = vsub.f32 %v1143, %v1234
    %1237 = vrot.lane.b32.xlu0 %v1218, 16
    %v1238 = vpop.permute.xlu0 %1237
    %1241 = vrot.lane.b32.xlu0 %v1143, 32
    %v1242 = vpop.permute.xlu0 %1241
    %1245 = vrot.lane.b32.xlu0 %v1234, 64
    %v1246 = vpop.permute.xlu0 %1245
    %1249 = vrot.lane.b32.xlu0 %v1235, 96
    %v1250 = vpop.permute.xlu0 %1249
    %v1252 = vsel %vm293, %v1222, %v1238
    %v1253 = vsel %vm110, %v1252, %v1242
    %v1254 = vsel %vm296, %v1253, %v1246
    %v1255 = vsel %vm298, %v1254, %v1250
    %s1256 = scalar_lea.vmem [#allocation10], 40
    %1257 = vst [vmem:[%s1256] sm:$0xff] %v1255
    %v1258 = vtanh.pop %v1234
    %v1260 = vsel %vm110, %v1258, 0
    %1262 = vmatprep.subr.mxu0 0.0
    %1263 = vmatpush1.msra.mxu0 %v78
    %1264 = vmatprep.subr.mxu0 0.0
    %1265 = vmatpush1.msra.mxu0 %v79
    %1266 = vmatprep.subr.mxu0 0.0
    %1267 = vmatpush1.msra.mxu0 %v80
    %1268 = vmatprep.subr.mxu0 0.0
    %1269 = vmatpush1.msra.mxu0 %v81
    %1270 = vmatprep.subr.mxu0 0.0
    %1271 = vmatpush1.msra.mxu0 0.0
    %1272 = vmatprep.subr.mxu0 0.0
    %1273 = vmatpush1.msra.mxu0 0.0
    %1274 = vmatprep.subr.mxu0 0.0
    %1275 = vmatpush1.msra.mxu0 0.0
    %1276 = vmatprep.subr.mxu0 0.0
    %1277 = vmatpush1.msra.mxu0 0.0
    %1278 = vmatprep.subr.mxu0 0.0
    %1279 = vmatpush1.msra.mxu0 0.0
    %1280 = vmatprep.subr.mxu0 0.0
    %1281 = vmatpush1.msra.mxu0 0.0
    %1282 = vmatprep.subr.mxu0 0.0
    %1283 = vmatpush1.msra.mxu0 0.0
    %1284 = vmatprep.subr.mxu0 0.0
    %1285 = vmatpush1.msra.mxu0 0.0
    %1286 = vmatprep.subr.mxu0 0.0
    %1287 = vmatpush1.msra.mxu0 0.0
    %1288 = vmatprep.subr.mxu0 0.0
    %1289 = vmatpush1.msra.mxu0 0.0
    %1290 = vmatprep.subr.mxu0 0.0
    %1291 = vmatpush1.msra.mxu0 0.0
    %1292 = vmatprep.subr.mxu0 0.0
    %1293 = vmatpush1.msra.mxu0 0.0
    %1294 = vmatprep.subr.mxu0 0.0
    %1295 = vmatpush1.msra.mxu0 0.0
    %1296 = vmatprep.subr.mxu0 0.0
    %1297 = vmatpush1.msra.mxu0 0.0
    %1298 = vmatprep.subr.mxu0 0.0
    %1299 = vmatpush1.msra.mxu0 0.0
    %1300 = vmatprep.subr.mxu0 0.0
    %1301 = vmatpush1.msra.mxu0 0.0
    %1302 = vmatprep.subr.mxu0 0.0
    %1303 = vmatpush1.msra.mxu0 0.0
    %1304 = vmatprep.subr.mxu0 0.0
    %1305 = vmatpush1.msra.mxu0 0.0
    %1306 = vmatprep.subr.mxu0 0.0
    %1307 = vmatpush1.msra.mxu0 0.0
    %1308 = vmatprep.subr.mxu0 0.0
    %1309 = vmatpush1.msra.mxu0 0.0
    %1310 = vmatprep.subr.mxu0 0.0
    %1311 = vmatpush1.msra.mxu0 0.0
    %1312 = vmatprep.subr.mxu0 0.0
    %1313 = vmatpush1.msra.mxu0 0.0
    %1314 = vmatprep.subr.mxu0 0.0
    %1315 = vmatpush1.msra.mxu0 0.0
    %1316 = vmatprep.subr.mxu0 0.0
    %1317 = vmatpush1.msra.mxu0 0.0
    %1318 = vmatprep.subr.mxu0 0.0
    %1319 = vmatpush1.msra.mxu0 0.0
    %1320 = vmatprep.subr.mxu0 0.0
    %1321 = vmatpush1.msra.mxu0 0.0
    %1322 = vmatprep.subr.mxu0 0.0
    %1323 = vmatpush1.msra.mxu0 0.0
    %1324 = vmatprep.subr.mxu0 0.0
    %1325 = vmatpush1.msra.mxu0 0.0
    %1326 = vmatprep.mubr.f32.mxu0 0.0
    %1327 = vmatmul.mubr.f32.gmra.mrb[0].mxu0 %v1260
    %v1328 = vpop.f32.mrb[0].mxu0
    %v1329 = vadd.f32 0.0, %v1328
    %v1330 = vpop.f32.mrb[0].mxu0
    %1331 = vdwg.mxu0
    %v1332 = vmul.f32 %v1234, 0.5
    %v1333 = vadd.f32 %v1332, %v1329
    %v1334 = vadd.f32 %v1333, %v91
    %v1335 = vtanh.pop %v1334
    %v1337 = vsel %vm110, %v1335, 0
    %1339 = vmatprep.subr.mxu0 0.0
    %1340 = vmatpush1.msra.mxu0 %v82
    %1341 = vmatprep.subr.mxu0 0.0
    %1342 = vmatpush1.msra.mxu0 %v83
    %1343 = vmatprep.subr.mxu0 0.0
    %1344 = vmatpush1.msra.mxu0 %v84
    %1345 = vmatprep.subr.mxu0 0.0
    %1346 = vmatpush1.msra.mxu0 %v85
    %1347 = vmatprep.subr.mxu0 0.0
    %1348 = vmatpush1.msra.mxu0 0.0
    %1349 = vmatprep.subr.mxu0 0.0
    %1350 = vmatpush1.msra.mxu0 0.0
    %1351 = vmatprep.subr.mxu0 0.0
    %1352 = vmatpush1.msra.mxu0 0.0
    %1353 = vmatprep.subr.mxu0 0.0
    %1354 = vmatpush1.msra.mxu0 0.0
    %1355 = vmatprep.subr.mxu0 0.0
    %1356 = vmatpush1.msra.mxu0 0.0
    %1357 = vmatprep.subr.mxu0 0.0
    %1358 = vmatpush1.msra.mxu0 0.0
    %1359 = vmatprep.subr.mxu0 0.0
    %1360 = vmatpush1.msra.mxu0 0.0
    %1361 = vmatprep.subr.mxu0 0.0
    %1362 = vmatpush1.msra.mxu0 0.0
    %1363 = vmatprep.subr.mxu0 0.0
    %1364 = vmatpush1.msra.mxu0 0.0
    %1365 = vmatprep.subr.mxu0 0.0
    %1366 = vmatpush1.msra.mxu0 0.0
    %1367 = vmatprep.subr.mxu0 0.0
    %1368 = vmatpush1.msra.mxu0 0.0
    %1369 = vmatprep.subr.mxu0 0.0
    %1370 = vmatpush1.msra.mxu0 0.0
    %1371 = vmatprep.subr.mxu0 0.0
    %1372 = vmatpush1.msra.mxu0 0.0
    %1373 = vmatprep.subr.mxu0 0.0
    %1374 = vmatpush1.msra.mxu0 0.0
    %1375 = vmatprep.subr.mxu0 0.0
    %1376 = vmatpush1.msra.mxu0 0.0
    %1377 = vmatprep.subr.mxu0 0.0
    %1378 = vmatpush1.msra.mxu0 0.0
    %1379 = vmatprep.subr.mxu0 0.0
    %1380 = vmatpush1.msra.mxu0 0.0
    %1381 = vmatprep.subr.mxu0 0.0
    %1382 = vmatpush1.msra.mxu0 0.0
    %1383 = vmatprep.subr.mxu0 0.0
    %1384 = vmatpush1.msra.mxu0 0.0
    %1385 = vmatprep.subr.mxu0 0.0
    %1386 = vmatpush1.msra.mxu0 0.0
    %1387 = vmatprep.subr.mxu0 0.0
    %1388 = vmatpush1.msra.mxu0 0.0
    %1389 = vmatprep.subr.mxu0 0.0
    %1390 = vmatpush1.msra.mxu0 0.0
    %1391 = vmatprep.subr.mxu0 0.0
    %1392 = vmatpush1.msra.mxu0 0.0
    %1393 = vmatprep.subr.mxu0 0.0
    %1394 = vmatpush1.msra.mxu0 0.0
    %1395 = vmatprep.subr.mxu0 0.0
    %1396 = vmatpush1.msra.mxu0 0.0
    %1397 = vmatprep.subr.mxu0 0.0
    %1398 = vmatpush1.msra.mxu0 0.0
    %1399 = vmatprep.subr.mxu0 0.0
    %1400 = vmatpush1.msra.mxu0 0.0
    %1401 = vmatprep.subr.mxu0 0.0
    %1402 = vmatpush1.msra.mxu0 0.0
    %1403 = vmatprep.mubr.f32.mxu0 0.0
    %1404 = vmatmul.mubr.f32.gmra.mrb[0].mxu0 %v1337
    %v1405 = vpop.f32.mrb[0].mxu0
    %v1406 = vadd.f32 0.0, %v1405
    %v1407 = vpop.f32.mrb[0].mxu0
    %1408 = vdwg.mxu0
    %v1409 = vadd.f32 %v1406, %v98
    %1410 = vrot.lane.b32.xlu0 %v100, 32
    %v1411 = vpop.permute.xlu0 %1410
    %v1413 = vsub.f32 %v1409, %v1411
    %1414 = vrot.lane.b32.xlu0 %v104, 80
    %v1415 = vpop.permute.xlu0 %1414
    %v1417 = vadd.f32 %v1406, %v1415
    %v1418 = vmul.f32 %v1335, %v1335
    %v1419 = vsub.f32 1.0, %v1418
    %1421 = vrot.lane.b32.xlu0 %v1417, 112
    %v1422 = vpop.permute.xlu0 %1421
    %v1424 = vmul.f32 %v1419, %v1422
    %v1425 = vsub.f32 %v1334, %v1424
    %v1426 = vsub.f32 %v1334, %v1425
    %1428 = vrot.lane.b32.xlu0 %v1409, 16
    %v1429 = vpop.permute.xlu0 %1428
    %1432 = vrot.lane.b32.xlu0 %v1334, 32
    %v1433 = vpop.permute.xlu0 %1432
    %1436 = vrot.lane.b32.xlu0 %v1425, 64
    %v1437 = vpop.permute.xlu0 %1436
    %1440 = vrot.lane.b32.xlu0 %v1426, 96
    %v1441 = vpop.permute.xlu0 %1440
    %v1443 = vsel %vm293, %v1413, %v1429
    %v1444 = vsel %vm110, %v1443, %v1433
    %v1445 = vsel %vm296, %v1444, %v1437
    %v1446 = vsel %vm298, %v1445, %v1441
    %s1447 = scalar_lea.vmem [#allocation10], 48
    %1448 = vst [vmem:[%s1447] sm:$0xff] %v1446
    %v1449 = vtanh.pop %v1425
    %v1451 = vsel %vm110, %v1449, 0
    %1453 = vmatprep.subr.mxu0 0.0
    %1454 = vmatpush1.msra.mxu0 %v78
    %1455 = vmatprep.subr.mxu0 0.0
    %1456 = vmatpush1.msra.mxu0 %v79
    %1457 = vmatprep.subr.mxu0 0.0
    %1458 = vmatpush1.msra.mxu0 %v80
    %1459 = vmatprep.subr.mxu0 0.0
    %1460 = vmatpush1.msra.mxu0 %v81
    %1461 = vmatprep.subr.mxu0 0.0
    %1462 = vmatpush1.msra.mxu0 0.0
    %1463 = vmatprep.subr.mxu0 0.0
    %1464 = vmatpush1.msra.mxu0 0.0
    %1465 = vmatprep.subr.mxu0 0.0
    %1466 = vmatpush1.msra.mxu0 0.0
    %1467 = vmatprep.subr.mxu0 0.0
    %1468 = vmatpush1.msra.mxu0 0.0
    %1469 = vmatprep.subr.mxu0 0.0
    %1470 = vmatpush1.msra.mxu0 0.0
    %1471 = vmatprep.subr.mxu0 0.0
    %1472 = vmatpush1.msra.mxu0 0.0
    %1473 = vmatprep.subr.mxu0 0.0
    %1474 = vmatpush1.msra.mxu0 0.0
    %1475 = vmatprep.subr.mxu0 0.0
    %1476 = vmatpush1.msra.mxu0 0.0
    %1477 = vmatprep.subr.mxu0 0.0
    %1478 = vmatpush1.msra.mxu0 0.0
    %1479 = vmatprep.subr.mxu0 0.0
    %1480 = vmatpush1.msra.mxu0 0.0
    %1481 = vmatprep.subr.mxu0 0.0
    %1482 = vmatpush1.msra.mxu0 0.0
    %1483 = vmatprep.subr.mxu0 0.0
    %1484 = vmatpush1.msra.mxu0 0.0
    %1485 = vmatprep.subr.mxu0 0.0
    %1486 = vmatpush1.msra.mxu0 0.0
    %1487 = vmatprep.subr.mxu0 0.0
    %1488 = vmatpush1.msra.mxu0 0.0
    %1489 = vmatprep.subr.mxu0 0.0
    %1490 = vmatpush1.msra.mxu0 0.0
    %1491 = vmatprep.subr.mxu0 0.0
    %1492 = vmatpush1.msra.mxu0 0.0
    %1493 = vmatprep.subr.mxu0 0.0
    %1494 = vmatpush1.msra.mxu0 0.0
    %1495 = vmatprep.subr.mxu0 0.0
    %1496 = vmatpush1.msra.mxu0 0.0
    %1497 = vmatprep.subr.mxu0 0.0
    %1498 = vmatpush1.msra.mxu0 0.0
    %1499 = vmatprep.subr.mxu0 0.0
    %1500 = vmatpush1.msra.mxu0 0.0
    %1501 = vmatprep.subr.mxu0 0.0
    %1502 = vmatpush1.msra.mxu0 0.0
    %1503 = vmatprep.subr.mxu0 0.0
    %1504 = vmatpush1.msra.mxu0 0.0
    %1505 = vmatprep.subr.mxu0 0.0
    %1506 = vmatpush1.msra.mxu0 0.0
    %1507 = vmatprep.subr.mxu0 0.0
    %1508 = vmatpush1.msra.mxu0 0.0
    %1509 = vmatprep.subr.mxu0 0.0
    %1510 = vmatpush1.msra.mxu0 0.0
    %1511 = vmatprep.subr.mxu0 0.0
    %1512 = vmatpush1.msra.mxu0 0.0
    %1513 = vmatprep.subr.mxu0 0.0
    %1514 = vmatpush1.msra.mxu0 0.0
    %1515 = vmatprep.subr.mxu0 0.0
    %1516 = vmatpush1.msra.mxu0 0.0
    %1517 = vmatprep.mubr.f32.mxu0 0.0
    %1518 = vmatmul.mubr.f32.gmra.mrb[0].mxu0 %v1451
    %v1519 = vpop.f32.mrb[0].mxu0
    %v1520 = vadd.f32 0.0, %v1519
    %v1521 = vpop.f32.mrb[0].mxu0
    %1522 = vdwg.mxu0
    %v1523 = vmul.f32 %v1425, 0.5
    %v1524 = vadd.f32 %v1523, %v1520
    %v1525 = vadd.f32 %v1524, %v91
    %v1526 = vtanh.pop %v1525
    %v1528 = vsel %vm110, %v1526, 0
    %1530 = vmatprep.subr.mxu0 0.0
    %1531 = vmatpush1.msra.mxu0 %v82
    %1532 = vmatprep.subr.mxu0 0.0
    %1533 = vmatpush1.msra.mxu0 %v83
    %1534 = vmatprep.subr.mxu0 0.0
    %1535 = vmatpush1.msra.mxu0 %v84
    %1536 = vmatprep.subr.mxu0 0.0
    %1537 = vmatpush1.msra.mxu0 %v85
    %1538 = vmatprep.subr.mxu0 0.0
    %1539 = vmatpush1.msra.mxu0 0.0
    %1540 = vmatprep.subr.mxu0 0.0
    %1541 = vmatpush1.msra.mxu0 0.0
    %1542 = vmatprep.subr.mxu0 0.0
    %1543 = vmatpush1.msra.mxu0 0.0
    %1544 = vmatprep.subr.mxu0 0.0
    %1545 = vmatpush1.msra.mxu0 0.0
    %1546 = vmatprep.subr.mxu0 0.0
    %1547 = vmatpush1.msra.mxu0 0.0
    %1548 = vmatprep.subr.mxu0 0.0
    %1549 = vmatpush1.msra.mxu0 0.0
    %1550 = vmatprep.subr.mxu0 0.0
    %1551 = vmatpush1.msra.mxu0 0.0
    %1552 = vmatprep.subr.mxu0 0.0
    %1553 = vmatpush1.msra.mxu0 0.0
    %1554 = vmatprep.subr.mxu0 0.0
    %1555 = vmatpush1.msra.mxu0 0.0
    %1556 = vmatprep.subr.mxu0 0.0
    %1557 = vmatpush1.msra.mxu0 0.0
    %1558 = vmatprep.subr.mxu0 0.0
    %1559 = vmatpush1.msra.mxu0 0.0
    %1560 = vmatprep.subr.mxu0 0.0
    %1561 = vmatpush1.msra.mxu0 0.0
    %1562 = vmatprep.subr.mxu0 0.0
    %1563 = vmatpush1.msra.mxu0 0.0
    %1564 = vmatprep.subr.mxu0 0.0
    %1565 = vmatpush1.msra.mxu0 0.0
    %1566 = vmatprep.subr.mxu0 0.0
    %1567 = vmatpush1.msra.mxu0 0.0
    %1568 = vmatprep.subr.mxu0 0.0
    %1569 = vmatpush1.msra.mxu0 0.0
    %1570 = vmatprep.subr.mxu0 0.0
    %1571 = vmatpush1.msra.mxu0 0.0
    %1572 = vmatprep.subr.mxu0 0.0
    %1573 = vmatpush1.msra.mxu0 0.0
    %1574 = vmatprep.subr.mxu0 0.0
    %1575 = vmatpush1.msra.mxu0 0.0
    %1576 = vmatprep.subr.mxu0 0.0
    %1577 = vmatpush1.msra.mxu0 0.0
    %1578 = vmatprep.subr.mxu0 0.0
    %1579 = vmatpush1.msra.mxu0 0.0
    %1580 = vmatprep.subr.mxu0 0.0
    %1581 = vmatpush1.msra.mxu0 0.0
    %1582 = vmatprep.subr.mxu0 0.0
    %1583 = vmatpush1.msra.mxu0 0.0
    %1584 = vmatprep.subr.mxu0 0.0
    %1585 = vmatpush1.msra.mxu0 0.0
    %1586 = vmatprep.subr.mxu0 0.0
    %1587 = vmatpush1.msra.mxu0 0.0
    %1588 = vmatprep.subr.mxu0 0.0
    %1589 = vmatpush1.msra.mxu0 0.0
    %1590 = vmatprep.subr.mxu0 0.0
    %1591 = vmatpush1.msra.mxu0 0.0
    %1592 = vmatprep.subr.mxu0 0.0
    %1593 = vmatpush1.msra.mxu0 0.0
    %1594 = vmatprep.mubr.f32.mxu0 0.0
    %1595 = vmatmul.mubr.f32.gmra.mrb[0].mxu0 %v1528
    %v1596 = vpop.f32.mrb[0].mxu0
    %v1597 = vadd.f32 0.0, %v1596
    %v1598 = vpop.f32.mrb[0].mxu0
    %1599 = vdwg.mxu0
    %v1600 = vadd.f32 %v1597, %v98
    %1601 = vrot.lane.b32.xlu0 %v100, 16
    %v1602 = vpop.permute.xlu0 %1601
    %v1604 = vsub.f32 %v1600, %v1602
    %1605 = vrot.lane.b32.xlu0 %v104, 48
    %v1606 = vpop.permute.xlu0 %1605
    %v1608 = vadd.f32 %v1597, %v1606
    %v1609 = vmul.f32 %v1526, %v1526
    %v1610 = vsub.f32 1.0, %v1609
    %1612 = vrot.lane.b32.xlu0 %v1608, 112
    %v1613 = vpop.permute.xlu0 %1612
    %v1615 = vmul.f32 %v1610, %v1613
    %v1616 = vsub.f32 %v1525, %v1615
    %v1617 = vsub.f32 %v1525, %v1616
    %1619 = vrot.lane.b32.xlu0 %v1600, 16
    %v1620 = vpop.permute.xlu0 %1619
    %1623 = vrot.lane.b32.xlu0 %v1525, 32
    %v1624 = vpop.permute.xlu0 %1623
    %1627 = vrot.lane.b32.xlu0 %v1616, 64
    %v1628 = vpop.permute.xlu0 %1627
    %1631 = vrot.lane.b32.xlu0 %v1617, 96
    %v1632 = vpop.permute.xlu0 %1631
    %v1634 = vsel %vm293, %v1604, %v1620
    %v1635 = vsel %vm110, %v1634, %v1624
    %v1636 = vsel %vm296, %v1635, %v1628
    %v1637 = vsel %vm298, %v1636, %v1632
    %s1638 = scalar_lea.vmem [#allocation10], 56
    %1639 = vst [vmem:[%s1638] sm:$0xff] %v1637
    %v1640 = vtanh.pop %v1616
    %v1642 = vsel %vm110, %v1640, 0
    %1644 = vmatprep.subr.mxu0 0.0
    %1645 = vmatpush1.msra.mxu0 %v78
    %1646 = vmatprep.subr.mxu0 0.0
    %1647 = vmatpush1.msra.mxu0 %v79
    %1648 = vmatprep.subr.mxu0 0.0
    %1649 = vmatpush1.msra.mxu0 %v80
    %1650 = vmatprep.subr.mxu0 0.0
    %1651 = vmatpush1.msra.mxu0 %v81
    %1652 = vmatprep.subr.mxu0 0.0
    %1653 = vmatpush1.msra.mxu0 0.0
    %1654 = vmatprep.subr.mxu0 0.0
    %1655 = vmatpush1.msra.mxu0 0.0
    %1656 = vmatprep.subr.mxu0 0.0
    %1657 = vmatpush1.msra.mxu0 0.0
    %1658 = vmatprep.subr.mxu0 0.0
    %1659 = vmatpush1.msra.mxu0 0.0
    %1660 = vmatprep.subr.mxu0 0.0
    %1661 = vmatpush1.msra.mxu0 0.0
    %1662 = vmatprep.subr.mxu0 0.0
    %1663 = vmatpush1.msra.mxu0 0.0
    %1664 = vmatprep.subr.mxu0 0.0
    %1665 = vmatpush1.msra.mxu0 0.0
    %1666 = vmatprep.subr.mxu0 0.0
    %1667 = vmatpush1.msra.mxu0 0.0
    %1668 = vmatprep.subr.mxu0 0.0
    %1669 = vmatpush1.msra.mxu0 0.0
    %1670 = vmatprep.subr.mxu0 0.0
    %1671 = vmatpush1.msra.mxu0 0.0
    %1672 = vmatprep.subr.mxu0 0.0
    %1673 = vmatpush1.msra.mxu0 0.0
    %1674 = vmatprep.subr.mxu0 0.0
    %1675 = vmatpush1.msra.mxu0 0.0
    %1676 = vmatprep.subr.mxu0 0.0
    %1677 = vmatpush1.msra.mxu0 0.0
    %1678 = vmatprep.subr.mxu0 0.0
    %1679 = vmatpush1.msra.mxu0 0.0
    %1680 = vmatprep.subr.mxu0 0.0
    %1681 = vmatpush1.msra.mxu0 0.0
    %1682 = vmatprep.subr.mxu0 0.0
    %1683 = vmatpush1.msra.mxu0 0.0
    %1684 = vmatprep.subr.mxu0 0.0
    %1685 = vmatpush1.msra.mxu0 0.0
    %1686 = vmatprep.subr.mxu0 0.0
    %1687 = vmatpush1.msra.mxu0 0.0
    %1688 = vmatprep.subr.mxu0 0.0
    %1689 = vmatpush1.msra.mxu0 0.0
    %1690 = vmatprep.subr.mxu0 0.0
    %1691 = vmatpush1.msra.mxu0 0.0
    %1692 = vmatprep.subr.mxu0 0.0
    %1693 = vmatpush1.msra.mxu0 0.0
    %1694 = vmatprep.subr.mxu0 0.0
    %1695 = vmatpush1.msra.mxu0 0.0
    %1696 = vmatprep.subr.mxu0 0.0
    %1697 = vmatpush1.msra.mxu0 0.0
    %1698 = vmatprep.subr.mxu0 0.0
    %1699 = vmatpush1.msra.mxu0 0.0
    %1700 = vmatprep.subr.mxu0 0.0
    %1701 = vmatpush1.msra.mxu0 0.0
    %1702 = vmatprep.subr.mxu0 0.0
    %1703 = vmatpush1.msra.mxu0 0.0
    %1704 = vmatprep.subr.mxu0 0.0
    %1705 = vmatpush1.msra.mxu0 0.0
    %1706 = vmatprep.subr.mxu0 0.0
    %1707 = vmatpush1.msra.mxu0 0.0
    %1708 = vmatprep.mubr.f32.mxu0 0.0
    %1709 = vmatmul.mubr.f32.gmra.mrb[0].mxu0 %v1642
    %v1710 = vpop.f32.mrb[0].mxu0
    %v1711 = vadd.f32 0.0, %v1710
    %v1712 = vpop.f32.mrb[0].mxu0
    %1713 = vdwg.mxu0
    %v1714 = vmul.f32 %v1616, 0.5
    %v1715 = vadd.f32 %v1714, %v1711
    %v1716 = vadd.f32 %v1715, %v91
    %v1717 = vtanh.pop %v1716
    %v1719 = vsel %vm110, %v1717, 0
    %1721 = vmatprep.subr.mxu0 0.0
    %1722 = vmatpush1.msra.mxu0 %v82
    %1723 = vmatprep.subr.mxu0 0.0
    %1724 = vmatpush1.msra.mxu0 %v83
    %1725 = vmatprep.subr.mxu0 0.0
    %1726 = vmatpush1.msra.mxu0 %v84
    %1727 = vmatprep.subr.mxu0 0.0
    %1728 = vmatpush1.msra.mxu0 %v85
    %1729 = vmatprep.subr.mxu0 0.0
    %1730 = vmatpush1.msra.mxu0 0.0
    %1731 = vmatprep.subr.mxu0 0.0
    %1732 = vmatpush1.msra.mxu0 0.0
    %1733 = vmatprep.subr.mxu0 0.0
    %1734 = vmatpush1.msra.mxu0 0.0
    %1735 = vmatprep.subr.mxu0 0.0
    %1736 = vmatpush1.msra.mxu0 0.0
    %1737 = vmatprep.subr.mxu0 0.0
    %1738 = vmatpush1.msra.mxu0 0.0
    %1739 = vmatprep.subr.mxu0 0.0
    %1740 = vmatpush1.msra.mxu0 0.0
    %1741 = vmatprep.subr.mxu0 0.0
    %1742 = vmatpush1.msra.mxu0 0.0
    %1743 = vmatprep.subr.mxu0 0.0
    %1744 = vmatpush1.msra.mxu0 0.0
    %1745 = vmatprep.subr.mxu0 0.0
    %1746 = vmatpush1.msra.mxu0 0.0
    %1747 = vmatprep.subr.mxu0 0.0
    %1748 = vmatpush1.msra.mxu0 0.0
    %1749 = vmatprep.subr.mxu0 0.0
    %1750 = vmatpush1.msra.mxu0 0.0
    %1751 = vmatprep.subr.mxu0 0.0
    %1752 = vmatpush1.msra.mxu0 0.0
    %1753 = vmatprep.subr.mxu0 0.0
    %1754 = vmatpush1.msra.mxu0 0.0
    %1755 = vmatprep.subr.mxu0 0.0
    %1756 = vmatpush1.msra.mxu0 0.0
    %1757 = vmatprep.subr.mxu0 0.0
    %1758 = vmatpush1.msra.mxu0 0.0
    %1759 = vmatprep.subr.mxu0 0.0
    %1760 = vmatpush1.msra.mxu0 0.0
    %1761 = vmatprep.subr.mxu0 0.0
    %1762 = vmatpush1.msra.mxu0 0.0
    %1763 = vmatprep.subr.mxu0 0.0
    %1764 = vmatpush1.msra.mxu0 0.0
    %1765 = vmatprep.subr.mxu0 0.0
    %1766 = vmatpush1.msra.mxu0 0.0
    %1767 = vmatprep.subr.mxu0 0.0
    %1768 = vmatpush1.msra.mxu0 0.0
    %1769 = vmatprep.subr.mxu0 0.0
    %1770 = vmatpush1.msra.mxu0 0.0
    %1771 = vmatprep.subr.mxu0 0.0
    %1772 = vmatpush1.msra.mxu0 0.0
    %1773 = vmatprep.subr.mxu0 0.0
    %1774 = vmatpush1.msra.mxu0 0.0
    %1775 = vmatprep.subr.mxu0 0.0
    %1776 = vmatpush1.msra.mxu0 0.0
    %1777 = vmatprep.subr.mxu0 0.0
    %1778 = vmatpush1.msra.mxu0 0.0
    %1779 = vmatprep.subr.mxu0 0.0
    %1780 = vmatpush1.msra.mxu0 0.0
    %1781 = vmatprep.subr.mxu0 0.0
    %1782 = vmatpush1.msra.mxu0 0.0
    %1783 = vmatprep.subr.mxu0 0.0
    %1784 = vmatpush1.msra.mxu0 0.0
    %1785 = vmatprep.mubr.f32.mxu0 0.0
    %1786 = vmatmul.mubr.f32.gmra.mrb[0].mxu0 %v1719
    %v1787 = vpop.f32.mrb[0].mxu0
    %v1788 = vadd.f32 0.0, %v1787
    %v1789 = vpop.f32.mrb[0].mxu0
    %1790 = vdwg.mxu0
    %v1791 = vadd.f32 %v1788, %v98
    %v1792 = vsub.f32 %v1791, %v101
    %1794 = vrot.lane.b32.xlu0 %v105, 16
    %v1795 = vpop.permute.xlu0 %1794
    %v1797 = vadd.f32 %v1788, %v1795
    %v1798 = vmul.f32 %v1717, %v1717
    %v1799 = vsub.f32 1.0, %v1798
    %1801 = vrot.lane.b32.xlu0 %v1797, 112
    %v1802 = vpop.permute.xlu0 %1801
    %v1804 = vmul.f32 %v1799, %v1802
    %v1805 = vsub.f32 %v1716, %v1804
    %v1806 = vsub.f32 %v1716, %v1805
    %1808 = vrot.lane.b32.xlu0 %v1791, 16
    %v1809 = vpop.permute.xlu0 %1808
    %1812 = vrot.lane.b32.xlu0 %v1716, 32
    %v1813 = vpop.permute.xlu0 %1812
    %1816 = vrot.lane.b32.xlu0 %v1805, 64
    %v1817 = vpop.permute.xlu0 %1816
    %1820 = vrot.lane.b32.xlu0 %v1806, 96
    %v1821 = vpop.permute.xlu0 %1820
    %v1823 = vsel %vm293, %v1792, %v1809
    %v1824 = vsel %vm110, %v1823, %v1813
    %v1825 = vsel %vm296, %v1824, %v1817
    %v1826 = vsel %vm298, %v1825, %v1821
    %s1827 = scalar_lea.vmem [#allocation10], 64
    %1828 = vst [vmem:[%s1827] sm:$0xff] %v1826
    %v1829 = vtanh.pop %v1805
    %v1831 = vsel %vm110, %v1829, 0
    %1833 = vmatprep.subr.mxu0 0.0
    %1834 = vmatpush1.msra.mxu0 %v78
    %1835 = vmatprep.subr.mxu0 0.0
    %1836 = vmatpush1.msra.mxu0 %v79
    %1837 = vmatprep.subr.mxu0 0.0
    %1838 = vmatpush1.msra.mxu0 %v80
    %1839 = vmatprep.subr.mxu0 0.0
    %1840 = vmatpush1.msra.mxu0 %v81
    %1841 = vmatprep.subr.mxu0 0.0
    %1842 = vmatpush1.msra.mxu0 0.0
    %1843 = vmatprep.subr.mxu0 0.0
    %1844 = vmatpush1.msra.mxu0 0.0
    %1845 = vmatprep.subr.mxu0 0.0
    %1846 = vmatpush1.msra.mxu0 0.0
    %1847 = vmatprep.subr.mxu0 0.0
    %1848 = vmatpush1.msra.mxu0 0.0
    %1849 = vmatprep.subr.mxu0 0.0
    %1850 = vmatpush1.msra.mxu0 0.0
    %1851 = vmatprep.subr.mxu0 0.0
    %1852 = vmatpush1.msra.mxu0 0.0
    %1853 = vmatprep.subr.mxu0 0.0
    %1854 = vmatpush1.msra.mxu0 0.0
    %1855 = vmatprep.subr.mxu0 0.0
    %1856 = vmatpush1.msra.mxu0 0.0
    %1857 = vmatprep.subr.mxu0 0.0
    %1858 = vmatpush1.msra.mxu0 0.0
    %1859 = vmatprep.subr.mxu0 0.0
    %1860 = vmatpush1.msra.mxu0 0.0
    %1861 = vmatprep.subr.mxu0 0.0
    %1862 = vmatpush1.msra.mxu0 0.0
    %1863 = vmatprep.subr.mxu0 0.0
    %1864 = vmatpush1.msra.mxu0 0.0
    %1865 = vmatprep.subr.mxu0 0.0
    %1866 = vmatpush1.msra.mxu0 0.0
    %1867 = vmatprep.subr.mxu0 0.0
    %1868 = vmatpush1.msra.mxu0 0.0
    %1869 = vmatprep.subr.mxu0 0.0
    %1870 = vmatpush1.msra.mxu0 0.0
    %1871 = vmatprep.subr.mxu0 0.0
    %1872 = vmatpush1.msra.mxu0 0.0
    %1873 = vmatprep.subr.mxu0 0.0
    %1874 = vmatpush1.msra.mxu0 0.0
    %1875 = vmatprep.subr.mxu0 0.0
    %1876 = vmatpush1.msra.mxu0 0.0
    %1877 = vmatprep.subr.mxu0 0.0
    %1878 = vmatpush1.msra.mxu0 0.0
    %1879 = vmatprep.subr.mxu0 0.0
    %1880 = vmatpush1.msra.mxu0 0.0
    %1881 = vmatprep.subr.mxu0 0.0
    %1882 = vmatpush1.msra.mxu0 0.0
    %1883 = vmatprep.subr.mxu0 0.0
    %1884 = vmatpush1.msra.mxu0 0.0
    %1885 = vmatprep.subr.mxu0 0.0
    %1886 = vmatpush1.msra.mxu0 0.0
    %1887 = vmatprep.subr.mxu0 0.0
    %1888 = vmatpush1.msra.mxu0 0.0
    %1889 = vmatprep.subr.mxu0 0.0
    %1890 = vmatpush1.msra.mxu0 0.0
    %1891 = vmatprep.subr.mxu0 0.0
    %1892 = vmatpush1.msra.mxu0 0.0
    %1893 = vmatprep.subr.mxu0 0.0
    %1894 = vmatpush1.msra.mxu0 0.0
    %1895 = vmatprep.subr.mxu0 0.0
    %1896 = vmatpush1.msra.mxu0 0.0
    %1897 = vmatprep.mubr.f32.mxu0 0.0
    %1898 = vmatmul.mubr.f32.gmra.mrb[0].mxu0 %v1831
    %v1899 = vpop.f32.mrb[0].mxu0
    %v1900 = vadd.f32 0.0, %v1899
    %v1901 = vpop.f32.mrb[0].mxu0
    %1902 = vdwg.mxu0
    %v1903 = vmul.f32 %v1805, 0.5
    %v1904 = vadd.f32 %v1903, %v1900
    %v1905 = vadd.f32 %v1904, %v91
    %v1906 = vtanh.pop %v1905
    %v1908 = vsel %vm110, %v1906, 0
    %1910 = vmatprep.subr.mxu0 0.0
    %1911 = vmatpush1.msra.mxu0 %v82
    %1912 = vmatprep.subr.mxu0 0.0
    %1913 = vmatpush1.msra.mxu0 %v83
    %1914 = vmatprep.subr.mxu0 0.0
    %1915 = vmatpush1.msra.mxu0 %v84
    %1916 = vmatprep.subr.mxu0 0.0
    %1917 = vmatpush1.msra.mxu0 %v85
    %1918 = vmatprep.subr.mxu0 0.0
    %1919 = vmatpush1.msra.mxu0 0.0
    %1920 = vmatprep.subr.mxu0 0.0
    %1921 = vmatpush1.msra.mxu0 0.0
    %1922 = vmatprep.subr.mxu0 0.0
    %1923 = vmatpush1.msra.mxu0 0.0
    %1924 = vmatprep.subr.mxu0 0.0
    %1925 = vmatpush1.msra.mxu0 0.0
    %1926 = vmatprep.subr.mxu0 0.0
    %1927 = vmatpush1.msra.mxu0 0.0
    %1928 = vmatprep.subr.mxu0 0.0
    %1929 = vmatpush1.msra.mxu0 0.0
    %1930 = vmatprep.subr.mxu0 0.0
    %1931 = vmatpush1.msra.mxu0 0.0
    %1932 = vmatprep.subr.mxu0 0.0
    %1933 = vmatpush1.msra.mxu0 0.0
    %1934 = vmatprep.subr.mxu0 0.0
    %1935 = vmatpush1.msra.mxu0 0.0
    %1936 = vmatprep.subr.mxu0 0.0
    %1937 = vmatpush1.msra.mxu0 0.0
    %1938 = vmatprep.subr.mxu0 0.0
    %1939 = vmatpush1.msra.mxu0 0.0
    %1940 = vmatprep.subr.mxu0 0.0
    %1941 = vmatpush1.msra.mxu0 0.0
    %1942 = vmatprep.subr.mxu0 0.0
    %1943 = vmatpush1.msra.mxu0 0.0
    %1944 = vmatprep.subr.mxu0 0.0
    %1945 = vmatpush1.msra.mxu0 0.0
    %1946 = vmatprep.subr.mxu0 0.0
    %1947 = vmatpush1.msra.mxu0 0.0
    %1948 = vmatprep.subr.mxu0 0.0
    %1949 = vmatpush1.msra.mxu0 0.0
    %1950 = vmatprep.subr.mxu0 0.0
    %1951 = vmatpush1.msra.mxu0 0.0
    %1952 = vmatprep.subr.mxu0 0.0
    %1953 = vmatpush1.msra.mxu0 0.0
    %1954 = vmatprep.subr.mxu0 0.0
    %1955 = vmatpush1.msra.mxu0 0.0
    %1956 = vmatprep.subr.mxu0 0.0
    %1957 = vmatpush1.msra.mxu0 0.0
    %1958 = vmatprep.subr.mxu0 0.0
    %1959 = vmatpush1.msra.mxu0 0.0
    %1960 = vmatprep.subr.mxu0 0.0
    %1961 = vmatpush1.msra.mxu0 0.0
    %1962 = vmatprep.subr.mxu0 0.0
    %1963 = vmatpush1.msra.mxu0 0.0
    %1964 = vmatprep.subr.mxu0 0.0
    %1965 = vmatpush1.msra.mxu0 0.0
    %1966 = vmatprep.subr.mxu0 0.0
    %1967 = vmatpush1.msra.mxu0 0.0
    %1968 = vmatprep.subr.mxu0 0.0
    %1969 = vmatpush1.msra.mxu0 0.0
    %1970 = vmatprep.subr.mxu0 0.0
    %1971 = vmatpush1.msra.mxu0 0.0
    %1972 = vmatprep.subr.mxu0 0.0
    %1973 = vmatpush1.msra.mxu0 0.0
    %1974 = vmatprep.mubr.f32.mxu0 0.0
    %1975 = vmatmul.mubr.f32.gmra.mrb[0].mxu0 %v1908
    %v1976 = vpop.f32.mrb[0].mxu0
    %v1977 = vadd.f32 0.0, %v1976
    %v1978 = vpop.f32.mrb[0].mxu0
    %1979 = vdwg.mxu0
    %v1980 = vadd.f32 %v1977, %v98
    %1982 = vrot.lane.b32.xlu0 %v101, 112
    %v1983 = vpop.permute.xlu0 %1982
    %v1985 = vsub.f32 %v1980, %v1983
    %1986 = vrot.lane.b32.xlu0 %v105, 112
    %v1987 = vpop.permute.xlu0 %1986
    %v1989 = vadd.f32 %v1977, %v1987
    %v1990 = vmul.f32 %v1906, %v1906
    %v1991 = vsub.f32 1.0, %v1990
    %1993 = vrot.lane.b32.xlu0 %v1989, 112
    %v1994 = vpop.permute.xlu0 %1993
    %v1996 = vmul.f32 %v1991, %v1994
    %v1997 = vsub.f32 %v1905, %v1996
    %v1998 = vsub.f32 %v1905, %v1997
    %2000 = vrot.lane.b32.xlu0 %v1980, 16
    %v2001 = vpop.permute.xlu0 %2000
    %2004 = vrot.lane.b32.xlu0 %v1905, 32
    %v2005 = vpop.permute.xlu0 %2004
    %2008 = vrot.lane.b32.xlu0 %v1997, 64
    %v2009 = vpop.permute.xlu0 %2008
    %2012 = vrot.lane.b32.xlu0 %v1998, 96
    %v2013 = vpop.permute.xlu0 %2012
    %v2015 = vsel %vm293, %v1985, %v2001
    %v2016 = vsel %vm110, %v2015, %v2005
    %v2017 = vsel %vm296, %v2016, %v2009
    %v2018 = vsel %vm298, %v2017, %v2013
    %s2019 = scalar_lea.vmem [#allocation10], 72
    %2020 = vst [vmem:[%s2019] sm:$0xff] %v2018
    %v2021 = vtanh.pop %v1997
    %v2023 = vsel %vm110, %v2021, 0
    %2025 = vmatprep.subr.mxu0 0.0
    %2026 = vmatpush1.msra.mxu0 %v78
    %2027 = vmatprep.subr.mxu0 0.0
    %2028 = vmatpush1.msra.mxu0 %v79
    %2029 = vmatprep.subr.mxu0 0.0
    %2030 = vmatpush1.msra.mxu0 %v80
    %2031 = vmatprep.subr.mxu0 0.0
    %2032 = vmatpush1.msra.mxu0 %v81
    %2033 = vmatprep.subr.mxu0 0.0
    %2034 = vmatpush1.msra.mxu0 0.0
    %2035 = vmatprep.subr.mxu0 0.0
    %2036 = vmatpush1.msra.mxu0 0.0
    %2037 = vmatprep.subr.mxu0 0.0
    %2038 = vmatpush1.msra.mxu0 0.0
    %2039 = vmatprep.subr.mxu0 0.0
    %2040 = vmatpush1.msra.mxu0 0.0
    %2041 = vmatprep.subr.mxu0 0.0
    %2042 = vmatpush1.msra.mxu0 0.0
    %2043 = vmatprep.subr.mxu0 0.0
    %2044 = vmatpush1.msra.mxu0 0.0
    %2045 = vmatprep.subr.mxu0 0.0
    %2046 = vmatpush1.msra.mxu0 0.0
    %2047 = vmatprep.subr.mxu0 0.0
    %2048 = vmatpush1.msra.mxu0 0.0
    %2049 = vmatprep.subr.mxu0 0.0
    %2050 = vmatpush1.msra.mxu0 0.0
    %2051 = vmatprep.subr.mxu0 0.0
    %2052 = vmatpush1.msra.mxu0 0.0
    %2053 = vmatprep.subr.mxu0 0.0
    %2054 = vmatpush1.msra.mxu0 0.0
    %2055 = vmatprep.subr.mxu0 0.0
    %2056 = vmatpush1.msra.mxu0 0.0
    %2057 = vmatprep.subr.mxu0 0.0
    %2058 = vmatpush1.msra.mxu0 0.0
    %2059 = vmatprep.subr.mxu0 0.0
    %2060 = vmatpush1.msra.mxu0 0.0
    %2061 = vmatprep.subr.mxu0 0.0
    %2062 = vmatpush1.msra.mxu0 0.0
    %2063 = vmatprep.subr.mxu0 0.0
    %2064 = vmatpush1.msra.mxu0 0.0
    %2065 = vmatprep.subr.mxu0 0.0
    %2066 = vmatpush1.msra.mxu0 0.0
    %2067 = vmatprep.subr.mxu0 0.0
    %2068 = vmatpush1.msra.mxu0 0.0
    %2069 = vmatprep.subr.mxu0 0.0
    %2070 = vmatpush1.msra.mxu0 0.0
    %2071 = vmatprep.subr.mxu0 0.0
    %2072 = vmatpush1.msra.mxu0 0.0
    %2073 = vmatprep.subr.mxu0 0.0
    %2074 = vmatpush1.msra.mxu0 0.0
    %2075 = vmatprep.subr.mxu0 0.0
    %2076 = vmatpush1.msra.mxu0 0.0
    %2077 = vmatprep.subr.mxu0 0.0
    %2078 = vmatpush1.msra.mxu0 0.0
    %2079 = vmatprep.subr.mxu0 0.0
    %2080 = vmatpush1.msra.mxu0 0.0
    %2081 = vmatprep.subr.mxu0 0.0
    %2082 = vmatpush1.msra.mxu0 0.0
    %2083 = vmatprep.subr.mxu0 0.0
    %2084 = vmatpush1.msra.mxu0 0.0
    %2085 = vmatprep.subr.mxu0 0.0
    %2086 = vmatpush1.msra.mxu0 0.0
    %2087 = vmatprep.subr.mxu0 0.0
    %2088 = vmatpush1.msra.mxu0 0.0
    %2089 = vmatprep.mubr.f32.mxu0 0.0
    %2090 = vmatmul.mubr.f32.gmra.mrb[0].mxu0 %v2023
    %v2091 = vpop.f32.mrb[0].mxu0
    %v2092 = vadd.f32 0.0, %v2091
    %v2093 = vpop.f32.mrb[0].mxu0
    %2094 = vdwg.mxu0
    %v2095 = vmul.f32 %v1997, 0.5
    %v2096 = vadd.f32 %v2095, %v2092
    %v2097 = vadd.f32 %v2096, %v91
    %v2098 = vtanh.pop %v2097
    %v2100 = vsel %vm110, %v2098, 0
    %2102 = vmatprep.subr.mxu0 0.0
    %2103 = vmatpush1.msra.mxu0 %v82
    %2104 = vmatprep.subr.mxu0 0.0
    %2105 = vmatpush1.msra.mxu0 %v83
    %2106 = vmatprep.subr.mxu0 0.0
    %2107 = vmatpush1.msra.mxu0 %v84
    %2108 = vmatprep.subr.mxu0 0.0
    %2109 = vmatpush1.msra.mxu0 %v85
    %2110 = vmatprep.subr.mxu0 0.0
    %2111 = vmatpush1.msra.mxu0 0.0
    %2112 = vmatprep.subr.mxu0 0.0
    %2113 = vmatpush1.msra.mxu0 0.0
    %2114 = vmatprep.subr.mxu0 0.0
    %2115 = vmatpush1.msra.mxu0 0.0
    %2116 = vmatprep.subr.mxu0 0.0
    %2117 = vmatpush1.msra.mxu0 0.0
    %2118 = vmatprep.subr.mxu0 0.0
    %2119 = vmatpush1.msra.mxu0 0.0
    %2120 = vmatprep.subr.mxu0 0.0
    %2121 = vmatpush1.msra.mxu0 0.0
    %2122 = vmatprep.subr.mxu0 0.0
    %2123 = vmatpush1.msra.mxu0 0.0
    %2124 = vmatprep.subr.mxu0 0.0
    %2125 = vmatpush1.msra.mxu0 0.0
    %2126 = vmatprep.subr.mxu0 0.0
    %2127 = vmatpush1.msra.mxu0 0.0
    %2128 = vmatprep.subr.mxu0 0.0
    %2129 = vmatpush1.msra.mxu0 0.0
    %2130 = vmatprep.subr.mxu0 0.0
    %2131 = vmatpush1.msra.mxu0 0.0
    %2132 = vmatprep.subr.mxu0 0.0
    %2133 = vmatpush1.msra.mxu0 0.0
    %2134 = vmatprep.subr.mxu0 0.0
    %2135 = vmatpush1.msra.mxu0 0.0
    %2136 = vmatprep.subr.mxu0 0.0
    %2137 = vmatpush1.msra.mxu0 0.0
    %2138 = vmatprep.subr.mxu0 0.0
    %2139 = vmatpush1.msra.mxu0 0.0
    %2140 = vmatprep.subr.mxu0 0.0
    %2141 = vmatpush1.msra.mxu0 0.0
    %2142 = vmatprep.subr.mxu0 0.0
    %2143 = vmatpush1.msra.mxu0 0.0
    %2144 = vmatprep.subr.mxu0 0.0
    %2145 = vmatpush1.msra.mxu0 0.0
    %2146 = vmatprep.subr.mxu0 0.0
    %2147 = vmatpush1.msra.mxu0 0.0
    %2148 = vmatprep.subr.mxu0 0.0
    %2149 = vmatpush1.msra.mxu0 0.0
    %2150 = vmatprep.subr.mxu0 0.0
    %2151 = vmatpush1.msra.mxu0 0.0
    %2152 = vmatprep.subr.mxu0 0.0
    %2153 = vmatpush1.msra.mxu0 0.0
    %2154 = vmatprep.subr.mxu0 0.0
    %2155 = vmatpush1.msra.mxu0 0.0
    %2156 = vmatprep.subr.mxu0 0.0
    %2157 = vmatpush1.msra.mxu0 0.0
    %2158 = vmatprep.subr.mxu0 0.0
    %2159 = vmatpush1.msra.mxu0 0.0
    %2160 = vmatprep.subr.mxu0 0.0
    %2161 = vmatpush1.msra.mxu0 0.0
    %2162 = vmatprep.subr.mxu0 0.0
    %2163 = vmatpush1.msra.mxu0 0.0
    %2164 = vmatprep.subr.mxu0 0.0
    %2165 = vmatpush1.msra.mxu0 0.0
    %2166 = vmatprep.mubr.f32.mxu0 0.0
    %2167 = vmatmul.mubr.f32.gmra.mrb[0].mxu0 %v2100
    %v2168 = vpop.f32.mrb[0].mxu0
    %v2169 = vadd.f32 0.0, %v2168
    %v2170 = vpop.f32.mrb[0].mxu0
    %2171 = vdwg.mxu0
    %v2172 = vadd.f32 %v2169, %v98
    %2173 = vrot.lane.b32.xlu0 %v101, 96
    %v2174 = vpop.permute.xlu0 %2173
    %v2176 = vsub.f32 %v2172, %v2174
    %2177 = vrot.lane.b32.xlu0 %v105, 80
    %v2178 = vpop.permute.xlu0 %2177
    %v2180 = vadd.f32 %v2169, %v2178
    %v2181 = vmul.f32 %v2098, %v2098
    %v2182 = vsub.f32 1.0, %v2181
    %2184 = vrot.lane.b32.xlu0 %v2180, 112
    %v2185 = vpop.permute.xlu0 %2184
    %v2187 = vmul.f32 %v2182, %v2185
    %v2188 = vsub.f32 %v2097, %v2187
    %v2189 = vsub.f32 %v2097, %v2188
    %2191 = vrot.lane.b32.xlu0 %v2172, 16
    %v2192 = vpop.permute.xlu0 %2191
    %2195 = vrot.lane.b32.xlu0 %v2097, 32
    %v2196 = vpop.permute.xlu0 %2195
    %2199 = vrot.lane.b32.xlu0 %v2188, 64
    %v2200 = vpop.permute.xlu0 %2199
    %2203 = vrot.lane.b32.xlu0 %v2189, 96
    %v2204 = vpop.permute.xlu0 %2203
    %v2206 = vsel %vm293, %v2176, %v2192
    %v2207 = vsel %vm110, %v2206, %v2196
    %v2208 = vsel %vm296, %v2207, %v2200
    %v2209 = vsel %vm298, %v2208, %v2204
    %s2210 = scalar_lea.vmem [#allocation10], 80
    %2211 = vst [vmem:[%s2210] sm:$0xff] %v2209
    %v2212 = vtanh.pop %v2188
    %v2214 = vsel %vm110, %v2212, 0
    %2216 = vmatprep.subr.mxu0 0.0
    %2217 = vmatpush1.msra.mxu0 %v78
    %2218 = vmatprep.subr.mxu0 0.0
    %2219 = vmatpush1.msra.mxu0 %v79
    %2220 = vmatprep.subr.mxu0 0.0
    %2221 = vmatpush1.msra.mxu0 %v80
    %2222 = vmatprep.subr.mxu0 0.0
    %2223 = vmatpush1.msra.mxu0 %v81
    %2224 = vmatprep.subr.mxu0 0.0
    %2225 = vmatpush1.msra.mxu0 0.0
    %2226 = vmatprep.subr.mxu0 0.0
    %2227 = vmatpush1.msra.mxu0 0.0
    %2228 = vmatprep.subr.mxu0 0.0
    %2229 = vmatpush1.msra.mxu0 0.0
    %2230 = vmatprep.subr.mxu0 0.0
    %2231 = vmatpush1.msra.mxu0 0.0
    %2232 = vmatprep.subr.mxu0 0.0
    %2233 = vmatpush1.msra.mxu0 0.0
    %2234 = vmatprep.subr.mxu0 0.0
    %2235 = vmatpush1.msra.mxu0 0.0
    %2236 = vmatprep.subr.mxu0 0.0
    %2237 = vmatpush1.msra.mxu0 0.0
    %2238 = vmatprep.subr.mxu0 0.0
    %2239 = vmatpush1.msra.mxu0 0.0
    %2240 = vmatprep.subr.mxu0 0.0
    %2241 = vmatpush1.msra.mxu0 0.0
    %2242 = vmatprep.subr.mxu0 0.0
    %2243 = vmatpush1.msra.mxu0 0.0
    %2244 = vmatprep.subr.mxu0 0.0
    %2245 = vmatpush1.msra.mxu0 0.0
    %2246 = vmatprep.subr.mxu0 0.0
    %2247 = vmatpush1.msra.mxu0 0.0
    %2248 = vmatprep.subr.mxu0 0.0
    %2249 = vmatpush1.msra.mxu0 0.0
    %2250 = vmatprep.subr.mxu0 0.0
    %2251 = vmatpush1.msra.mxu0 0.0
    %2252 = vmatprep.subr.mxu0 0.0
    %2253 = vmatpush1.msra.mxu0 0.0
    %2254 = vmatprep.subr.mxu0 0.0
    %2255 = vmatpush1.msra.mxu0 0.0
    %2256 = vmatprep.subr.mxu0 0.0
    %2257 = vmatpush1.msra.mxu0 0.0
    %2258 = vmatprep.subr.mxu0 0.0
    %2259 = vmatpush1.msra.mxu0 0.0
    %2260 = vmatprep.subr.mxu0 0.0
    %2261 = vmatpush1.msra.mxu0 0.0
    %2262 = vmatprep.subr.mxu0 0.0
    %2263 = vmatpush1.msra.mxu0 0.0
    %2264 = vmatprep.subr.mxu0 0.0
    %2265 = vmatpush1.msra.mxu0 0.0
    %2266 = vmatprep.subr.mxu0 0.0
    %2267 = vmatpush1.msra.mxu0 0.0
    %2268 = vmatprep.subr.mxu0 0.0
    %2269 = vmatpush1.msra.mxu0 0.0
    %2270 = vmatprep.subr.mxu0 0.0
    %2271 = vmatpush1.msra.mxu0 0.0
    %2272 = vmatprep.subr.mxu0 0.0
    %2273 = vmatpush1.msra.mxu0 0.0
    %2274 = vmatprep.subr.mxu0 0.0
    %2275 = vmatpush1.msra.mxu0 0.0
    %2276 = vmatprep.subr.mxu0 0.0
    %2277 = vmatpush1.msra.mxu0 0.0
    %2278 = vmatprep.subr.mxu0 0.0
    %2279 = vmatpush1.msra.mxu0 0.0
    %2280 = vmatprep.mubr.f32.mxu0 0.0
    %2281 = vmatmul.mubr.f32.gmra.mrb[0].mxu0 %v2214
    %v2282 = vpop.f32.mrb[0].mxu0
    %v2283 = vadd.f32 0.0, %v2282
    %v2284 = vpop.f32.mrb[0].mxu0
    %2285 = vdwg.mxu0
    %v2286 = vmul.f32 %v2188, 0.5
    %v2287 = vadd.f32 %v2286, %v2283
    %v2288 = vadd.f32 %v2287, %v91
    %v2289 = vtanh.pop %v2288
    %v2291 = vsel %vm110, %v2289, 0
    %2293 = vmatprep.subr.mxu0 0.0
    %2294 = vmatpush1.msra.mxu0 %v82
    %2295 = vmatprep.subr.mxu0 0.0
    %2296 = vmatpush1.msra.mxu0 %v83
    %2297 = vmatprep.subr.mxu0 0.0
    %2298 = vmatpush1.msra.mxu0 %v84
    %2299 = vmatprep.subr.mxu0 0.0
    %2300 = vmatpush1.msra.mxu0 %v85
    %2301 = vmatprep.subr.mxu0 0.0
    %2302 = vmatpush1.msra.mxu0 0.0
    %2303 = vmatprep.subr.mxu0 0.0
    %2304 = vmatpush1.msra.mxu0 0.0
    %2305 = vmatprep.subr.mxu0 0.0
    %2306 = vmatpush1.msra.mxu0 0.0
    %2307 = vmatprep.subr.mxu0 0.0
    %2308 = vmatpush1.msra.mxu0 0.0
    %2309 = vmatprep.subr.mxu0 0.0
    %2310 = vmatpush1.msra.mxu0 0.0
    %2311 = vmatprep.subr.mxu0 0.0
    %2312 = vmatpush1.msra.mxu0 0.0
    %2313 = vmatprep.subr.mxu0 0.0
    %2314 = vmatpush1.msra.mxu0 0.0
    %2315 = vmatprep.subr.mxu0 0.0
    %2316 = vmatpush1.msra.mxu0 0.0
    %2317 = vmatprep.subr.mxu0 0.0
    %2318 = vmatpush1.msra.mxu0 0.0
    %2319 = vmatprep.subr.mxu0 0.0
    %2320 = vmatpush1.msra.mxu0 0.0
    %2321 = vmatprep.subr.mxu0 0.0
    %2322 = vmatpush1.msra.mxu0 0.0
    %2323 = vmatprep.subr.mxu0 0.0
    %2324 = vmatpush1.msra.mxu0 0.0
    %2325 = vmatprep.subr.mxu0 0.0
    %2326 = vmatpush1.msra.mxu0 0.0
    %2327 = vmatprep.subr.mxu0 0.0
    %2328 = vmatpush1.msra.mxu0 0.0
    %2329 = vmatprep.subr.mxu0 0.0
    %2330 = vmatpush1.msra.mxu0 0.0
    %2331 = vmatprep.subr.mxu0 0.0
    %2332 = vmatpush1.msra.mxu0 0.0
    %2333 = vmatprep.subr.mxu0 0.0
    %2334 = vmatpush1.msra.mxu0 0.0
    %2335 = vmatprep.subr.mxu0 0.0
    %2336 = vmatpush1.msra.mxu0 0.0
    %2337 = vmatprep.subr.mxu0 0.0
    %2338 = vmatpush1.msra.mxu0 0.0
    %2339 = vmatprep.subr.mxu0 0.0
    %2340 = vmatpush1.msra.mxu0 0.0
    %2341 = vmatprep.subr.mxu0 0.0
    %2342 = vmatpush1.msra.mxu0 0.0
    %2343 = vmatprep.subr.mxu0 0.0
    %2344 = vmatpush1.msra.mxu0 0.0
    %2345 = vmatprep.subr.mxu0 0.0
    %2346 = vmatpush1.msra.mxu0 0.0
    %2347 = vmatprep.subr.mxu0 0.0
    %2348 = vmatpush1.msra.mxu0 0.0
    %2349 = vmatprep.subr.mxu0 0.0
    %2350 = vmatpush1.msra.mxu0 0.0
    %2351 = vmatprep.subr.mxu0 0.0
    %2352 = vmatpush1.msra.mxu0 0.0
    %2353 = vmatprep.subr.mxu0 0.0
    %2354 = vmatpush1.msra.mxu0 0.0
    %2355 = vmatprep.subr.mxu0 0.0
    %2356 = vmatpush1.msra.mxu0 0.0
    %2357 = vmatprep.mubr.f32.mxu0 0.0
    %2358 = vmatmul.mubr.f32.gmra.mrb[0].mxu0 %v2291
    %v2359 = vpop.f32.mrb[0].mxu0
    %v2360 = vadd.f32 0.0, %v2359
    %v2361 = vpop.f32.mrb[0].mxu0
    %2362 = vdwg.mxu0
    %v2363 = vadd.f32 %v2360, %v98
    %2364 = vrot.lane.b32.xlu0 %v101, 80
    %v2365 = vpop.permute.xlu0 %2364
    %v2367 = vsub.f32 %v2363, %v2365
    %2368 = vrot.lane.b32.xlu0 %v105, 48
    %v2369 = vpop.permute.xlu0 %2368
    %v2371 = vadd.f32 %v2360, %v2369
    %v2372 = vmul.f32 %v2289, %v2289
    %v2373 = vsub.f32 1.0, %v2372
    %2375 = vrot.lane.b32.xlu0 %v2371, 112
    %v2376 = vpop.permute.xlu0 %2375
    %v2378 = vmul.f32 %v2373, %v2376
    %v2379 = vsub.f32 %v2288, %v2378
    %v2380 = vsub.f32 %v2288, %v2379
    %2382 = vrot.lane.b32.xlu0 %v2363, 16
    %v2383 = vpop.permute.xlu0 %2382
    %2386 = vrot.lane.b32.xlu0 %v2288, 32
    %v2387 = vpop.permute.xlu0 %2386
    %2390 = vrot.lane.b32.xlu0 %v2379, 64
    %v2391 = vpop.permute.xlu0 %2390
    %2394 = vrot.lane.b32.xlu0 %v2380, 96
    %v2395 = vpop.permute.xlu0 %2394
    %v2397 = vsel %vm293, %v2367, %v2383
    %v2398 = vsel %vm110, %v2397, %v2387
    %v2399 = vsel %vm296, %v2398, %v2391
    %v2400 = vsel %vm298, %v2399, %v2395
    %s2401 = scalar_lea.vmem [#allocation10], 88
    %2402 = vst [vmem:[%s2401] sm:$0xff] %v2400
    %v2403 = vtanh.pop %v2379
    %v2405 = vsel %vm110, %v2403, 0
    %2407 = vmatprep.subr.mxu0 0.0
    %2408 = vmatpush1.msra.mxu0 %v78
    %2409 = vmatprep.subr.mxu0 0.0
    %2410 = vmatpush1.msra.mxu0 %v79
    %2411 = vmatprep.subr.mxu0 0.0
    %2412 = vmatpush1.msra.mxu0 %v80
    %2413 = vmatprep.subr.mxu0 0.0
    %2414 = vmatpush1.msra.mxu0 %v81
    %2415 = vmatprep.subr.mxu0 0.0
    %2416 = vmatpush1.msra.mxu0 0.0
    %2417 = vmatprep.subr.mxu0 0.0
    %2418 = vmatpush1.msra.mxu0 0.0
    %2419 = vmatprep.subr.mxu0 0.0
    %2420 = vmatpush1.msra.mxu0 0.0
    %2421 = vmatprep.subr.mxu0 0.0
    %2422 = vmatpush1.msra.mxu0 0.0
    %2423 = vmatprep.subr.mxu0 0.0
    %2424 = vmatpush1.msra.mxu0 0.0
    %2425 = vmatprep.subr.mxu0 0.0
    %2426 = vmatpush1.msra.mxu0 0.0
    %2427 = vmatprep.subr.mxu0 0.0
    %2428 = vmatpush1.msra.mxu0 0.0
    %2429 = vmatprep.subr.mxu0 0.0
    %2430 = vmatpush1.msra.mxu0 0.0
    %2431 = vmatprep.subr.mxu0 0.0
    %2432 = vmatpush1.msra.mxu0 0.0
    %2433 = vmatprep.subr.mxu0 0.0
    %2434 = vmatpush1.msra.mxu0 0.0
    %2435 = vmatprep.subr.mxu0 0.0
    %2436 = vmatpush1.msra.mxu0 0.0
    %2437 = vmatprep.subr.mxu0 0.0
    %2438 = vmatpush1.msra.mxu0 0.0
    %2439 = vmatprep.subr.mxu0 0.0
    %2440 = vmatpush1.msra.mxu0 0.0
    %2441 = vmatprep.subr.mxu0 0.0
    %2442 = vmatpush1.msra.mxu0 0.0
    %2443 = vmatprep.subr.mxu0 0.0
    %2444 = vmatpush1.msra.mxu0 0.0
    %2445 = vmatprep.subr.mxu0 0.0
    %2446 = vmatpush1.msra.mxu0 0.0
    %2447 = vmatprep.subr.mxu0 0.0
    %2448 = vmatpush1.msra.mxu0 0.0
    %2449 = vmatprep.subr.mxu0 0.0
    %2450 = vmatpush1.msra.mxu0 0.0
    %2451 = vmatprep.subr.mxu0 0.0
    %2452 = vmatpush1.msra.mxu0 0.0
    %2453 = vmatprep.subr.mxu0 0.0
    %2454 = vmatpush1.msra.mxu0 0.0
    %2455 = vmatprep.subr.mxu0 0.0
    %2456 = vmatpush1.msra.mxu0 0.0
    %2457 = vmatprep.subr.mxu0 0.0
    %2458 = vmatpush1.msra.mxu0 0.0
    %2459 = vmatprep.subr.mxu0 0.0
    %2460 = vmatpush1.msra.mxu0 0.0
    %2461 = vmatprep.subr.mxu0 0.0
    %2462 = vmatpush1.msra.mxu0 0.0
    %2463 = vmatprep.subr.mxu0 0.0
    %2464 = vmatpush1.msra.mxu0 0.0
    %2465 = vmatprep.subr.mxu0 0.0
    %2466 = vmatpush1.msra.mxu0 0.0
    %2467 = vmatprep.subr.mxu0 0.0
    %2468 = vmatpush1.msra.mxu0 0.0
    %2469 = vmatprep.subr.mxu0 0.0
    %2470 = vmatpush1.msra.mxu0 0.0
    %2471 = vmatprep.mubr.f32.mxu0 0.0
    %2472 = vmatmul.mubr.f32.gmra.mrb[0].mxu0 %v2405
    %v2473 = vpop.f32.mrb[0].mxu0
    %v2474 = vadd.f32 0.0, %v2473
    %v2475 = vpop.f32.mrb[0].mxu0
    %2476 = vdwg.mxu0
    %v2477 = vmul.f32 %v2379, 0.5
    %v2478 = vadd.f32 %v2477, %v2474
    %v2479 = vadd.f32 %v2478, %v91
    %v2480 = vtanh.pop %v2479
    %v2482 = vsel %vm110, %v2480, 0
    %2484 = vmatprep.subr.mxu0 0.0
    %2485 = vmatpush1.msra.mxu0 %v82
    %2486 = vmatprep.subr.mxu0 0.0
    %2487 = vmatpush1.msra.mxu0 %v83
    %2488 = vmatprep.subr.mxu0 0.0
    %2489 = vmatpush1.msra.mxu0 %v84
    %2490 = vmatprep.subr.mxu0 0.0
    %2491 = vmatpush1.msra.mxu0 %v85
    %2492 = vmatprep.subr.mxu0 0.0
    %2493 = vmatpush1.msra.mxu0 0.0
    %2494 = vmatprep.subr.mxu0 0.0
    %2495 = vmatpush1.msra.mxu0 0.0
    %2496 = vmatprep.subr.mxu0 0.0
    %2497 = vmatpush1.msra.mxu0 0.0
    %2498 = vmatprep.subr.mxu0 0.0
    %2499 = vmatpush1.msra.mxu0 0.0
    %2500 = vmatprep.subr.mxu0 0.0
    %2501 = vmatpush1.msra.mxu0 0.0
    %2502 = vmatprep.subr.mxu0 0.0
    %2503 = vmatpush1.msra.mxu0 0.0
    %2504 = vmatprep.subr.mxu0 0.0
    %2505 = vmatpush1.msra.mxu0 0.0
    %2506 = vmatprep.subr.mxu0 0.0
    %2507 = vmatpush1.msra.mxu0 0.0
    %2508 = vmatprep.subr.mxu0 0.0
    %2509 = vmatpush1.msra.mxu0 0.0
    %2510 = vmatprep.subr.mxu0 0.0
    %2511 = vmatpush1.msra.mxu0 0.0
    %2512 = vmatprep.subr.mxu0 0.0
    %2513 = vmatpush1.msra.mxu0 0.0
    %2514 = vmatprep.subr.mxu0 0.0
    %2515 = vmatpush1.msra.mxu0 0.0
    %2516 = vmatprep.subr.mxu0 0.0
    %2517 = vmatpush1.msra.mxu0 0.0
    %2518 = vmatprep.subr.mxu0 0.0
    %2519 = vmatpush1.msra.mxu0 0.0
    %2520 = vmatprep.subr.mxu0 0.0
    %2521 = vmatpush1.msra.mxu0 0.0
    %2522 = vmatprep.subr.mxu0 0.0
    %2523 = vmatpush1.msra.mxu0 0.0
    %2524 = vmatprep.subr.mxu0 0.0
    %2525 = vmatpush1.msra.mxu0 0.0
    %2526 = vmatprep.subr.mxu0 0.0
    %2527 = vmatpush1.msra.mxu0 0.0
    %2528 = vmatprep.subr.mxu0 0.0
    %2529 = vmatpush1.msra.mxu0 0.0
    %2530 = vmatprep.subr.mxu0 0.0
    %2531 = vmatpush1.msra.mxu0 0.0
    %2532 = vmatprep.subr.mxu0 0.0
    %2533 = vmatpush1.msra.mxu0 0.0
    %2534 = vmatprep.subr.mxu0 0.0
    %2535 = vmatpush1.msra.mxu0 0.0
    %2536 = vmatprep.subr.mxu0 0.0
    %2537 = vmatpush1.msra.mxu0 0.0
    %2538 = vmatprep.subr.mxu0 0.0
    %2539 = vmatpush1.msra.mxu0 0.0
    %2540 = vmatprep.subr.mxu0 0.0
    %2541 = vmatpush1.msra.mxu0 0.0
    %2542 = vmatprep.subr.mxu0 0.0
    %2543 = vmatpush1.msra.mxu0 0.0
    %2544 = vmatprep.subr.mxu0 0.0
    %2545 = vmatpush1.msra.mxu0 0.0
    %2546 = vmatprep.subr.mxu0 0.0
    %2547 = vmatpush1.msra.mxu0 0.0
    %2548 = vmatprep.mubr.f32.mxu0 0.0
    %2549 = vmatmul.mubr.f32.gmra.mrb[0].mxu0 %v2482
    %v2550 = vpop.f32.mrb[0].mxu0
    %v2551 = vadd.f32 0.0, %v2550
    %v2552 = vpop.f32.mrb[0].mxu0
    %2553 = vdwg.mxu0
    %v2554 = vadd.f32 %v2551, %v98
    %2555 = vrot.lane.b32.xlu0 %v101, 64
    %v2556 = vpop.permute.xlu0 %2555
    %v2558 = vsub.f32 %v2554, %v2556
    %2560 = vrot.lane.b32.xlu0 %v106, 16
    %v2561 = vpop.permute.xlu0 %2560
    %v2563 = vadd.f32 %v2551, %v2561
    %v2564 = vmul.f32 %v2480, %v2480
    %v2565 = vsub.f32 1.0, %v2564
    %2567 = vrot.lane.b32.xlu0 %v2563, 112
    %v2568 = vpop.permute.xlu0 %2567
    %v2570 = vmul.f32 %v2565, %v2568
    %v2571 = vsub.f32 %v2479, %v2570
    %v2572 = vsub.f32 %v2479, %v2571
    %2574 = vrot.lane.b32.xlu0 %v2554, 16
    %v2575 = vpop.permute.xlu0 %2574
    %2578 = vrot.lane.b32.xlu0 %v2479, 32
    %v2579 = vpop.permute.xlu0 %2578
    %2582 = vrot.lane.b32.xlu0 %v2571, 64
    %v2583 = vpop.permute.xlu0 %2582
    %2586 = vrot.lane.b32.xlu0 %v2572, 96
    %v2587 = vpop.permute.xlu0 %2586
    %v2589 = vsel %vm293, %v2558, %v2575
    %v2590 = vsel %vm110, %v2589, %v2579
    %v2591 = vsel %vm296, %v2590, %v2583
    %v2592 = vsel %vm298, %v2591, %v2587
    %s2593 = scalar_lea.vmem [#allocation10], 96
    %2594 = vst [vmem:[%s2593] sm:$0xff] %v2592
    %v2595 = vtanh.pop %v2571
    %v2597 = vsel %vm110, %v2595, 0
    %2599 = vmatprep.subr.mxu0 0.0
    %2600 = vmatpush1.msra.mxu0 %v78
    %2601 = vmatprep.subr.mxu0 0.0
    %2602 = vmatpush1.msra.mxu0 %v79
    %2603 = vmatprep.subr.mxu0 0.0
    %2604 = vmatpush1.msra.mxu0 %v80
    %2605 = vmatprep.subr.mxu0 0.0
    %2606 = vmatpush1.msra.mxu0 %v81
    %2607 = vmatprep.subr.mxu0 0.0
    %2608 = vmatpush1.msra.mxu0 0.0
    %2609 = vmatprep.subr.mxu0 0.0
    %2610 = vmatpush1.msra.mxu0 0.0
    %2611 = vmatprep.subr.mxu0 0.0
    %2612 = vmatpush1.msra.mxu0 0.0
    %2613 = vmatprep.subr.mxu0 0.0
    %2614 = vmatpush1.msra.mxu0 0.0
    %2615 = vmatprep.subr.mxu0 0.0
    %2616 = vmatpush1.msra.mxu0 0.0
    %2617 = vmatprep.subr.mxu0 0.0
    %2618 = vmatpush1.msra.mxu0 0.0
    %2619 = vmatprep.subr.mxu0 0.0
    %2620 = vmatpush1.msra.mxu0 0.0
    %2621 = vmatprep.subr.mxu0 0.0
    %2622 = vmatpush1.msra.mxu0 0.0
    %2623 = vmatprep.subr.mxu0 0.0
    %2624 = vmatpush1.msra.mxu0 0.0
    %2625 = vmatprep.subr.mxu0 0.0
    %2626 = vmatpush1.msra.mxu0 0.0
    %2627 = vmatprep.subr.mxu0 0.0
    %2628 = vmatpush1.msra.mxu0 0.0
    %2629 = vmatprep.subr.mxu0 0.0
    %2630 = vmatpush1.msra.mxu0 0.0
    %2631 = vmatprep.subr.mxu0 0.0
    %2632 = vmatpush1.msra.mxu0 0.0
    %2633 = vmatprep.subr.mxu0 0.0
    %2634 = vmatpush1.msra.mxu0 0.0
    %2635 = vmatprep.subr.mxu0 0.0
    %2636 = vmatpush1.msra.mxu0 0.0
    %2637 = vmatprep.subr.mxu0 0.0
    %2638 = vmatpush1.msra.mxu0 0.0
    %2639 = vmatprep.subr.mxu0 0.0
    %2640 = vmatpush1.msra.mxu0 0.0
    %2641 = vmatprep.subr.mxu0 0.0
    %2642 = vmatpush1.msra.mxu0 0.0
    %2643 = vmatprep.subr.mxu0 0.0
    %2644 = vmatpush1.msra.mxu0 0.0
    %2645 = vmatprep.subr.mxu0 0.0
    %2646 = vmatpush1.msra.mxu0 0.0
    %2647 = vmatprep.subr.mxu0 0.0
    %2648 = vmatpush1.msra.mxu0 0.0
    %2649 = vmatprep.subr.mxu0 0.0
    %2650 = vmatpush1.msra.mxu0 0.0
    %2651 = vmatprep.subr.mxu0 0.0
    %2652 = vmatpush1.msra.mxu0 0.0
    %2653 = vmatprep.subr.mxu0 0.0
    %2654 = vmatpush1.msra.mxu0 0.0
    %2655 = vmatprep.subr.mxu0 0.0
    %2656 = vmatpush1.msra.mxu0 0.0
    %2657 = vmatprep.subr.mxu0 0.0
    %2658 = vmatpush1.msra.mxu0 0.0
    %2659 = vmatprep.subr.mxu0 0.0
    %2660 = vmatpush1.msra.mxu0 0.0
    %2661 = vmatprep.subr.mxu0 0.0
    %2662 = vmatpush1.msra.mxu0 0.0
    %2663 = vmatprep.mubr.f32.mxu0 0.0
    %2664 = vmatmul.mubr.f32.gmra.mrb[0].mxu0 %v2597
    %v2665 = vpop.f32.mrb[0].mxu0
    %v2666 = vadd.f32 0.0, %v2665
    %v2667 = vpop.f32.mrb[0].mxu0
    %2668 = vdwg.mxu0
    %v2669 = vmul.f32 %v2571, 0.5
    %v2670 = vadd.f32 %v2669, %v2666
    %v2671 = vadd.f32 %v2670, %v91
    %v2672 = vtanh.pop %v2671
    %v2674 = vsel %vm110, %v2672, 0
    %2676 = vmatprep.subr.mxu0 0.0
    %2677 = vmatpush1.msra.mxu0 %v82
    %2678 = vmatprep.subr.mxu0 0.0
    %2679 = vmatpush1.msra.mxu0 %v83
    %2680 = vmatprep.subr.mxu0 0.0
    %2681 = vmatpush1.msra.mxu0 %v84
    %2682 = vmatprep.subr.mxu0 0.0
    %2683 = vmatpush1.msra.mxu0 %v85
    %2684 = vmatprep.subr.mxu0 0.0
    %2685 = vmatpush1.msra.mxu0 0.0
    %2686 = vmatprep.subr.mxu0 0.0
    %2687 = vmatpush1.msra.mxu0 0.0
    %2688 = vmatprep.subr.mxu0 0.0
    %2689 = vmatpush1.msra.mxu0 0.0
    %2690 = vmatprep.subr.mxu0 0.0
    %2691 = vmatpush1.msra.mxu0 0.0
    %2692 = vmatprep.subr.mxu0 0.0
    %2693 = vmatpush1.msra.mxu0 0.0
    %2694 = vmatprep.subr.mxu0 0.0
    %2695 = vmatpush1.msra.mxu0 0.0
    %2696 = vmatprep.subr.mxu0 0.0
    %2697 = vmatpush1.msra.mxu0 0.0
    %2698 = vmatprep.subr.mxu0 0.0
    %2699 = vmatpush1.msra.mxu0 0.0
    %2700 = vmatprep.subr.mxu0 0.0
    %2701 = vmatpush1.msra.mxu0 0.0
    %2702 = vmatprep.subr.mxu0 0.0
    %2703 = vmatpush1.msra.mxu0 0.0
    %2704 = vmatprep.subr.mxu0 0.0
    %2705 = vmatpush1.msra.mxu0 0.0
    %2706 = vmatprep.subr.mxu0 0.0
    %2707 = vmatpush1.msra.mxu0 0.0
    %2708 = vmatprep.subr.mxu0 0.0
    %2709 = vmatpush1.msra.mxu0 0.0
    %2710 = vmatprep.subr.mxu0 0.0
    %2711 = vmatpush1.msra.mxu0 0.0
    %2712 = vmatprep.subr.mxu0 0.0
    %2713 = vmatpush1.msra.mxu0 0.0
    %2714 = vmatprep.subr.mxu0 0.0
    %2715 = vmatpush1.msra.mxu0 0.0
    %2716 = vmatprep.subr.mxu0 0.0
    %2717 = vmatpush1.msra.mxu0 0.0
    %2718 = vmatprep.subr.mxu0 0.0
    %2719 = vmatpush1.msra.mxu0 0.0
    %2720 = vmatprep.subr.mxu0 0.0
    %2721 = vmatpush1.msra.mxu0 0.0
    %2722 = vmatprep.subr.mxu0 0.0
    %2723 = vmatpush1.msra.mxu0 0.0
    %2724 = vmatprep.subr.mxu0 0.0
    %2725 = vmatpush1.msra.mxu0 0.0
    %2726 = vmatprep.subr.mxu0 0.0
    %2727 = vmatpush1.msra.mxu0 0.0
    %2728 = vmatprep.subr.mxu0 0.0
    %2729 = vmatpush1.msra.mxu0 0.0
    %2730 = vmatprep.subr.mxu0 0.0
    %2731 = vmatpush1.msra.mxu0 0.0
    %2732 = vmatprep.subr.mxu0 0.0
    %2733 = vmatpush1.msra.mxu0 0.0
    %2734 = vmatprep.subr.mxu0 0.0
    %2735 = vmatpush1.msra.mxu0 0.0
    %2736 = vmatprep.subr.mxu0 0.0
    %2737 = vmatpush1.msra.mxu0 0.0
    %2738 = vmatprep.subr.mxu0 0.0
    %2739 = vmatpush1.msra.mxu0 0.0
    %2740 = vmatprep.mubr.f32.mxu0 0.0
    %2741 = vmatmul.mubr.f32.gmra.mrb[0].mxu0 %v2674
    %v2742 = vpop.f32.mrb[0].mxu0
    %v2743 = vadd.f32 0.0, %v2742
    %v2744 = vpop.f32.mrb[0].mxu0
    %2745 = vdwg.mxu0
    %v2746 = vadd.f32 %v2743, %v98
    %2747 = vrot.lane.b32.xlu0 %v101, 48
    %v2748 = vpop.permute.xlu0 %2747
    %v2750 = vsub.f32 %v2746, %v2748
    %2751 = vrot.lane.b32.xlu0 %v106, 112
    %v2752 = vpop.permute.xlu0 %2751
    %v2754 = vadd.f32 %v2743, %v2752
    %v2755 = vmul.f32 %v2672, %v2672
    %v2756 = vsub.f32 1.0, %v2755
    %2758 = vrot.lane.b32.xlu0 %v2754, 112
    %v2759 = vpop.permute.xlu0 %2758
    %v2761 = vmul.f32 %v2756, %v2759
    %v2762 = vsub.f32 %v2671, %v2761
    %v2763 = vsub.f32 %v2671, %v2762
    %2765 = vrot.lane.b32.xlu0 %v2746, 16
    %v2766 = vpop.permute.xlu0 %2765
    %2769 = vrot.lane.b32.xlu0 %v2671, 32
    %v2770 = vpop.permute.xlu0 %2769
    %2773 = vrot.lane.b32.xlu0 %v2762, 64
    %v2774 = vpop.permute.xlu0 %2773
    %2777 = vrot.lane.b32.xlu0 %v2763, 96
    %v2778 = vpop.permute.xlu0 %2777
    %v2780 = vsel %vm293, %v2750, %v2766
    %v2781 = vsel %vm110, %v2780, %v2770
    %v2782 = vsel %vm296, %v2781, %v2774
    %v2783 = vsel %vm298, %v2782, %v2778
    %s2784 = scalar_lea.vmem [#allocation10], 104
    %2785 = vst [vmem:[%s2784] sm:$0xff] %v2783
    %v2786 = vtanh.pop %v2762
    %v2788 = vsel %vm110, %v2786, 0
    %2790 = vmatprep.subr.mxu0 0.0
    %2791 = vmatpush1.msra.mxu0 %v78
    %2792 = vmatprep.subr.mxu0 0.0
    %2793 = vmatpush1.msra.mxu0 %v79
    %2794 = vmatprep.subr.mxu0 0.0
    %2795 = vmatpush1.msra.mxu0 %v80
    %2796 = vmatprep.subr.mxu0 0.0
    %2797 = vmatpush1.msra.mxu0 %v81
    %2798 = vmatprep.subr.mxu0 0.0
    %2799 = vmatpush1.msra.mxu0 0.0
    %2800 = vmatprep.subr.mxu0 0.0
    %2801 = vmatpush1.msra.mxu0 0.0
    %2802 = vmatprep.subr.mxu0 0.0
    %2803 = vmatpush1.msra.mxu0 0.0
    %2804 = vmatprep.subr.mxu0 0.0
    %2805 = vmatpush1.msra.mxu0 0.0
    %2806 = vmatprep.subr.mxu0 0.0
    %2807 = vmatpush1.msra.mxu0 0.0
    %2808 = vmatprep.subr.mxu0 0.0
    %2809 = vmatpush1.msra.mxu0 0.0
    %2810 = vmatprep.subr.mxu0 0.0
    %2811 = vmatpush1.msra.mxu0 0.0
    %2812 = vmatprep.subr.mxu0 0.0
    %2813 = vmatpush1.msra.mxu0 0.0
    %2814 = vmatprep.subr.mxu0 0.0
    %2815 = vmatpush1.msra.mxu0 0.0
    %2816 = vmatprep.subr.mxu0 0.0
    %2817 = vmatpush1.msra.mxu0 0.0
    %2818 = vmatprep.subr.mxu0 0.0
    %2819 = vmatpush1.msra.mxu0 0.0
    %2820 = vmatprep.subr.mxu0 0.0
    %2821 = vmatpush1.msra.mxu0 0.0
    %2822 = vmatprep.subr.mxu0 0.0
    %2823 = vmatpush1.msra.mxu0 0.0
    %2824 = vmatprep.subr.mxu0 0.0
    %2825 = vmatpush1.msra.mxu0 0.0
    %2826 = vmatprep.subr.mxu0 0.0
    %2827 = vmatpush1.msra.mxu0 0.0
    %2828 = vmatprep.subr.mxu0 0.0
    %2829 = vmatpush1.msra.mxu0 0.0
    %2830 = vmatprep.subr.mxu0 0.0
    %2831 = vmatpush1.msra.mxu0 0.0
    %2832 = vmatprep.subr.mxu0 0.0
    %2833 = vmatpush1.msra.mxu0 0.0
    %2834 = vmatprep.subr.mxu0 0.0
    %2835 = vmatpush1.msra.mxu0 0.0
    %2836 = vmatprep.subr.mxu0 0.0
    %2837 = vmatpush1.msra.mxu0 0.0
    %2838 = vmatprep.subr.mxu0 0.0
    %2839 = vmatpush1.msra.mxu0 0.0
    %2840 = vmatprep.subr.mxu0 0.0
    %2841 = vmatpush1.msra.mxu0 0.0
    %2842 = vmatprep.subr.mxu0 0.0
    %2843 = vmatpush1.msra.mxu0 0.0
    %2844 = vmatprep.subr.mxu0 0.0
    %2845 = vmatpush1.msra.mxu0 0.0
    %2846 = vmatprep.subr.mxu0 0.0
    %2847 = vmatpush1.msra.mxu0 0.0
    %2848 = vmatprep.subr.mxu0 0.0
    %2849 = vmatpush1.msra.mxu0 0.0
    %2850 = vmatprep.subr.mxu0 0.0
    %2851 = vmatpush1.msra.mxu0 0.0
    %2852 = vmatprep.subr.mxu0 0.0
    %2853 = vmatpush1.msra.mxu0 0.0
    %2854 = vmatprep.mubr.f32.mxu0 0.0
    %2855 = vmatmul.mubr.f32.gmra.mrb[0].mxu0 %v2788
    %v2856 = vpop.f32.mrb[0].mxu0
    %v2857 = vadd.f32 0.0, %v2856
    %v2858 = vpop.f32.mrb[0].mxu0
    %2859 = vdwg.mxu0
    %v2860 = vmul.f32 %v2762, 0.5
    %v2861 = vadd.f32 %v2860, %v2857
    %v2862 = vadd.f32 %v2861, %v91
    %v2863 = vtanh.pop %v2862
    %v2865 = vsel %vm110, %v2863, 0
    %2867 = vmatprep.subr.mxu0 0.0
    %2868 = vmatpush1.msra.mxu0 %v82
    %2869 = vmatprep.subr.mxu0 0.0
    %2870 = vmatpush1.msra.mxu0 %v83
    %2871 = vmatprep.subr.mxu0 0.0
    %2872 = vmatpush1.msra.mxu0 %v84
    %2873 = vmatprep.subr.mxu0 0.0
    %2874 = vmatpush1.msra.mxu0 %v85
    %2875 = vmatprep.subr.mxu0 0.0
    %2876 = vmatpush1.msra.mxu0 0.0
    %2877 = vmatprep.subr.mxu0 0.0
    %2878 = vmatpush1.msra.mxu0 0.0
    %2879 = vmatprep.subr.mxu0 0.0
    %2880 = vmatpush1.msra.mxu0 0.0
    %2881 = vmatprep.subr.mxu0 0.0
    %2882 = vmatpush1.msra.mxu0 0.0
    %2883 = vmatprep.subr.mxu0 0.0
    %2884 = vmatpush1.msra.mxu0 0.0
    %2885 = vmatprep.subr.mxu0 0.0
    %2886 = vmatpush1.msra.mxu0 0.0
    %2887 = vmatprep.subr.mxu0 0.0
    %2888 = vmatpush1.msra.mxu0 0.0
    %2889 = vmatprep.subr.mxu0 0.0
    %2890 = vmatpush1.msra.mxu0 0.0
    %2891 = vmatprep.subr.mxu0 0.0
    %2892 = vmatpush1.msra.mxu0 0.0
    %2893 = vmatprep.subr.mxu0 0.0
    %2894 = vmatpush1.msra.mxu0 0.0
    %2895 = vmatprep.subr.mxu0 0.0
    %2896 = vmatpush1.msra.mxu0 0.0
    %2897 = vmatprep.subr.mxu0 0.0
    %2898 = vmatpush1.msra.mxu0 0.0
    %2899 = vmatprep.subr.mxu0 0.0
    %2900 = vmatpush1.msra.mxu0 0.0
    %2901 = vmatprep.subr.mxu0 0.0
    %2902 = vmatpush1.msra.mxu0 0.0
    %2903 = vmatprep.subr.mxu0 0.0
    %2904 = vmatpush1.msra.mxu0 0.0
    %2905 = vmatprep.subr.mxu0 0.0
    %2906 = vmatpush1.msra.mxu0 0.0
    %2907 = vmatprep.subr.mxu0 0.0
    %2908 = vmatpush1.msra.mxu0 0.0
    %2909 = vmatprep.subr.mxu0 0.0
    %2910 = vmatpush1.msra.mxu0 0.0
    %2911 = vmatprep.subr.mxu0 0.0
    %2912 = vmatpush1.msra.mxu0 0.0
    %2913 = vmatprep.subr.mxu0 0.0
    %2914 = vmatpush1.msra.mxu0 0.0
    %2915 = vmatprep.subr.mxu0 0.0
    %2916 = vmatpush1.msra.mxu0 0.0
    %2917 = vmatprep.subr.mxu0 0.0
    %2918 = vmatpush1.msra.mxu0 0.0
    %2919 = vmatprep.subr.mxu0 0.0
    %2920 = vmatpush1.msra.mxu0 0.0
    %2921 = vmatprep.subr.mxu0 0.0
    %2922 = vmatpush1.msra.mxu0 0.0
    %2923 = vmatprep.subr.mxu0 0.0
    %2924 = vmatpush1.msra.mxu0 0.0
    %2925 = vmatprep.subr.mxu0 0.0
    %2926 = vmatpush1.msra.mxu0 0.0
    %2927 = vmatprep.subr.mxu0 0.0
    %2928 = vmatpush1.msra.mxu0 0.0
    %2929 = vmatprep.subr.mxu0 0.0
    %2930 = vmatpush1.msra.mxu0 0.0
    %2931 = vmatprep.mubr.f32.mxu0 0.0
    %2932 = vmatmul.mubr.f32.gmra.mrb[0].mxu0 %v2865
    %v2933 = vpop.f32.mrb[0].mxu0
    %v2934 = vadd.f32 0.0, %v2933
    %v2935 = vpop.f32.mrb[0].mxu0
    %2936 = vdwg.mxu0
    %v2937 = vadd.f32 %v2934, %v98
    %2938 = vrot.lane.b32.xlu0 %v101, 32
    %v2939 = vpop.permute.xlu0 %2938
    %v2941 = vsub.f32 %v2937, %v2939
    %2942 = vrot.lane.b32.xlu0 %v106, 80
    %v2943 = vpop.permute.xlu0 %2942
    %v2945 = vadd.f32 %v2934, %v2943
    %v2946 = vmul.f32 %v2863, %v2863
    %v2947 = vsub.f32 1.0, %v2946
    %2949 = vrot.lane.b32.xlu0 %v2945, 112
    %v2950 = vpop.permute.xlu0 %2949
    %v2952 = vmul.f32 %v2947, %v2950
    %v2953 = vsub.f32 %v2862, %v2952
    %v2954 = vsub.f32 %v2862, %v2953
    %2956 = vrot.lane.b32.xlu0 %v2937, 16
    %v2957 = vpop.permute.xlu0 %2956
    %2960 = vrot.lane.b32.xlu0 %v2862, 32
    %v2961 = vpop.permute.xlu0 %2960
    %2964 = vrot.lane.b32.xlu0 %v2953, 64
    %v2965 = vpop.permute.xlu0 %2964
    %2968 = vrot.lane.b32.xlu0 %v2954, 96
    %v2969 = vpop.permute.xlu0 %2968
    %v2971 = vsel %vm293, %v2941, %v2957
    %v2972 = vsel %vm110, %v2971, %v2961
    %v2973 = vsel %vm296, %v2972, %v2965
    %v2974 = vsel %vm298, %v2973, %v2969
    %s2975 = scalar_lea.vmem [#allocation10], 112
    %2976 = vst [vmem:[%s2975] sm:$0xff] %v2974
    %v2977 = vtanh.pop %v2953
    %v2979 = vsel %vm110, %v2977, 0
    %2981 = vmatprep.subr.mxu0 0.0
    %2982 = vmatpush1.msra.mxu0 %v78
    %2983 = vmatprep.subr.mxu0 0.0
    %2984 = vmatpush1.msra.mxu0 %v79
    %2985 = vmatprep.subr.mxu0 0.0
    %2986 = vmatpush1.msra.mxu0 %v80
    %2987 = vmatprep.subr.mxu0 0.0
    %2988 = vmatpush1.msra.mxu0 %v81
    %2989 = vmatprep.subr.mxu0 0.0
    %2990 = vmatpush1.msra.mxu0 0.0
    %2991 = vmatprep.subr.mxu0 0.0
    %2992 = vmatpush1.msra.mxu0 0.0
    %2993 = vmatprep.subr.mxu0 0.0
    %2994 = vmatpush1.msra.mxu0 0.0
    %2995 = vmatprep.subr.mxu0 0.0
    %2996 = vmatpush1.msra.mxu0 0.0
    %2997 = vmatprep.subr.mxu0 0.0
    %2998 = vmatpush1.msra.mxu0 0.0
    %2999 = vmatprep.subr.mxu0 0.0
    %3000 = vmatpush1.msra.mxu0 0.0
    %3001 = vmatprep.subr.mxu0 0.0
    %3002 = vmatpush1.msra.mxu0 0.0
    %3003 = vmatprep.subr.mxu0 0.0
    %3004 = vmatpush1.msra.mxu0 0.0
    %3005 = vmatprep.subr.mxu0 0.0
    %3006 = vmatpush1.msra.mxu0 0.0
    %3007 = vmatprep.subr.mxu0 0.0
    %3008 = vmatpush1.msra.mxu0 0.0
    %3009 = vmatprep.subr.mxu0 0.0
    %3010 = vmatpush1.msra.mxu0 0.0
    %3011 = vmatprep.subr.mxu0 0.0
    %3012 = vmatpush1.msra.mxu0 0.0
    %3013 = vmatprep.subr.mxu0 0.0
    %3014 = vmatpush1.msra.mxu0 0.0
    %3015 = vmatprep.subr.mxu0 0.0
    %3016 = vmatpush1.msra.mxu0 0.0
    %3017 = vmatprep.subr.mxu0 0.0
    %3018 = vmatpush1.msra.mxu0 0.0
    %3019 = vmatprep.subr.mxu0 0.0
    %3020 = vmatpush1.msra.mxu0 0.0
    %3021 = vmatprep.subr.mxu0 0.0
    %3022 = vmatpush1.msra.mxu0 0.0
    %3023 = vmatprep.subr.mxu0 0.0
    %3024 = vmatpush1.msra.mxu0 0.0
    %3025 = vmatprep.subr.mxu0 0.0
    %3026 = vmatpush1.msra.mxu0 0.0
    %3027 = vmatprep.subr.mxu0 0.0
    %3028 = vmatpush1.msra.mxu0 0.0
    %3029 = vmatprep.subr.mxu0 0.0
    %3030 = vmatpush1.msra.mxu0 0.0
    %3031 = vmatprep.subr.mxu0 0.0
    %3032 = vmatpush1.msra.mxu0 0.0
    %3033 = vmatprep.subr.mxu0 0.0
    %3034 = vmatpush1.msra.mxu0 0.0
    %3035 = vmatprep.subr.mxu0 0.0
    %3036 = vmatpush1.msra.mxu0 0.0
    %3037 = vmatprep.subr.mxu0 0.0
    %3038 = vmatpush1.msra.mxu0 0.0
    %3039 = vmatprep.subr.mxu0 0.0
    %3040 = vmatpush1.msra.mxu0 0.0
    %3041 = vmatprep.subr.mxu0 0.0
    %3042 = vmatpush1.msra.mxu0 0.0
    %3043 = vmatprep.subr.mxu0 0.0
    %3044 = vmatpush1.msra.mxu0 0.0
    %3045 = vmatprep.mubr.f32.mxu0 0.0
    %3046 = vmatmul.mubr.f32.gmra.mrb[0].mxu0 %v2979
    %v3047 = vpop.f32.mrb[0].mxu0
    %v3048 = vadd.f32 0.0, %v3047
    %v3049 = vpop.f32.mrb[0].mxu0
    %3050 = vdwg.mxu0
    %v3051 = vmul.f32 %v2953, 0.5
    %v3052 = vadd.f32 %v3051, %v3048
    %v3053 = vadd.f32 %v3052, %v91
    %v3054 = vtanh.pop %v3053
    %v3056 = vsel %vm110, %v3054, 0
    %3058 = vmatprep.subr.mxu0 0.0
    %3059 = vmatpush1.msra.mxu0 %v82
    %3060 = vmatprep.subr.mxu0 0.0
    %3061 = vmatpush1.msra.mxu0 %v83
    %3062 = vmatprep.subr.mxu0 0.0
    %3063 = vmatpush1.msra.mxu0 %v84
    %3064 = vmatprep.subr.mxu0 0.0
    %3065 = vmatpush1.msra.mxu0 %v85
    %3066 = vmatprep.subr.mxu0 0.0
    %3067 = vmatpush1.msra.mxu0 0.0
    %3068 = vmatprep.subr.mxu0 0.0
    %3069 = vmatpush1.msra.mxu0 0.0
    %3070 = vmatprep.subr.mxu0 0.0
    %3071 = vmatpush1.msra.mxu0 0.0
    %3072 = vmatprep.subr.mxu0 0.0
    %3073 = vmatpush1.msra.mxu0 0.0
    %3074 = vmatprep.subr.mxu0 0.0
    %3075 = vmatpush1.msra.mxu0 0.0
    %3076 = vmatprep.subr.mxu0 0.0
    %3077 = vmatpush1.msra.mxu0 0.0
    %3078 = vmatprep.subr.mxu0 0.0
    %3079 = vmatpush1.msra.mxu0 0.0
    %3080 = vmatprep.subr.mxu0 0.0
    %3081 = vmatpush1.msra.mxu0 0.0
    %3082 = vmatprep.subr.mxu0 0.0
    %3083 = vmatpush1.msra.mxu0 0.0
    %3084 = vmatprep.subr.mxu0 0.0
    %3085 = vmatpush1.msra.mxu0 0.0
    %3086 = vmatprep.subr.mxu0 0.0
    %3087 = vmatpush1.msra.mxu0 0.0
    %3088 = vmatprep.subr.mxu0 0.0
    %3089 = vmatpush1.msra.mxu0 0.0
    %3090 = vmatprep.subr.mxu0 0.0
    %3091 = vmatpush1.msra.mxu0 0.0
    %3092 = vmatprep.subr.mxu0 0.0
    %3093 = vmatpush1.msra.mxu0 0.0
    %3094 = vmatprep.subr.mxu0 0.0
    %3095 = vmatpush1.msra.mxu0 0.0
    %3096 = vmatprep.subr.mxu0 0.0
    %3097 = vmatpush1.msra.mxu0 0.0
    %3098 = vmatprep.subr.mxu0 0.0
    %3099 = vmatpush1.msra.mxu0 0.0
    %3100 = vmatprep.subr.mxu0 0.0
    %3101 = vmatpush1.msra.mxu0 0.0
    %3102 = vmatprep.subr.mxu0 0.0
    %3103 = vmatpush1.msra.mxu0 0.0
    %3104 = vmatprep.subr.mxu0 0.0
    %3105 = vmatpush1.msra.mxu0 0.0
    %3106 = vmatprep.subr.mxu0 0.0
    %3107 = vmatpush1.msra.mxu0 0.0
    %3108 = vmatprep.subr.mxu0 0.0
    %3109 = vmatpush1.msra.mxu0 0.0
    %3110 = vmatprep.subr.mxu0 0.0
    %3111 = vmatpush1.msra.mxu0 0.0
    %3112 = vmatprep.subr.mxu0 0.0
    %3113 = vmatpush1.msra.mxu0 0.0
    %3114 = vmatprep.subr.mxu0 0.0
    %3115 = vmatpush1.msra.mxu0 0.0
    %3116 = vmatprep.subr.mxu0 0.0
    %3117 = vmatpush1.msra.mxu0 0.0
    %3118 = vmatprep.subr.mxu0 0.0
    %3119 = vmatpush1.msra.mxu0 0.0
    %3120 = vmatprep.subr.mxu0 0.0
    %3121 = vmatpush1.msra.mxu0 0.0
    %3122 = vmatprep.mubr.f32.mxu0 0.0
    %3123 = vmatmul.mubr.f32.gmra.mrb[0].mxu0 %v3056
    %v3124 = vpop.f32.mrb[0].mxu0
    %v3125 = vadd.f32 0.0, %v3124
    %v3126 = vpop.f32.mrb[0].mxu0
    %3127 = vdwg.mxu0
    %v3128 = vadd.f32 %v3125, %v98
    %3129 = vrot.lane.b32.xlu0 %v101, 16
    %v3130 = vpop.permute.xlu0 %3129
    %v3132 = vsub.f32 %v3128, %v3130
    %3133 = vrot.lane.b32.xlu0 %v106, 48
    %v3134 = vpop.permute.xlu0 %3133
    %v3136 = vadd.f32 %v3125, %v3134
    %v3137 = vmul.f32 %v3054, %v3054
    %v3138 = vsub.f32 1.0, %v3137
    %3140 = vrot.lane.b32.xlu0 %v3136, 112
    %v3141 = vpop.permute.xlu0 %3140
    %v3143 = vmul.f32 %v3138, %v3141
    %v3144 = vsub.f32 %v3053, %v3143
    %v3145 = vsub.f32 %v3053, %v3144
    %3147 = vrot.lane.b32.xlu0 %v3128, 16
    %v3148 = vpop.permute.xlu0 %3147
    %3151 = vrot.lane.b32.xlu0 %v3053, 32
    %v3152 = vpop.permute.xlu0 %3151
    %3155 = vrot.lane.b32.xlu0 %v3144, 64
    %v3156 = vpop.permute.xlu0 %3155
    %3159 = vrot.lane.b32.xlu0 %v3145, 96
    %v3160 = vpop.permute.xlu0 %3159
    %v3162 = vsel %vm293, %v3132, %v3148
    %v3163 = vsel %vm110, %v3162, %v3152
    %v3164 = vsel %vm296, %v3163, %v3156
    %v3165 = vsel %vm298, %v3164, %v3160
    %s3166 = scalar_lea.vmem [#allocation10], 120
    %3167 = vst [vmem:[%s3166] sm:$0xff] %v3165
    %v3168 = vtanh.pop %v3144
    %v3170 = vsel %vm110, %v3168, 0
    %3172 = vmatprep.subr.mxu0 0.0
    %3173 = vmatpush1.msra.mxu0 %v78
    %3174 = vmatprep.subr.mxu0 0.0
    %3175 = vmatpush1.msra.mxu0 %v79
    %3176 = vmatprep.subr.mxu0 0.0
    %3177 = vmatpush1.msra.mxu0 %v80
    %3178 = vmatprep.subr.mxu0 0.0
    %3179 = vmatpush1.msra.mxu0 %v81
    %3180 = vmatprep.subr.mxu0 0.0
    %3181 = vmatpush1.msra.mxu0 0.0
    %3182 = vmatprep.subr.mxu0 0.0
    %3183 = vmatpush1.msra.mxu0 0.0
    %3184 = vmatprep.subr.mxu0 0.0
    %3185 = vmatpush1.msra.mxu0 0.0
    %3186 = vmatprep.subr.mxu0 0.0
    %3187 = vmatpush1.msra.mxu0 0.0
    %3188 = vmatprep.subr.mxu0 0.0
    %3189 = vmatpush1.msra.mxu0 0.0
    %3190 = vmatprep.subr.mxu0 0.0
    %3191 = vmatpush1.msra.mxu0 0.0
    %3192 = vmatprep.subr.mxu0 0.0
    %3193 = vmatpush1.msra.mxu0 0.0
    %3194 = vmatprep.subr.mxu0 0.0
    %3195 = vmatpush1.msra.mxu0 0.0
    %3196 = vmatprep.subr.mxu0 0.0
    %3197 = vmatpush1.msra.mxu0 0.0
    %3198 = vmatprep.subr.mxu0 0.0
    %3199 = vmatpush1.msra.mxu0 0.0
    %3200 = vmatprep.subr.mxu0 0.0
    %3201 = vmatpush1.msra.mxu0 0.0
    %3202 = vmatprep.subr.mxu0 0.0
    %3203 = vmatpush1.msra.mxu0 0.0
    %3204 = vmatprep.subr.mxu0 0.0
    %3205 = vmatpush1.msra.mxu0 0.0
    %3206 = vmatprep.subr.mxu0 0.0
    %3207 = vmatpush1.msra.mxu0 0.0
    %3208 = vmatprep.subr.mxu0 0.0
    %3209 = vmatpush1.msra.mxu0 0.0
    %3210 = vmatprep.subr.mxu0 0.0
    %3211 = vmatpush1.msra.mxu0 0.0
    %3212 = vmatprep.subr.mxu0 0.0
    %3213 = vmatpush1.msra.mxu0 0.0
    %3214 = vmatprep.subr.mxu0 0.0
    %3215 = vmatpush1.msra.mxu0 0.0
    %3216 = vmatprep.subr.mxu0 0.0
    %3217 = vmatpush1.msra.mxu0 0.0
    %3218 = vmatprep.subr.mxu0 0.0
    %3219 = vmatpush1.msra.mxu0 0.0
    %3220 = vmatprep.subr.mxu0 0.0
    %3221 = vmatpush1.msra.mxu0 0.0
    %3222 = vmatprep.subr.mxu0 0.0
    %3223 = vmatpush1.msra.mxu0 0.0
    %3224 = vmatprep.subr.mxu0 0.0
    %3225 = vmatpush1.msra.mxu0 0.0
    %3226 = vmatprep.subr.mxu0 0.0
    %3227 = vmatpush1.msra.mxu0 0.0
    %3228 = vmatprep.subr.mxu0 0.0
    %3229 = vmatpush1.msra.mxu0 0.0
    %3230 = vmatprep.subr.mxu0 0.0
    %3231 = vmatpush1.msra.mxu0 0.0
    %3232 = vmatprep.subr.mxu0 0.0
    %3233 = vmatpush1.msra.mxu0 0.0
    %3234 = vmatprep.subr.mxu0 0.0
    %3235 = vmatpush1.msra.mxu0 0.0
    %3236 = vmatprep.mubr.f32.mxu0 0.0
    %3237 = vmatmul.mubr.f32.gmra.mrb[0].mxu0 %v3170
    %v3238 = vpop.f32.mrb[0].mxu0
    %v3239 = vadd.f32 0.0, %v3238
    %v3240 = vpop.f32.mrb[0].mxu0
    %3241 = vdwg.mxu0
    %v3242 = vmul.f32 %v3144, 0.5
    %v3243 = vadd.f32 %v3242, %v3239
    %v3244 = vadd.f32 %v3243, %v91
    %v3245 = vtanh.pop %v3244
    %v3247 = vsel %vm110, %v3245, 0
    %3249 = vmatprep.subr.mxu0 0.0
    %3250 = vmatpush1.msra.mxu0 %v82
    %3251 = vmatprep.subr.mxu0 0.0
    %3252 = vmatpush1.msra.mxu0 %v83
    %3253 = vmatprep.subr.mxu0 0.0
    %3254 = vmatpush1.msra.mxu0 %v84
    %3255 = vmatprep.subr.mxu0 0.0
    %3256 = vmatpush1.msra.mxu0 %v85
    %3257 = vmatprep.subr.mxu0 0.0
    %3258 = vmatpush1.msra.mxu0 0.0
    %3259 = vmatprep.subr.mxu0 0.0
    %3260 = vmatpush1.msra.mxu0 0.0
    %3261 = vmatprep.subr.mxu0 0.0
    %3262 = vmatpush1.msra.mxu0 0.0
    %3263 = vmatprep.subr.mxu0 0.0
    %3264 = vmatpush1.msra.mxu0 0.0
    %3265 = vmatprep.subr.mxu0 0.0
    %3266 = vmatpush1.msra.mxu0 0.0
    %3267 = vmatprep.subr.mxu0 0.0
    %3268 = vmatpush1.msra.mxu0 0.0
    %3269 = vmatprep.subr.mxu0 0.0
    %3270 = vmatpush1.msra.mxu0 0.0
    %3271 = vmatprep.subr.mxu0 0.0
    %3272 = vmatpush1.msra.mxu0 0.0
    %3273 = vmatprep.subr.mxu0 0.0
    %3274 = vmatpush1.msra.mxu0 0.0
    %3275 = vmatprep.subr.mxu0 0.0
    %3276 = vmatpush1.msra.mxu0 0.0
    %3277 = vmatprep.subr.mxu0 0.0
    %3278 = vmatpush1.msra.mxu0 0.0
    %3279 = vmatprep.subr.mxu0 0.0
    %3280 = vmatpush1.msra.mxu0 0.0
    %3281 = vmatprep.subr.mxu0 0.0
    %3282 = vmatpush1.msra.mxu0 0.0
    %3283 = vmatprep.subr.mxu0 0.0
    %3284 = vmatpush1.msra.mxu0 0.0
    %3285 = vmatprep.subr.mxu0 0.0
    %3286 = vmatpush1.msra.mxu0 0.0
    %3287 = vmatprep.subr.mxu0 0.0
    %3288 = vmatpush1.msra.mxu0 0.0
    %3289 = vmatprep.subr.mxu0 0.0
    %3290 = vmatpush1.msra.mxu0 0.0
    %3291 = vmatprep.subr.mxu0 0.0
    %3292 = vmatpush1.msra.mxu0 0.0
    %3293 = vmatprep.subr.mxu0 0.0
    %3294 = vmatpush1.msra.mxu0 0.0
    %3295 = vmatprep.subr.mxu0 0.0
    %3296 = vmatpush1.msra.mxu0 0.0
    %3297 = vmatprep.subr.mxu0 0.0
    %3298 = vmatpush1.msra.mxu0 0.0
    %3299 = vmatprep.subr.mxu0 0.0
    %3300 = vmatpush1.msra.mxu0 0.0
    %3301 = vmatprep.subr.mxu0 0.0
    %3302 = vmatpush1.msra.mxu0 0.0
    %3303 = vmatprep.subr.mxu0 0.0
    %3304 = vmatpush1.msra.mxu0 0.0
    %3305 = vmatprep.subr.mxu0 0.0
    %3306 = vmatpush1.msra.mxu0 0.0
    %3307 = vmatprep.subr.mxu0 0.0
    %3308 = vmatpush1.msra.mxu0 0.0
    %3309 = vmatprep.subr.mxu0 0.0
    %3310 = vmatpush1.msra.mxu0 0.0
    %3311 = vmatprep.subr.mxu0 0.0
    %3312 = vmatpush1.msra.mxu0 0.0
    %3313 = vmatprep.mubr.f32.mxu0 0.0
    %3314 = vmatmul.mubr.f32.gmra.mrb[0].mxu0 %v3247
    %v3315 = vpop.f32.mrb[0].mxu0
    %v3316 = vadd.f32 0.0, %v3315
    %v3317 = vpop.f32.mrb[0].mxu0
    %3318 = vdwg.mxu0
    %v3319 = vadd.f32 %v3316, %v98
    %v3320 = vsub.f32 %v3319, %v102
    %3322 = vrot.lane.b32.xlu0 %v107, 16
    %v3323 = vpop.permute.xlu0 %3322
    %v3325 = vadd.f32 %v3316, %v3323
    %v3326 = vmul.f32 %v3245, %v3245
    %v3327 = vsub.f32 1.0, %v3326
    %3329 = vrot.lane.b32.xlu0 %v3325, 112
    %v3330 = vpop.permute.xlu0 %3329
    %v3332 = vmul.f32 %v3327, %v3330
    %v3333 = vsub.f32 %v3244, %v3332
    %v3334 = vsub.f32 %v3244, %v3333
    %3336 = vrot.lane.b32.xlu0 %v3319, 16
    %v3337 = vpop.permute.xlu0 %3336
    %3340 = vrot.lane.b32.xlu0 %v3244, 32
    %v3341 = vpop.permute.xlu0 %3340
    %3344 = vrot.lane.b32.xlu0 %v3333, 64
    %v3345 = vpop.permute.xlu0 %3344
    %3348 = vrot.lane.b32.xlu0 %v3334, 96
    %v3349 = vpop.permute.xlu0 %3348
    %v3351 = vsel %vm293, %v3320, %v3337
    %v3352 = vsel %vm110, %v3351, %v3341
    %v3353 = vsel %vm296, %v3352, %v3345
    %v3354 = vsel %vm298, %v3353, %v3349
    %s3355 = scalar_lea.vmem [#allocation10], 128
    %3356 = vst [vmem:[%s3355] sm:$0xff] %v3354
    %v3357 = vtanh.pop %v3333
    %v3359 = vsel %vm110, %v3357, 0
    %3361 = vmatprep.subr.mxu0 0.0
    %3362 = vmatpush1.msra.mxu0 %v78
    %3363 = vmatprep.subr.mxu0 0.0
    %3364 = vmatpush1.msra.mxu0 %v79
    %3365 = vmatprep.subr.mxu0 0.0
    %3366 = vmatpush1.msra.mxu0 %v80
    %3367 = vmatprep.subr.mxu0 0.0
    %3368 = vmatpush1.msra.mxu0 %v81
    %3369 = vmatprep.subr.mxu0 0.0
    %3370 = vmatpush1.msra.mxu0 0.0
    %3371 = vmatprep.subr.mxu0 0.0
    %3372 = vmatpush1.msra.mxu0 0.0
    %3373 = vmatprep.subr.mxu0 0.0
    %3374 = vmatpush1.msra.mxu0 0.0
    %3375 = vmatprep.subr.mxu0 0.0
    %3376 = vmatpush1.msra.mxu0 0.0
    %3377 = vmatprep.subr.mxu0 0.0
    %3378 = vmatpush1.msra.mxu0 0.0
    %3379 = vmatprep.subr.mxu0 0.0
    %3380 = vmatpush1.msra.mxu0 0.0
    %3381 = vmatprep.subr.mxu0 0.0
    %3382 = vmatpush1.msra.mxu0 0.0
    %3383 = vmatprep.subr.mxu0 0.0
    %3384 = vmatpush1.msra.mxu0 0.0
    %3385 = vmatprep.subr.mxu0 0.0
    %3386 = vmatpush1.msra.mxu0 0.0
    %3387 = vmatprep.subr.mxu0 0.0
    %3388 = vmatpush1.msra.mxu0 0.0
    %3389 = vmatprep.subr.mxu0 0.0
    %3390 = vmatpush1.msra.mxu0 0.0
    %3391 = vmatprep.subr.mxu0 0.0
    %3392 = vmatpush1.msra.mxu0 0.0
    %3393 = vmatprep.subr.mxu0 0.0
    %3394 = vmatpush1.msra.mxu0 0.0
    %3395 = vmatprep.subr.mxu0 0.0
    %3396 = vmatpush1.msra.mxu0 0.0
    %3397 = vmatprep.subr.mxu0 0.0
    %3398 = vmatpush1.msra.mxu0 0.0
    %3399 = vmatprep.subr.mxu0 0.0
    %3400 = vmatpush1.msra.mxu0 0.0
    %3401 = vmatprep.subr.mxu0 0.0
    %3402 = vmatpush1.msra.mxu0 0.0
    %3403 = vmatprep.subr.mxu0 0.0
    %3404 = vmatpush1.msra.mxu0 0.0
    %3405 = vmatprep.subr.mxu0 0.0
    %3406 = vmatpush1.msra.mxu0 0.0
    %3407 = vmatprep.subr.mxu0 0.0
    %3408 = vmatpush1.msra.mxu0 0.0
    %3409 = vmatprep.subr.mxu0 0.0
    %3410 = vmatpush1.msra.mxu0 0.0
    %3411 = vmatprep.subr.mxu0 0.0
    %3412 = vmatpush1.msra.mxu0 0.0
    %3413 = vmatprep.subr.mxu0 0.0
    %3414 = vmatpush1.msra.mxu0 0.0
    %3415 = vmatprep.subr.mxu0 0.0
    %3416 = vmatpush1.msra.mxu0 0.0
    %3417 = vmatprep.subr.mxu0 0.0
    %3418 = vmatpush1.msra.mxu0 0.0
    %3419 = vmatprep.subr.mxu0 0.0
    %3420 = vmatpush1.msra.mxu0 0.0
    %3421 = vmatprep.subr.mxu0 0.0
    %3422 = vmatpush1.msra.mxu0 0.0
    %3423 = vmatprep.subr.mxu0 0.0
    %3424 = vmatpush1.msra.mxu0 0.0
    %3425 = vmatprep.mubr.f32.mxu0 0.0
    %3426 = vmatmul.mubr.f32.gmra.mrb[0].mxu0 %v3359
    %v3427 = vpop.f32.mrb[0].mxu0
    %v3428 = vadd.f32 0.0, %v3427
    %v3429 = vpop.f32.mrb[0].mxu0
    %3430 = vdwg.mxu0
    %v3431 = vmul.f32 %v3333, 0.5
    %v3432 = vadd.f32 %v3431, %v3428
    %v3433 = vadd.f32 %v3432, %v91
    %v3434 = vtanh.pop %v3433
    %v3436 = vsel %vm110, %v3434, 0
    %3438 = vmatprep.subr.mxu0 0.0
    %3439 = vmatpush1.msra.mxu0 %v82
    %3440 = vmatprep.subr.mxu0 0.0
    %3441 = vmatpush1.msra.mxu0 %v83
    %3442 = vmatprep.subr.mxu0 0.0
    %3443 = vmatpush1.msra.mxu0 %v84
    %3444 = vmatprep.subr.mxu0 0.0
    %3445 = vmatpush1.msra.mxu0 %v85
    %3446 = vmatprep.subr.mxu0 0.0
    %3447 = vmatpush1.msra.mxu0 0.0
    %3448 = vmatprep.subr.mxu0 0.0
    %3449 = vmatpush1.msra.mxu0 0.0
    %3450 = vmatprep.subr.mxu0 0.0
    %3451 = vmatpush1.msra.mxu0 0.0
    %3452 = vmatprep.subr.mxu0 0.0
    %3453 = vmatpush1.msra.mxu0 0.0
    %3454 = vmatprep.subr.mxu0 0.0
    %3455 = vmatpush1.msra.mxu0 0.0
    %3456 = vmatprep.subr.mxu0 0.0
    %3457 = vmatpush1.msra.mxu0 0.0
    %3458 = vmatprep.subr.mxu0 0.0
    %3459 = vmatpush1.msra.mxu0 0.0
    %3460 = vmatprep.subr.mxu0 0.0
    %3461 = vmatpush1.msra.mxu0 0.0
    %3462 = vmatprep.subr.mxu0 0.0
    %3463 = vmatpush1.msra.mxu0 0.0
    %3464 = vmatprep.subr.mxu0 0.0
    %3465 = vmatpush1.msra.mxu0 0.0
    %3466 = vmatprep.subr.mxu0 0.0
    %3467 = vmatpush1.msra.mxu0 0.0
    %3468 = vmatprep.subr.mxu0 0.0
    %3469 = vmatpush1.msra.mxu0 0.0
    %3470 = vmatprep.subr.mxu0 0.0
    %3471 = vmatpush1.msra.mxu0 0.0
    %3472 = vmatprep.subr.mxu0 0.0
    %3473 = vmatpush1.msra.mxu0 0.0
    %3474 = vmatprep.subr.mxu0 0.0
    %3475 = vmatpush1.msra.mxu0 0.0
    %3476 = vmatprep.subr.mxu0 0.0
    %3477 = vmatpush1.msra.mxu0 0.0
    %3478 = vmatprep.subr.mxu0 0.0
    %3479 = vmatpush1.msra.mxu0 0.0
    %3480 = vmatprep.subr.mxu0 0.0
    %3481 = vmatpush1.msra.mxu0 0.0
    %3482 = vmatprep.subr.mxu0 0.0
    %3483 = vmatpush1.msra.mxu0 0.0
    %3484 = vmatprep.subr.mxu0 0.0
    %3485 = vmatpush1.msra.mxu0 0.0
    %3486 = vmatprep.subr.mxu0 0.0
    %3487 = vmatpush1.msra.mxu0 0.0
    %3488 = vmatprep.subr.mxu0 0.0
    %3489 = vmatpush1.msra.mxu0 0.0
    %3490 = vmatprep.subr.mxu0 0.0
    %3491 = vmatpush1.msra.mxu0 0.0
    %3492 = vmatprep.subr.mxu0 0.0
    %3493 = vmatpush1.msra.mxu0 0.0
    %3494 = vmatprep.subr.mxu0 0.0
    %3495 = vmatpush1.msra.mxu0 0.0
    %3496 = vmatprep.subr.mxu0 0.0
    %3497 = vmatpush1.msra.mxu0 0.0
    %3498 = vmatprep.subr.mxu0 0.0
    %3499 = vmatpush1.msra.mxu0 0.0
    %3500 = vmatprep.subr.mxu0 0.0
    %3501 = vmatpush1.msra.mxu0 0.0
    %3502 = vmatprep.mubr.f32.mxu0 0.0
    %3503 = vmatmul.mubr.f32.gmra.mrb[0].mxu0 %v3436
    %v3504 = vpop.f32.mrb[0].mxu0
    %v3505 = vadd.f32 0.0, %v3504
    %v3506 = vpop.f32.mrb[0].mxu0
    %3507 = vdwg.mxu0
    %v3508 = vadd.f32 %v3505, %v98
    %3510 = vrot.lane.b32.xlu0 %v102, 112
    %v3511 = vpop.permute.xlu0 %3510
    %v3513 = vsub.f32 %v3508, %v3511
    %3514 = vrot.lane.b32.xlu0 %v107, 112
    %v3515 = vpop.permute.xlu0 %3514
    %v3517 = vadd.f32 %v3505, %v3515
    %v3518 = vmul.f32 %v3434, %v3434
    %v3519 = vsub.f32 1.0, %v3518
    %3521 = vrot.lane.b32.xlu0 %v3517, 112
    %v3522 = vpop.permute.xlu0 %3521
    %v3524 = vmul.f32 %v3519, %v3522
    %v3525 = vsub.f32 %v3433, %v3524
    %v3526 = vsub.f32 %v3433, %v3525
    %3528 = vrot.lane.b32.xlu0 %v3508, 16
    %v3529 = vpop.permute.xlu0 %3528
    %3532 = vrot.lane.b32.xlu0 %v3433, 32
    %v3533 = vpop.permute.xlu0 %3532
    %3536 = vrot.lane.b32.xlu0 %v3525, 64
    %v3537 = vpop.permute.xlu0 %3536
    %3540 = vrot.lane.b32.xlu0 %v3526, 96
    %v3541 = vpop.permute.xlu0 %3540
    %v3543 = vsel %vm293, %v3513, %v3529
    %v3544 = vsel %vm110, %v3543, %v3533
    %v3545 = vsel %vm296, %v3544, %v3537
    %v3546 = vsel %vm298, %v3545, %v3541
    %s3547 = scalar_lea.vmem [#allocation10], 136
    %3548 = vst [vmem:[%s3547] sm:$0xff] %v3546
    %v3549 = vtanh.pop %v3525
    %v3551 = vsel %vm110, %v3549, 0
    %3553 = vmatprep.subr.mxu0 0.0
    %3554 = vmatpush1.msra.mxu0 %v78
    %3555 = vmatprep.subr.mxu0 0.0
    %3556 = vmatpush1.msra.mxu0 %v79
    %3557 = vmatprep.subr.mxu0 0.0
    %3558 = vmatpush1.msra.mxu0 %v80
    %3559 = vmatprep.subr.mxu0 0.0
    %3560 = vmatpush1.msra.mxu0 %v81
    %3561 = vmatprep.subr.mxu0 0.0
    %3562 = vmatpush1.msra.mxu0 0.0
    %3563 = vmatprep.subr.mxu0 0.0
    %3564 = vmatpush1.msra.mxu0 0.0
    %3565 = vmatprep.subr.mxu0 0.0
    %3566 = vmatpush1.msra.mxu0 0.0
    %3567 = vmatprep.subr.mxu0 0.0
    %3568 = vmatpush1.msra.mxu0 0.0
    %3569 = vmatprep.subr.mxu0 0.0
    %3570 = vmatpush1.msra.mxu0 0.0
    %3571 = vmatprep.subr.mxu0 0.0
    %3572 = vmatpush1.msra.mxu0 0.0
    %3573 = vmatprep.subr.mxu0 0.0
    %3574 = vmatpush1.msra.mxu0 0.0
    %3575 = vmatprep.subr.mxu0 0.0
    %3576 = vmatpush1.msra.mxu0 0.0
    %3577 = vmatprep.subr.mxu0 0.0
    %3578 = vmatpush1.msra.mxu0 0.0
    %3579 = vmatprep.subr.mxu0 0.0
    %3580 = vmatpush1.msra.mxu0 0.0
    %3581 = vmatprep.subr.mxu0 0.0
    %3582 = vmatpush1.msra.mxu0 0.0
    %3583 = vmatprep.subr.mxu0 0.0
    %3584 = vmatpush1.msra.mxu0 0.0
    %3585 = vmatprep.subr.mxu0 0.0
    %3586 = vmatpush1.msra.mxu0 0.0
    %3587 = vmatprep.subr.mxu0 0.0
    %3588 = vmatpush1.msra.mxu0 0.0
    %3589 = vmatprep.subr.mxu0 0.0
    %3590 = vmatpush1.msra.mxu0 0.0
    %3591 = vmatprep.subr.mxu0 0.0
    %3592 = vmatpush1.msra.mxu0 0.0
    %3593 = vmatprep.subr.mxu0 0.0
    %3594 = vmatpush1.msra.mxu0 0.0
    %3595 = vmatprep.subr.mxu0 0.0
    %3596 = vmatpush1.msra.mxu0 0.0
    %3597 = vmatprep.subr.mxu0 0.0
    %3598 = vmatpush1.msra.mxu0 0.0
    %3599 = vmatprep.subr.mxu0 0.0
    %3600 = vmatpush1.msra.mxu0 0.0
    %3601 = vmatprep.subr.mxu0 0.0
    %3602 = vmatpush1.msra.mxu0 0.0
    %3603 = vmatprep.subr.mxu0 0.0
    %3604 = vmatpush1.msra.mxu0 0.0
    %3605 = vmatprep.subr.mxu0 0.0
    %3606 = vmatpush1.msra.mxu0 0.0
    %3607 = vmatprep.subr.mxu0 0.0
    %3608 = vmatpush1.msra.mxu0 0.0
    %3609 = vmatprep.subr.mxu0 0.0
    %3610 = vmatpush1.msra.mxu0 0.0
    %3611 = vmatprep.subr.mxu0 0.0
    %3612 = vmatpush1.msra.mxu0 0.0
    %3613 = vmatprep.subr.mxu0 0.0
    %3614 = vmatpush1.msra.mxu0 0.0
    %3615 = vmatprep.subr.mxu0 0.0
    %3616 = vmatpush1.msra.mxu0 0.0
    %3617 = vmatprep.mubr.f32.mxu0 0.0
    %3618 = vmatmul.mubr.f32.gmra.mrb[0].mxu0 %v3551
    %v3619 = vpop.f32.mrb[0].mxu0
    %v3620 = vadd.f32 0.0, %v3619
    %v3621 = vpop.f32.mrb[0].mxu0
    %3622 = vdwg.mxu0
    %v3623 = vmul.f32 %v3525, 0.5
    %v3624 = vadd.f32 %v3623, %v3620
    %v3625 = vadd.f32 %v3624, %v91
    %v3626 = vtanh.pop %v3625
    %v3628 = vsel %vm110, %v3626, 0
    %3630 = vmatprep.subr.mxu0 0.0
    %3631 = vmatpush1.msra.mxu0 %v82
    %3632 = vmatprep.subr.mxu0 0.0
    %3633 = vmatpush1.msra.mxu0 %v83
    %3634 = vmatprep.subr.mxu0 0.0
    %3635 = vmatpush1.msra.mxu0 %v84
    %3636 = vmatprep.subr.mxu0 0.0
    %3637 = vmatpush1.msra.mxu0 %v85
    %3638 = vmatprep.subr.mxu0 0.0
    %3639 = vmatpush1.msra.mxu0 0.0
    %3640 = vmatprep.subr.mxu0 0.0
    %3641 = vmatpush1.msra.mxu0 0.0
    %3642 = vmatprep.subr.mxu0 0.0
    %3643 = vmatpush1.msra.mxu0 0.0
    %3644 = vmatprep.subr.mxu0 0.0
    %3645 = vmatpush1.msra.mxu0 0.0
    %3646 = vmatprep.subr.mxu0 0.0
    %3647 = vmatpush1.msra.mxu0 0.0
    %3648 = vmatprep.subr.mxu0 0.0
    %3649 = vmatpush1.msra.mxu0 0.0
    %3650 = vmatprep.subr.mxu0 0.0
    %3651 = vmatpush1.msra.mxu0 0.0
    %3652 = vmatprep.subr.mxu0 0.0
    %3653 = vmatpush1.msra.mxu0 0.0
    %3654 = vmatprep.subr.mxu0 0.0
    %3655 = vmatpush1.msra.mxu0 0.0
    %3656 = vmatprep.subr.mxu0 0.0
    %3657 = vmatpush1.msra.mxu0 0.0
    %3658 = vmatprep.subr.mxu0 0.0
    %3659 = vmatpush1.msra.mxu0 0.0
    %3660 = vmatprep.subr.mxu0 0.0
    %3661 = vmatpush1.msra.mxu0 0.0
    %3662 = vmatprep.subr.mxu0 0.0
    %3663 = vmatpush1.msra.mxu0 0.0
    %3664 = vmatprep.subr.mxu0 0.0
    %3665 = vmatpush1.msra.mxu0 0.0
    %3666 = vmatprep.subr.mxu0 0.0
    %3667 = vmatpush1.msra.mxu0 0.0
    %3668 = vmatprep.subr.mxu0 0.0
    %3669 = vmatpush1.msra.mxu0 0.0
    %3670 = vmatprep.subr.mxu0 0.0
    %3671 = vmatpush1.msra.mxu0 0.0
    %3672 = vmatprep.subr.mxu0 0.0
    %3673 = vmatpush1.msra.mxu0 0.0
    %3674 = vmatprep.subr.mxu0 0.0
    %3675 = vmatpush1.msra.mxu0 0.0
    %3676 = vmatprep.subr.mxu0 0.0
    %3677 = vmatpush1.msra.mxu0 0.0
    %3678 = vmatprep.subr.mxu0 0.0
    %3679 = vmatpush1.msra.mxu0 0.0
    %3680 = vmatprep.subr.mxu0 0.0
    %3681 = vmatpush1.msra.mxu0 0.0
    %3682 = vmatprep.subr.mxu0 0.0
    %3683 = vmatpush1.msra.mxu0 0.0
    %3684 = vmatprep.subr.mxu0 0.0
    %3685 = vmatpush1.msra.mxu0 0.0
    %3686 = vmatprep.subr.mxu0 0.0
    %3687 = vmatpush1.msra.mxu0 0.0
    %3688 = vmatprep.subr.mxu0 0.0
    %3689 = vmatpush1.msra.mxu0 0.0
    %3690 = vmatprep.subr.mxu0 0.0
    %3691 = vmatpush1.msra.mxu0 0.0
    %3692 = vmatprep.subr.mxu0 0.0
    %3693 = vmatpush1.msra.mxu0 0.0
    %3694 = vmatprep.mubr.f32.mxu0 0.0
    %3695 = vmatmul.mubr.f32.gmra.mrb[0].mxu0 %v3628
    %v3696 = vpop.f32.mrb[0].mxu0
    %v3697 = vadd.f32 0.0, %v3696
    %v3698 = vpop.f32.mrb[0].mxu0
    %3699 = vdwg.mxu0
    %v3700 = vadd.f32 %v3697, %v98
    %3701 = vrot.lane.b32.xlu0 %v102, 96
    %v3702 = vpop.permute.xlu0 %3701
    %v3704 = vsub.f32 %v3700, %v3702
    %3705 = vrot.lane.b32.xlu0 %v107, 80
    %v3706 = vpop.permute.xlu0 %3705
    %v3708 = vadd.f32 %v3697, %v3706
    %v3709 = vmul.f32 %v3626, %v3626
    %v3710 = vsub.f32 1.0, %v3709
    %3712 = vrot.lane.b32.xlu0 %v3708, 112
    %v3713 = vpop.permute.xlu0 %3712
    %v3715 = vmul.f32 %v3710, %v3713
    %v3716 = vsub.f32 %v3625, %v3715
    %v3717 = vsub.f32 %v3625, %v3716
    %3719 = vrot.lane.b32.xlu0 %v3700, 16
    %v3720 = vpop.permute.xlu0 %3719
    %3723 = vrot.lane.b32.xlu0 %v3625, 32
    %v3724 = vpop.permute.xlu0 %3723
    %3727 = vrot.lane.b32.xlu0 %v3716, 64
    %v3728 = vpop.permute.xlu0 %3727
    %3731 = vrot.lane.b32.xlu0 %v3717, 96
    %v3732 = vpop.permute.xlu0 %3731
    %v3734 = vsel %vm293, %v3704, %v3720
    %v3735 = vsel %vm110, %v3734, %v3724
    %v3736 = vsel %vm296, %v3735, %v3728
    %v3737 = vsel %vm298, %v3736, %v3732
    %s3738 = scalar_lea.vmem [#allocation10], 144
    %3739 = vst [vmem:[%s3738] sm:$0xff] %v3737
    %v3740 = vtanh.pop %v3716
    %v3742 = vsel %vm110, %v3740, 0
    %3744 = vmatprep.subr.mxu0 0.0
    %3745 = vmatpush1.msra.mxu0 %v78
    %3746 = vmatprep.subr.mxu0 0.0
    %3747 = vmatpush1.msra.mxu0 %v79
    %3748 = vmatprep.subr.mxu0 0.0
    %3749 = vmatpush1.msra.mxu0 %v80
    %3750 = vmatprep.subr.mxu0 0.0
    %3751 = vmatpush1.msra.mxu0 %v81
    %3752 = vmatprep.subr.mxu0 0.0
    %3753 = vmatpush1.msra.mxu0 0.0
    %3754 = vmatprep.subr.mxu0 0.0
    %3755 = vmatpush1.msra.mxu0 0.0
    %3756 = vmatprep.subr.mxu0 0.0
    %3757 = vmatpush1.msra.mxu0 0.0
    %3758 = vmatprep.subr.mxu0 0.0
    %3759 = vmatpush1.msra.mxu0 0.0
    %3760 = vmatprep.subr.mxu0 0.0
    %3761 = vmatpush1.msra.mxu0 0.0
    %3762 = vmatprep.subr.mxu0 0.0
    %3763 = vmatpush1.msra.mxu0 0.0
    %3764 = vmatprep.subr.mxu0 0.0
    %3765 = vmatpush1.msra.mxu0 0.0
    %3766 = vmatprep.subr.mxu0 0.0
    %3767 = vmatpush1.msra.mxu0 0.0
    %3768 = vmatprep.subr.mxu0 0.0
    %3769 = vmatpush1.msra.mxu0 0.0
    %3770 = vmatprep.subr.mxu0 0.0
    %3771 = vmatpush1.msra.mxu0 0.0
    %3772 = vmatprep.subr.mxu0 0.0
    %3773 = vmatpush1.msra.mxu0 0.0
    %3774 = vmatprep.subr.mxu0 0.0
    %3775 = vmatpush1.msra.mxu0 0.0
    %3776 = vmatprep.subr.mxu0 0.0
    %3777 = vmatpush1.msra.mxu0 0.0
    %3778 = vmatprep.subr.mxu0 0.0
    %3779 = vmatpush1.msra.mxu0 0.0
    %3780 = vmatprep.subr.mxu0 0.0
    %3781 = vmatpush1.msra.mxu0 0.0
    %3782 = vmatprep.subr.mxu0 0.0
    %3783 = vmatpush1.msra.mxu0 0.0
    %3784 = vmatprep.subr.mxu0 0.0
    %3785 = vmatpush1.msra.mxu0 0.0
    %3786 = vmatprep.subr.mxu0 0.0
    %3787 = vmatpush1.msra.mxu0 0.0
    %3788 = vmatprep.subr.mxu0 0.0
    %3789 = vmatpush1.msra.mxu0 0.0
    %3790 = vmatprep.subr.mxu0 0.0
    %3791 = vmatpush1.msra.mxu0 0.0
    %3792 = vmatprep.subr.mxu0 0.0
    %3793 = vmatpush1.msra.mxu0 0.0
    %3794 = vmatprep.subr.mxu0 0.0
    %3795 = vmatpush1.msra.mxu0 0.0
    %3796 = vmatprep.subr.mxu0 0.0
    %3797 = vmatpush1.msra.mxu0 0.0
    %3798 = vmatprep.subr.mxu0 0.0
    %3799 = vmatpush1.msra.mxu0 0.0
    %3800 = vmatprep.subr.mxu0 0.0
    %3801 = vmatpush1.msra.mxu0 0.0
    %3802 = vmatprep.subr.mxu0 0.0
    %3803 = vmatpush1.msra.mxu0 0.0
    %3804 = vmatprep.subr.mxu0 0.0
    %3805 = vmatpush1.msra.mxu0 0.0
    %3806 = vmatprep.subr.mxu0 0.0
    %3807 = vmatpush1.msra.mxu0 0.0
    %3808 = vmatprep.mubr.f32.mxu0 0.0
    %3809 = vmatmul.mubr.f32.gmra.mrb[0].mxu0 %v3742
    %v3810 = vpop.f32.mrb[0].mxu0
    %v3811 = vadd.f32 0.0, %v3810
    %v3812 = vpop.f32.mrb[0].mxu0
    %3813 = vdwg.mxu0
    %v3814 = vmul.f32 %v3716, 0.5
    %v3815 = vadd.f32 %v3814, %v3811
    %v3816 = vadd.f32 %v3815, %v91
    %v3817 = vtanh.pop %v3816
    %v3819 = vsel %vm110, %v3817, 0
    %3821 = vmatprep.subr.mxu0 0.0
    %3822 = vmatpush1.msra.mxu0 %v82
    %3823 = vmatprep.subr.mxu0 0.0
    %3824 = vmatpush1.msra.mxu0 %v83
    %3825 = vmatprep.subr.mxu0 0.0
    %3826 = vmatpush1.msra.mxu0 %v84
    %3827 = vmatprep.subr.mxu0 0.0
    %3828 = vmatpush1.msra.mxu0 %v85
    %3829 = vmatprep.subr.mxu0 0.0
    %3830 = vmatpush1.msra.mxu0 0.0
    %3831 = vmatprep.subr.mxu0 0.0
    %3832 = vmatpush1.msra.mxu0 0.0
    %3833 = vmatprep.subr.mxu0 0.0
    %3834 = vmatpush1.msra.mxu0 0.0
    %3835 = vmatprep.subr.mxu0 0.0
    %3836 = vmatpush1.msra.mxu0 0.0
    %3837 = vmatprep.subr.mxu0 0.0
    %3838 = vmatpush1.msra.mxu0 0.0
    %3839 = vmatprep.subr.mxu0 0.0
    %3840 = vmatpush1.msra.mxu0 0.0
    %3841 = vmatprep.subr.mxu0 0.0
    %3842 = vmatpush1.msra.mxu0 0.0
    %3843 = vmatprep.subr.mxu0 0.0
    %3844 = vmatpush1.msra.mxu0 0.0
    %3845 = vmatprep.subr.mxu0 0.0
    %3846 = vmatpush1.msra.mxu0 0.0
    %3847 = vmatprep.subr.mxu0 0.0
    %3848 = vmatpush1.msra.mxu0 0.0
    %3849 = vmatprep.subr.mxu0 0.0
    %3850 = vmatpush1.msra.mxu0 0.0
    %3851 = vmatprep.subr.mxu0 0.0
    %3852 = vmatpush1.msra.mxu0 0.0
    %3853 = vmatprep.subr.mxu0 0.0
    %3854 = vmatpush1.msra.mxu0 0.0
    %3855 = vmatprep.subr.mxu0 0.0
    %3856 = vmatpush1.msra.mxu0 0.0
    %3857 = vmatprep.subr.mxu0 0.0
    %3858 = vmatpush1.msra.mxu0 0.0
    %3859 = vmatprep.subr.mxu0 0.0
    %3860 = vmatpush1.msra.mxu0 0.0
    %3861 = vmatprep.subr.mxu0 0.0
    %3862 = vmatpush1.msra.mxu0 0.0
    %3863 = vmatprep.subr.mxu0 0.0
    %3864 = vmatpush1.msra.mxu0 0.0
    %3865 = vmatprep.subr.mxu0 0.0
    %3866 = vmatpush1.msra.mxu0 0.0
    %3867 = vmatprep.subr.mxu0 0.0
    %3868 = vmatpush1.msra.mxu0 0.0
    %3869 = vmatprep.subr.mxu0 0.0
    %3870 = vmatpush1.msra.mxu0 0.0
    %3871 = vmatprep.subr.mxu0 0.0
    %3872 = vmatpush1.msra.mxu0 0.0
    %3873 = vmatprep.subr.mxu0 0.0
    %3874 = vmatpush1.msra.mxu0 0.0
    %3875 = vmatprep.subr.mxu0 0.0
    %3876 = vmatpush1.msra.mxu0 0.0
    %3877 = vmatprep.subr.mxu0 0.0
    %3878 = vmatpush1.msra.mxu0 0.0
    %3879 = vmatprep.subr.mxu0 0.0
    %3880 = vmatpush1.msra.mxu0 0.0
    %3881 = vmatprep.subr.mxu0 0.0
    %3882 = vmatpush1.msra.mxu0 0.0
    %3883 = vmatprep.subr.mxu0 0.0
    %3884 = vmatpush1.msra.mxu0 0.0
    %3885 = vmatprep.mubr.f32.mxu0 0.0
    %3886 = vmatmul.mubr.f32.gmra.mrb[0].mxu0 %v3819
    %v3887 = vpop.f32.mrb[0].mxu0
    %v3888 = vadd.f32 0.0, %v3887
    %v3889 = vpop.f32.mrb[0].mxu0
    %3890 = vdwg.mxu0
    %v3891 = vadd.f32 %v3888, %v98
    %3892 = vrot.lane.b32.xlu0 %v102, 80
    %v3893 = vpop.permute.xlu0 %3892
    %v3895 = vsub.f32 %v3891, %v3893
    %3896 = vrot.lane.b32.xlu0 %v107, 48
    %v3897 = vpop.permute.xlu0 %3896
    %v3899 = vadd.f32 %v3888, %v3897
    %v3900 = vmul.f32 %v3817, %v3817
    %v3901 = vsub.f32 1.0, %v3900
    %3903 = vrot.lane.b32.xlu0 %v3899, 112
    %v3904 = vpop.permute.xlu0 %3903
    %v3906 = vmul.f32 %v3901, %v3904
    %v3907 = vsub.f32 %v3816, %v3906
    %v3908 = vsub.f32 %v3816, %v3907
    %3910 = vrot.lane.b32.xlu0 %v3891, 16
    %v3911 = vpop.permute.xlu0 %3910
    %3914 = vrot.lane.b32.xlu0 %v3816, 32
    %v3915 = vpop.permute.xlu0 %3914
    %3918 = vrot.lane.b32.xlu0 %v3907, 64
    %v3919 = vpop.permute.xlu0 %3918
    %3922 = vrot.lane.b32.xlu0 %v3908, 96
    %v3923 = vpop.permute.xlu0 %3922
    %v3925 = vsel %vm293, %v3895, %v3911
    %v3926 = vsel %vm110, %v3925, %v3915
    %v3927 = vsel %vm296, %v3926, %v3919
    %v3928 = vsel %vm298, %v3927, %v3923
    %s3929 = scalar_lea.vmem [#allocation10], 152
    %3930 = vst [vmem:[%s3929] sm:$0xff] %v3928
    // Predicated region
    $region46: #{tpu_custom_call.1} parent=1 // pred_check
      _
    $region47: #{tpu_custom_call.1} parent=1 // pred_check_branch
      %3932 = sbr.rel (0) target = $region49
    $region48: #{tpu_custom_call.1} parent=1 // pred_region
      %s3934 = ssub.s32 2560, 2560
      %3935 = vsyncadd [#allocation4], %s3934
      %s3936 = sshll.u32 [#allocation10], 4
      %s3937 = int_to_ptr.vmem [resolvable:$true] %s3936
      %3942 = dma.vmem_to_hbm [thread:$0]  %s3937, 2560, %s7, [#allocation4], 128, 128, 8
    $region49: #{tpu_custom_call.1} parent=1 // pred_fallthru
      _
    // Predicated region
    $region50: #{tpu_custom_call.1} parent=1 // pred_check
      _
    $region51: #{tpu_custom_call.1} parent=1 // pred_check_branch
      %3944 = sbr.rel (0) target = $region53
    $region52: #{tpu_custom_call.1} parent=1 // pred_region
      %3945 = dma.done [#allocation4], 2560
    $region53: #{tpu_custom_call.1} parent=1 // pred_fallthru
      _
    %3946 = vsyncpa [#allocation3], 1
    %3947 = vsyncpa [#allocation6], 1
    %3948 = vsyncpa [#allocation9], 1
    %3949 = vsyncpa [#allocation4], 1

</llo_original>
